<compile_context>
chip_gen: v7x
topology: tpu7x:2x2x1
jax: 0.10.0
libtpu: 0.0.40
codegen_flags: <defaults>
</compile_context>

<pallas_src>
import functools

import jax
import jax.numpy as jnp
from jax.experimental import pallas as pl
from jax.experimental.pallas import tpu as pltpu


# -----------------------------------------------------------------------------
# Helpers
# -----------------------------------------------------------------------------
def _largest_divisor_leq(n, cap):
    cap = max(1, min(int(n), int(cap)))
    for d in range(cap, 0, -1):
        if n % d == 0:
            return d
    return 1


# -----------------------------------------------------------------------------
# Pallas kernels
# -----------------------------------------------------------------------------
def _matmul_kernel(*refs, relu, has_res):
    """out = act(A @ W + bias [+ res]); K-grid accumulation in f32 scratch."""
    if has_res:
        a_ref, w_ref, b_ref, res_ref, o_ref, acc_ref = refs
    else:
        a_ref, w_ref, b_ref, o_ref, acc_ref = refs
        res_ref = None
    k = pl.program_id(2)

    @pl.when(k == 0)
    def _():
        acc_ref[...] = jnp.zeros_like(acc_ref)

    acc_ref[...] += jnp.dot(a_ref[...].astype(jnp.bfloat16), w_ref[...],
                            preferred_element_type=jnp.float32)

    @pl.when(k == pl.num_programs(2) - 1)
    def _():
        y = acc_ref[...] + b_ref[...]
        if has_res:
            y = y + res_ref[...]
        if relu:
            y = jnp.maximum(y, 0.0)
        o_ref[...] = y.astype(o_ref.dtype)


def _conv_win_kernel(*refs, kh, kw, dh, dw, tr, wo, relu, has_res):
    """Fused im2col conv: the full padded sample is resident in VMEM; the
    (kh,kw) taps are sliced in-kernel and accumulated on the MXU in f32."""
    if has_res:
        x_ref, w_ref, b_ref, res_ref, o_ref = refs
    else:
        x_ref, w_ref, b_ref, o_ref = refs
        res_ref = None
    cin = x_ref.shape[-1]
    tn = o_ref.shape[-1]
    r = pl.program_id(2)
    row0 = pl.multiple_of(r * tr, tr)
    acc = jnp.zeros((tr * wo, tn), jnp.float32)
    for i in range(kh):
        for j in range(kw):
            a = x_ref[0, pl.ds(row0 + i * dh, tr), pl.ds(j * dw, wo), :]
            a = a.reshape(tr * wo, cin)
            if cin >= 16:                       # bf16 MXU input (f32 accum)
                a = a.astype(jnp.bfloat16)
            acc = acc + jnp.dot(a, w_ref[i * kw + j],
                                preferred_element_type=jnp.float32)
    y = (acc + b_ref[...]).reshape(1, tr, wo, tn)
    if has_res:
        y = y + res_ref[...]
    if relu:
        y = jnp.maximum(y, 0.0)
    o_ref[...] = y.astype(o_ref.dtype)


def _upsample2_kernel(x_ref, o_ref, *, tr, w, c):
    """x2 bilinear (align_corners=False) on an edge-padded sample.
    Output block is (1, 2*tr, W, 2C): even/odd output columns are the lane
    halves, even/odd output rows are interleaved via a leading-dim stack."""
    r = pl.program_id(1)
    row0 = pl.multiple_of(r * tr, tr)

    def win(dr, dc):
        return x_ref[0, pl.ds(row0 + dr, tr), pl.ds(dc, w), :]

    row_e = []
    row_o = []
    for dc in range(3):
        x0 = win(0, dc)          # x[i-1] (clamped)
        x1 = win(1, dc)          # x[i]
        x2 = win(2, dc)          # x[i+1] (clamped)
        row_e.append(0.25 * x0 + 0.75 * x1)
        row_o.append(0.75 * x1 + 0.25 * x2)

    def col_lerp(rw):
        even = 0.25 * rw[0] + 0.75 * rw[1]
        odd = 0.75 * rw[1] + 0.25 * rw[2]
        return jnp.concatenate([even, odd], axis=-1)      # (tr, w, 2c)

    y = jnp.stack([col_lerp(row_e), col_lerp(row_o)], axis=1)   # (tr, 2, w, 2c)
    o_ref[...] = y.reshape(1, 2 * tr, w, 2 * c)


def _maxpool2_kernel(x_ref, o_ref):
    """2x2/stride-2 max pool.  Input block is (1, 2*tr, W/2, 2C) (a free view
    of the NHWC tensor); row pairs via leading-dim split, col pairs via lanes."""
    v = x_ref[0]                                   # (2*tr, W/2, 2C)
    t2, wo, c2 = v.shape
    c = c2 // 2
    v = v.reshape(t2 // 2, 2, wo, c2)
    m = jnp.maximum(v[:, 0], v[:, 1])              # (tr, W/2, 2C)
    o_ref[...] = jnp.maximum(m[:, :, :c], m[:, :, c:]).reshape(o_ref.shape)


# -----------------------------------------------------------------------------
# Pallas wrappers
# -----------------------------------------------------------------------------
def _matmul_bias_act(a, w, bias, residual, relu):
    """act(a @ w + bias [+ residual]); a:(M,K) f32, w:(K,Cout) bf16."""
    M, K = a.shape
    Cout = w.shape[-1]

    # M tiling: no padding when a divisor exists (always true in this net).
    if M <= 256:
        TM = M
    else:
        TM = next((t for t in (256, 128, 64, 32, 16, 8) if M % t == 0), None)
        if TM is None:
            TM = 128
            pad_m = (-M) % TM
            a = jnp.pad(a, ((0, pad_m), (0, 0)))
            if residual is not None:
                residual = jnp.pad(residual, ((0, pad_m), (0, 0)))
    Mp = a.shape[0]

    # K tiling: TK must divide K exactly (or both A and W get zero-padded) so
    # no garbage ever enters the accumulator.
    if K <= 2048:
        TK = K
    else:
        TK = next((d for d in range(2048, 0, -128) if K % d == 0), None)
        if TK is None:
            TK = 1024
            pad_k = (-K) % TK
            a = jnp.pad(a, ((0, 0), (0, pad_k)))
            w = jnp.pad(w, ((0, pad_k), (0, 0)))
    Kp = a.shape[1]

    if Cout <= 256:
        TN = Cout
    elif Cout % 256 == 0:
        TN = 256
    elif Cout % 128 == 0:
        TN = 128
    else:
        TN = Cout

    has_res = residual is not None
    kernel = functools.partial(_matmul_kernel, relu=relu, has_res=has_res)
    in_specs = [
        pl.BlockSpec((TM, TK), lambda i, j, k: (i, k)),
        pl.BlockSpec((TK, TN), lambda i, j, k: (k, j)),
        pl.BlockSpec((1, TN), lambda i, j, k: (0, j)),
    ]
    args = [a, w, bias]
    if has_res:
        in_specs.append(pl.BlockSpec((TM, TN), lambda i, j, k: (i, j)))
        args.append(residual)

    out = pl.pallas_call(
        kernel,
        out_shape=jax.ShapeDtypeStruct((Mp, Cout), jnp.float32),
        grid_spec=pltpu.PrefetchScalarGridSpec(
            num_scalar_prefetch=0,
            grid=(Mp // TM, Cout // TN, Kp // TK),
            in_specs=in_specs,
            out_specs=pl.BlockSpec((TM, TN), lambda i, j, k: (i, j)),
            scratch_shapes=[pltpu.VMEM((TM, TN), jnp.float32)],
        ),
        compiler_params=pltpu.CompilerParams(
            dimension_semantics=("parallel", "parallel", "arbitrary")),
    )(*args)
    if Mp != M:
        out = out[:M]
    return out


def _conv_fused_call(xp, w, bias, residual, *, kh, kw, dh, dw, Ho, Wo, relu):
    """Fused conv for stride-1 convs with Wo a multiple of 8 (big-spatial)."""
    N, Hp, Wp, Cin = xp.shape
    Cout = w.shape[-1]
    wf = w.reshape(kh * kw, Cin, Cout)

    if Cout <= 256:
        TN = Cout
    elif Cout % 256 == 0:
        TN = 256
    else:
        TN = 128

    target = max(1, min(1024 // Wo,
                        (128 * 1024) // max(1, Wo * max(Cin, TN) * 4)))
    tr = _largest_divisor_leq(Ho, target)
    grid = (N, Cout // TN, Ho // tr)
    has_res = residual is not None

    kernel = functools.partial(_conv_win_kernel, kh=kh, kw=kw, dh=dh, dw=dw,
                               tr=tr, wo=Wo, relu=relu, has_res=has_res)
    in_specs = [
        pl.BlockSpec((1, Hp, Wp, Cin), lambda b, n, r: (b, 0, 0, 0)),
        pl.BlockSpec((kh * kw, Cin, TN), lambda b, n, r: (0, 0, n)),
        pl.BlockSpec((1, TN), lambda b, n, r: (0, n)),
    ]
    args = [xp, wf, bias]
    if has_res:
        in_specs.append(pl.BlockSpec((1, tr, Wo, TN),
                                     lambda b, n, r: (b, r, 0, n)))
        args.append(residual)

    return pl.pallas_call(
        kernel,
        out_shape=jax.ShapeDtypeStruct((N, Ho, Wo, Cout), jnp.float32),
        grid_spec=pltpu.PrefetchScalarGridSpec(
            num_scalar_prefetch=0,
            grid=grid,
            in_specs=in_specs,
            out_specs=pl.BlockSpec((1, tr, Wo, TN),
                                   lambda b, n, r: (b, r, 0, n)),
        ),
        compiler_params=pltpu.CompilerParams(
            dimension_semantics=("parallel", "parallel", "parallel")),
    )(*args)


@functools.partial(jax.jit,
                   static_argnames=("kh", "kw", "ph", "pw", "dh", "dw", "relu"))
def _conv2d_jit(x, w, bias, residual, *, kh, kw, ph, pw, dh, dw, relu):
    N, H, W, Cin = x.shape
    Cout = w.shape[-1]
    Ho = H + 2 * ph - dh * (kh - 1)
    Wo = W + 2 * pw - dw * (kw - 1)

    if kh == 1 and kw == 1 and ph == 0 and pw == 0:
        a = x.reshape(N * H * W, Cin)
        res = None if residual is None else residual.reshape(N * H * W, Cout)
        out = _matmul_bias_act(a, w.reshape(Cin, Cout), bias, res, relu)
        return out.reshape(N, Ho, Wo, Cout)

    xp = jnp.pad(x, ((0, 0), (ph, ph), (pw, pw), (0, 0))) if (ph or pw) else x
    if Wo >= 8 and Wo % 8 == 0:
        return _conv_fused_call(xp, w, bias, residual, kh=kh, kw=kw, dh=dh,
                                dw=dw, Ho=Ho, Wo=Wo, relu=relu)

    # Tiny-spatial fallback (2x2 / 4x4 maps): im2col matrix is < ~1 MiB here.
    cols = [xp[:, i * dh:i * dh + Ho, j * dw:j * dw + Wo, :]
            for i in range(kh) for j in range(kw)]
    a = jnp.concatenate(cols, axis=-1).reshape(N * Ho * Wo, kh * kw * Cin)
    res = None if residual is None else residual.reshape(N * Ho * Wo, Cout)
    out = _matmul_bias_act(a, w.reshape(kh * kw * Cin, Cout), bias, res, relu)
    return out.reshape(N, Ho, Wo, Cout)


def conv2d(x, p, residual=None):
    """NHWC stride-1 conv with folded eval-BN, optional residual add + ReLU."""
    kh, kw = p["ksize"]
    ph, pw = p["pad"]
    dh, dw = p["dil"]
    return _conv2d_jit(x, p["w"], p["bias"], residual,
                       kh=kh, kw=kw, ph=ph, pw=pw, dh=dh, dw=dw,
                       relu=p["relu"])


@jax.jit
def _upsample2_jit(x):
    """x2 bilinear upsampling, align_corners=False (torch nn.Upsample default)."""
    N, H, W, C = x.shape
    xp = jnp.pad(x, ((0, 0), (1, 1), (1, 1), (0, 0)), mode="edge")
    tr = _largest_divisor_leq(H, max(1, (32 * 1024) // max(1, W * C * 4)))
    out = pl.pallas_call(
        functools.partial(_upsample2_kernel, tr=tr, w=W, c=C),
        out_shape=jax.ShapeDtypeStruct((N, 2 * H, W, 2 * C), jnp.float32),
        grid_spec=pltpu.PrefetchScalarGridSpec(
            num_scalar_prefetch=0,
            grid=(N, H // tr),
            in_specs=[pl.BlockSpec((1, H + 2, W + 2, C),
                                   lambda b, r: (b, 0, 0, 0))],
            out_specs=pl.BlockSpec((1, 2 * tr, W, 2 * C),
                                   lambda b, r: (b, r, 0, 0)),
        ),
        compiler_params=pltpu.CompilerParams(
            dimension_semantics=("parallel", "parallel")),
    )(xp)
    # (N, 2H, W, 2C) -> (N, 2H, 2W, C) is a free (bitcast) reshape.
    return out.reshape(N, 2 * H, 2 * W, C)


@jax.jit
def _maxpool2_jit(x):
    """2x2/stride-2 max pool.  Assumes even H and W (true for this network)."""
    N, H, W, C = x.shape
    Ho, Wo = H // 2, W // 2
    xr = x.reshape(N, H, Wo, 2 * C)                      # free reshape
    tr = _largest_divisor_leq(Ho, max(1, (128 * 1024) // max(1, Wo * C * 16)))
    return pl.pallas_call(
        _maxpool2_kernel,
        out_shape=jax.ShapeDtypeStruct((N, Ho, Wo, C), x.dtype),
        grid_spec=pltpu.PrefetchScalarGridSpec(
            num_scalar_prefetch=0,
            grid=(N, Ho // tr),
            in_specs=[pl.BlockSpec((1, 2 * tr, Wo, 2 * C),
                                   lambda b, r: (b, r, 0, 0))],
            out_specs=pl.BlockSpec((1, tr, Wo, C),
                                   lambda b, r: (b, r, 0, 0)),
        ),
        compiler_params=pltpu.CompilerParams(
            dimension_semantics=("parallel", "parallel")),
    )(xr)


def upsample2_bilinear(x):
    return _upsample2_jit(x)


def maxpool2(x):
    return _maxpool2_jit(x)


# -----------------------------------------------------------------------------
# Deterministic parameter construction (BN folded, weights pre-cast to bf16)
# -----------------------------------------------------------------------------
def _bn_fold(key, cout):
    k1, k2, k3 = jax.random.split(key, 3)
    gamma = 1.0 + 0.1 * jax.random.normal(k1, (cout,), jnp.float32)
    beta = 0.1 * jax.random.normal(k2, (cout,), jnp.float32)
    mean = 0.1 * jax.random.normal(k3, (cout,), jnp.float32)
    var = jnp.ones((cout,), jnp.float32)
    scale = gamma / jnp.sqrt(var + 1e-5)
    shift = beta - mean * scale
    return scale, shift


def conv_params(key, cin, cout, ksize, pad=(0, 0), dil=(1, 1), *,
                bn=True, bias=False, relu=False):
    kh, kw = ksize
    kw_key, bn_key, b_key = jax.random.split(key, 3)
    w = jax.random.normal(kw_key, (kh, kw, cin, cout), jnp.float32)
    w = w / jnp.sqrt(float(kh * kw * cin))
    if bn:
        scale, shift = _bn_fold(bn_key, cout)
    else:
        scale = jnp.ones((cout,), jnp.float32)
        shift = (0.05 * jax.random.normal(b_key, (cout,), jnp.float32)
                 if bias else jnp.zeros((cout,), jnp.float32))
    # Fold the BN scale into the weights and pre-cast to bf16 (MXU input).
    w_folded = (w * scale[None, None, None, :]).astype(jnp.bfloat16)
    return dict(w=w_folded, bias=shift.reshape(1, cout),
                ksize=ksize, pad=pad, dil=dil, relu=relu)


def rfb_params(key, cin, cout):
    keys = iter(jax.random.split(key, 16))

    def bc(ci, co, ks, pad=(0, 0), dil=(1, 1), relu=False):
        # BasicConv2d.forward = conv (no bias) + BN, NO relu applied.
        return conv_params(next(keys), ci, co, ks, pad, dil, bn=True, relu=relu)

    # The four branch-entry 1x1 convs + conv_res are packed into one 1x1 conv
    # producing 5*cout channels (same math, a single MXU call).
    return dict(
        channels=cout,
        entry=bc(cin, 5 * cout, (1, 1)),
        branch1=[bc(cout, cout, (1, 3), (0, 1)),
                 bc(cout, cout, (3, 1), (1, 0)),
                 bc(cout, cout, (3, 3), (3, 3), (3, 3))],
        branch2=[bc(cout, cout, (1, 5), (0, 2)),
                 bc(cout, cout, (5, 1), (2, 0)),
                 bc(cout, cout, (3, 3), (5, 5), (5, 5))],
        branch3=[bc(cout, cout, (1, 7), (0, 3)),
                 bc(cout, cout, (7, 1), (3, 0)),
                 bc(cout, cout, (3, 3), (7, 7), (7, 7))],
        # relu here is the RFB's post-residual ReLU, fused into the epilogue.
        conv_cat=bc(4 * cout, cout, (3, 3), (1, 1), relu=True),
    )


def encoder_params(key):
    # TODO(synk): torchvision vgg19(pretrained=True) + get_features wrapper is
    # not available; stand-in is one conv3x3+ReLU+maxpool per stage with the
    # same feature-channel progression [64,128,256,512,512] (scales 1/2..1/32).
    chans = [3, 64, 128, 256, 512, 512]
    keys = jax.random.split(key, 5)
    return [conv_params(keys[i], chans[i], chans[i + 1], (3, 3), (1, 1),
                        bn=False, bias=True, relu=True) for i in range(5)]


def decoder_params(key):
    # Channel bookkeeping copied from Universal_Decoder.__init__.
    in_channels = [512, 512, 256, 128, 64]            # skip channels
    out_channels = [256, 128, 64, 128, 128]
    in_feats = [in_channels[0]] + out_channels[:-1]
    embed_dims = [i + j for i, j in zip(in_feats, in_channels[1:])]
    keys = jax.random.split(key, 4)
    blocks = [conv_params(keys[i], embed_dims[i], out_channels[i], (3, 3),
                          (1, 1), bn=True, relu=True) for i in range(4)]
    return dict(blocks=blocks)


def up_params(key):
    # TODO(synk): `Up` source not provided; implemented as bilinear x2 upsample
    # followed by conv3x3+BN+ReLU (128 -> 128).
    return conv_params(key, 128, 128, (3, 3), (1, 1), bn=True, relu=True)


def build_uvgg_params(key, *, emb_len=16, domain_num=1, non_local=True):
    keys = jax.random.split(key, domain_num + 4)
    encoders = [encoder_params(keys[i]) for i in range(domain_num)]
    decoder = decoder_params(keys[domain_num])
    up = up_params(keys[domain_num + 1])
    tkeys = jax.random.split(keys[domain_num + 2], 6)
    trans = [conv_params(tkeys[i], c, emb_len, (1, 1),
                         bn=False, bias=True, relu=False)
             for i, c in enumerate([512, 256, 128, 64, 128, 128])]
    rfb = None
    if non_local:
        rkeys = jax.random.split(keys[domain_num + 3], 3)
        rfb = [rfb_params(rkeys[i], c, c) for i, c in enumerate([512, 256, 128])]
    return dict(encoders=encoders, decoder=decoder, up=up, trans=trans,
                rfb=rfb, non_local=non_local)


# -----------------------------------------------------------------------------
# Forward passes
# -----------------------------------------------------------------------------
def encoder_forward(x, params):
    features = []
    for p in params:
        x = conv2d(x, p)
        x = maxpool2(x)
        features.append(x)
    return features


def rfb_forward(x, p):
    c = p["channels"]
    y = conv2d(x, p["entry"])                 # [b0 | b1_in | b2_in | b3_in | res]
    x0 = y[..., 0 * c:1 * c]
    t1 = y[..., 1 * c:2 * c]
    t2 = y[..., 2 * c:3 * c]
    t3 = y[..., 3 * c:4 * c]
    res = y[..., 4 * c:5 * c]
    for q in p["branch1"]:
        t1 = conv2d(t1, q)
    for q in p["branch2"]:
        t2 = conv2d(t2, q)
    for q in p["branch3"]:
        t3 = conv2d(t3, q)
    cat = jnp.concatenate([x0, t1, t2, t3], axis=-1)
    # relu(conv_cat(cat) + conv_res(x)) with the add+ReLU fused in the epilogue.
    return conv2d(cat, p["conv_cat"], residual=res)


def universal_decoder_forward(features_rev, p):
    # TODO(synk): UniDecoderCup / Conv sources are not in the reference file;
    # implemented as a U-Net style cascade consistent with the channel
    # bookkeeping of Universal_Decoder.__init__.  The decoder tail (initial
    # conv + upsample + concat) is dead code in UVGG.forward (its output is
    # discarded) and is therefore not computed.
    y = features_rev[0]
    dec_features = []
    for i in range(4):
        y = upsample2_bilinear(y)
        y = jnp.concatenate([y, features_rev[i + 1]], axis=-1)
        y = conv2d(y, p["blocks"][i])
        dec_features.append(y)
    return dec_features


def up_forward(x, p):
    return conv2d(upsample2_bilinear(x), p)


def uvgg_forward(x, params, domain_idx=0, get_features=False):
    features = encoder_forward(x, params["encoders"][domain_idx])
    dec_features = universal_decoder_forward(features[::-1], params["decoder"])
    dec_features.insert(0, features[4])
    dec_features.append(up_forward(dec_features[-1], params["up"]))
    if params["non_local"]:
        for i in range(3):
            dec_features[i] = rfb_forward(dec_features[i], params["rfb"][i])
    dec_features = [conv2d(f, params["trans"][i])
                    for i, f in enumerate(dec_features)]
    out = dec_features[-1]
    if get_features:
        return out, dec_features
    return out


# -----------------------------------------------------------------------------
if __name__ == "__main__":
    key = jax.random.PRNGKey(0)
    pkey, xkey = jax.random.split(key)
    params = build_uvgg_params(pkey, emb_len=16, domain_num=1, non_local=True)
    # NHWC input (the NCHW reference would be (2, 3, 64, 64)).
    x = jax.random.normal(xkey, (2, 64, 64, 3), jnp.float32)
    out = uvgg_forward(x, params, domain_idx=0, get_features=False)
    out = jax.block_until_ready(out)
    assert out.shape == (2, 64, 64, 16), out.shape
    print("KERNEL_OK")
</pallas_src>

<mosaic_0001>
module attributes {stable_mosaic.version = 11 : i64} {
  func.func @_conv_win_kernel(%arg0: i32, %arg1: i32, %arg2: i32, %arg3: memref<1x66x66x3xf32, #tpu.memory_space<vmem>>, %arg4: memref<9x3x64xbf16, #tpu.memory_space<vmem>>, %arg5: memref<1x64xf32, #tpu.memory_space<vmem>>, %arg6: memref<1x8x64x64xf32, #tpu.memory_space<vmem>>) attributes {dimension_semantics = [#tpu.dimension_semantics<parallel>, #tpu.dimension_semantics<parallel>, #tpu.dimension_semantics<parallel>], iteration_bounds = array<i64: 2, 1, 8>, scalar_prefetch = 0 : i64, scratch_operands = 0 : i64, tpu.core_type = #tpu.core_type<tc>, window_params = [{transform_indices = @transform_0, window_bounds = array<i64: 1, 66, 66, 3>}, {transform_indices = @transform_1, window_bounds = array<i64: 9, 3, 64>}, {transform_indices = @transform_2, window_bounds = array<i64: 1, 64>}, {transform_indices = @transform_3, window_bounds = array<i64: 1, 8, 64, 64>}]} {
    %c8_i32 = arith.constant 8 : i32
    %0 = arith.muli %arg2, %c8_i32 : i32
    %1 = tpu.assume_multiple %0, 8 : i32
    %cst = arith.constant 0.000000e+00 : f32
    %2 = vector.broadcast %cst : f32 to vector<512x64xf32>
    %c0_i32 = arith.constant 0 : i32
    %3 = arith.addi %1, %c0_i32 : i32
    %c0 = arith.constant 0 : index
    %4 = arith.index_cast %3 : i32 to index
    %c0_0 = arith.constant 0 : index
    %c0_1 = arith.constant 0 : index
    %5 = vector.load %arg3[%c0, %4, %c0_0, %c0_1] : memref<1x66x66x3xf32, #tpu.memory_space<vmem>>, vector<1x8x64x3xf32>
    %6 = vector.shape_cast %5 : vector<1x8x64x3xf32> to vector<8x64x3xf32>
    %7 = vector.shape_cast %6 : vector<8x64x3xf32> to vector<512x3xf32>
    %c0_2 = arith.constant 0 : index
    %c0_3 = arith.constant 0 : index
    %c0_4 = arith.constant 0 : index
    %8 = vector.load %arg4[%c0_2, %c0_3, %c0_4] : memref<9x3x64xbf16, #tpu.memory_space<vmem>>, vector<1x3x64xbf16>
    %9 = vector.shape_cast %8 : vector<1x3x64xbf16> to vector<3x64xbf16>
    %cst_5 = arith.constant dense<0.000000e+00> : vector<512x64xf32>
    %10 = tpu.matmul %7, %9, %cst_5 {dimension_numbers = #tpu.dot_dimension_numbers<[1], [0], [0], [1], [0, 0, 1, 1], [], []>} : vector<512x3xf32>, vector<3x64xbf16>, vector<512x64xf32> -> vector<512x64xf32>
    %11 = arith.addf %2, %10 : vector<512x64xf32>
    %c0_i32_6 = arith.constant 0 : i32
    %12 = arith.addi %1, %c0_i32_6 : i32
    %c0_7 = arith.constant 0 : index
    %13 = arith.index_cast %12 : i32 to index
    %c1 = arith.constant 1 : index
    %c0_8 = arith.constant 0 : index
    %14 = vector.load %arg3[%c0_7, %13, %c1, %c0_8] : memref<1x66x66x3xf32, #tpu.memory_space<vmem>>, vector<1x8x64x3xf32>
    %15 = vector.shape_cast %14 : vector<1x8x64x3xf32> to vector<8x64x3xf32>
    %16 = vector.shape_cast %15 : vector<8x64x3xf32> to vector<512x3xf32>
    %c1_9 = arith.constant 1 : index
    %c0_10 = arith.constant 0 : index
    %c0_11 = arith.constant 0 : index
    %17 = vector.load %arg4[%c1_9, %c0_10, %c0_11] : memref<9x3x64xbf16, #tpu.memory_space<vmem>>, vector<1x3x64xbf16>
    %18 = vector.shape_cast %17 : vector<1x3x64xbf16> to vector<3x64xbf16>
    %cst_12 = arith.constant dense<0.000000e+00> : vector<512x64xf32>
    %19 = tpu.matmul %16, %18, %cst_12 {dimension_numbers = #tpu.dot_dimension_numbers<[1], [0], [0], [1], [0, 0, 1, 1], [], []>} : vector<512x3xf32>, vector<3x64xbf16>, vector<512x64xf32> -> vector<512x64xf32>
    %20 = arith.addf %11, %19 : vector<512x64xf32>
    %c0_i32_13 = arith.constant 0 : i32
    %21 = arith.addi %1, %c0_i32_13 : i32
    %c0_14 = arith.constant 0 : index
    %22 = arith.index_cast %21 : i32 to index
    %c2 = arith.constant 2 : index
    %c0_15 = arith.constant 0 : index
    %23 = vector.load %arg3[%c0_14, %22, %c2, %c0_15] : memref<1x66x66x3xf32, #tpu.memory_space<vmem>>, vector<1x8x64x3xf32>
    %24 = vector.shape_cast %23 : vector<1x8x64x3xf32> to vector<8x64x3xf32>
    %25 = vector.shape_cast %24 : vector<8x64x3xf32> to vector<512x3xf32>
    %c2_16 = arith.constant 2 : index
    %c0_17 = arith.constant 0 : index
    %c0_18 = arith.constant 0 : index
    %26 = vector.load %arg4[%c2_16, %c0_17, %c0_18] : memref<9x3x64xbf16, #tpu.memory_space<vmem>>, vector<1x3x64xbf16>
    %27 = vector.shape_cast %26 : vector<1x3x64xbf16> to vector<3x64xbf16>
    %cst_19 = arith.constant dense<0.000000e+00> : vector<512x64xf32>
    %28 = tpu.matmul %25, %27, %cst_19 {dimension_numbers = #tpu.dot_dimension_numbers<[1], [0], [0], [1], [0, 0, 1, 1], [], []>} : vector<512x3xf32>, vector<3x64xbf16>, vector<512x64xf32> -> vector<512x64xf32>
    %29 = arith.addf %20, %28 : vector<512x64xf32>
    %c1_i32 = arith.constant 1 : i32
    %30 = arith.addi %1, %c1_i32 : i32
    %c0_20 = arith.constant 0 : index
    %31 = arith.index_cast %30 : i32 to index
    %c0_21 = arith.constant 0 : index
    %c0_22 = arith.constant 0 : index
    %32 = vector.load %arg3[%c0_20, %31, %c0_21, %c0_22] : memref<1x66x66x3xf32, #tpu.memory_space<vmem>>, vector<1x8x64x3xf32>
    %33 = vector.shape_cast %32 : vector<1x8x64x3xf32> to vector<8x64x3xf32>
    %34 = vector.shape_cast %33 : vector<8x64x3xf32> to vector<512x3xf32>
    %c3 = arith.constant 3 : index
    %c0_23 = arith.constant 0 : index
    %c0_24 = arith.constant 0 : index
    %35 = vector.load %arg4[%c3, %c0_23, %c0_24] : memref<9x3x64xbf16, #tpu.memory_space<vmem>>, vector<1x3x64xbf16>
    %36 = vector.shape_cast %35 : vector<1x3x64xbf16> to vector<3x64xbf16>
    %cst_25 = arith.constant dense<0.000000e+00> : vector<512x64xf32>
    %37 = tpu.matmul %34, %36, %cst_25 {dimension_numbers = #tpu.dot_dimension_numbers<[1], [0], [0], [1], [0, 0, 1, 1], [], []>} : vector<512x3xf32>, vector<3x64xbf16>, vector<512x64xf32> -> vector<512x64xf32>
    %38 = arith.addf %29, %37 : vector<512x64xf32>
    %c1_i32_26 = arith.constant 1 : i32
    %39 = arith.addi %1, %c1_i32_26 : i32
    %c0_27 = arith.constant 0 : index
    %40 = arith.index_cast %39 : i32 to index
    %c1_28 = arith.constant 1 : index
    %c0_29 = arith.constant 0 : index
    %41 = vector.load %arg3[%c0_27, %40, %c1_28, %c0_29] : memref<1x66x66x3xf32, #tpu.memory_space<vmem>>, vector<1x8x64x3xf32>
    %42 = vector.shape_cast %41 : vector<1x8x64x3xf32> to vector<8x64x3xf32>
    %43 = vector.shape_cast %42 : vector<8x64x3xf32> to vector<512x3xf32>
    %c4 = arith.constant 4 : index
    %c0_30 = arith.constant 0 : index
    %c0_31 = arith.constant 0 : index
    %44 = vector.load %arg4[%c4, %c0_30, %c0_31] : memref<9x3x64xbf16, #tpu.memory_space<vmem>>, vector<1x3x64xbf16>
    %45 = vector.shape_cast %44 : vector<1x3x64xbf16> to vector<3x64xbf16>
    %cst_32 = arith.constant dense<0.000000e+00> : vector<512x64xf32>
    %46 = tpu.matmul %43, %45, %cst_32 {dimension_numbers = #tpu.dot_dimension_numbers<[1], [0], [0], [1], [0, 0, 1, 1], [], []>} : vector<512x3xf32>, vector<3x64xbf16>, vector<512x64xf32> -> vector<512x64xf32>
    %47 = arith.addf %38, %46 : vector<512x64xf32>
    %c1_i32_33 = arith.constant 1 : i32
    %48 = arith.addi %1, %c1_i32_33 : i32
    %c0_34 = arith.constant 0 : index
    %49 = arith.index_cast %48 : i32 to index
    %c2_35 = arith.constant 2 : index
    %c0_36 = arith.constant 0 : index
    %50 = vector.load %arg3[%c0_34, %49, %c2_35, %c0_36] : memref<1x66x66x3xf32, #tpu.memory_space<vmem>>, vector<1x8x64x3xf32>
    %51 = vector.shape_cast %50 : vector<1x8x64x3xf32> to vector<8x64x3xf32>
    %52 = vector.shape_cast %51 : vector<8x64x3xf32> to vector<512x3xf32>
    %c5 = arith.constant 5 : index
    %c0_37 = arith.constant 0 : index
    %c0_38 = arith.constant 0 : index
    %53 = vector.load %arg4[%c5, %c0_37, %c0_38] : memref<9x3x64xbf16, #tpu.memory_space<vmem>>, vector<1x3x64xbf16>
    %54 = vector.shape_cast %53 : vector<1x3x64xbf16> to vector<3x64xbf16>
    %cst_39 = arith.constant dense<0.000000e+00> : vector<512x64xf32>
    %55 = tpu.matmul %52, %54, %cst_39 {dimension_numbers = #tpu.dot_dimension_numbers<[1], [0], [0], [1], [0, 0, 1, 1], [], []>} : vector<512x3xf32>, vector<3x64xbf16>, vector<512x64xf32> -> vector<512x64xf32>
    %56 = arith.addf %47, %55 : vector<512x64xf32>
    %c2_i32 = arith.constant 2 : i32
    %57 = arith.addi %1, %c2_i32 : i32
    %c0_40 = arith.constant 0 : index
    %58 = arith.index_cast %57 : i32 to index
    %c0_41 = arith.constant 0 : index
    %c0_42 = arith.constant 0 : index
    %59 = vector.load %arg3[%c0_40, %58, %c0_41, %c0_42] : memref<1x66x66x3xf32, #tpu.memory_space<vmem>>, vector<1x8x64x3xf32>
    %60 = vector.shape_cast %59 : vector<1x8x64x3xf32> to vector<8x64x3xf32>
    %61 = vector.shape_cast %60 : vector<8x64x3xf32> to vector<512x3xf32>
    %c6 = arith.constant 6 : index
    %c0_43 = arith.constant 0 : index
    %c0_44 = arith.constant 0 : index
    %62 = vector.load %arg4[%c6, %c0_43, %c0_44] : memref<9x3x64xbf16, #tpu.memory_space<vmem>>, vector<1x3x64xbf16>
    %63 = vector.shape_cast %62 : vector<1x3x64xbf16> to vector<3x64xbf16>
    %cst_45 = arith.constant dense<0.000000e+00> : vector<512x64xf32>
    %64 = tpu.matmul %61, %63, %cst_45 {dimension_numbers = #tpu.dot_dimension_numbers<[1], [0], [0], [1], [0, 0, 1, 1], [], []>} : vector<512x3xf32>, vector<3x64xbf16>, vector<512x64xf32> -> vector<512x64xf32>
    %65 = arith.addf %56, %64 : vector<512x64xf32>
    %c2_i32_46 = arith.constant 2 : i32
    %66 = arith.addi %1, %c2_i32_46 : i32
    %c0_47 = arith.constant 0 : index
    %67 = arith.index_cast %66 : i32 to index
    %c1_48 = arith.constant 1 : index
    %c0_49 = arith.constant 0 : index
    %68 = vector.load %arg3[%c0_47, %67, %c1_48, %c0_49] : memref<1x66x66x3xf32, #tpu.memory_space<vmem>>, vector<1x8x64x3xf32>
    %69 = vector.shape_cast %68 : vector<1x8x64x3xf32> to vector<8x64x3xf32>
    %70 = vector.shape_cast %69 : vector<8x64x3xf32> to vector<512x3xf32>
    %c7 = arith.constant 7 : index
    %c0_50 = arith.constant 0 : index
    %c0_51 = arith.constant 0 : index
    %71 = vector.load %arg4[%c7, %c0_50, %c0_51] : memref<9x3x64xbf16, #tpu.memory_space<vmem>>, vector<1x3x64xbf16>
    %72 = vector.shape_cast %71 : vector<1x3x64xbf16> to vector<3x64xbf16>
    %cst_52 = arith.constant dense<0.000000e+00> : vector<512x64xf32>
    %73 = tpu.matmul %70, %72, %cst_52 {dimension_numbers = #tpu.dot_dimension_numbers<[1], [0], [0], [1], [0, 0, 1, 1], [], []>} : vector<512x3xf32>, vector<3x64xbf16>, vector<512x64xf32> -> vector<512x64xf32>
    %74 = arith.addf %65, %73 : vector<512x64xf32>
    %c2_i32_53 = arith.constant 2 : i32
    %75 = arith.addi %1, %c2_i32_53 : i32
    %c0_54 = arith.constant 0 : index
    %76 = arith.index_cast %75 : i32 to index
    %c2_55 = arith.constant 2 : index
    %c0_56 = arith.constant 0 : index
    %77 = vector.load %arg3[%c0_54, %76, %c2_55, %c0_56] : memref<1x66x66x3xf32, #tpu.memory_space<vmem>>, vector<1x8x64x3xf32>
    %78 = vector.shape_cast %77 : vector<1x8x64x3xf32> to vector<8x64x3xf32>
    %79 = vector.shape_cast %78 : vector<8x64x3xf32> to vector<512x3xf32>
    %c8 = arith.constant 8 : index
    %c0_57 = arith.constant 0 : index
    %c0_58 = arith.constant 0 : index
    %80 = vector.load %arg4[%c8, %c0_57, %c0_58] : memref<9x3x64xbf16, #tpu.memory_space<vmem>>, vector<1x3x64xbf16>
    %81 = vector.shape_cast %80 : vector<1x3x64xbf16> to vector<3x64xbf16>
    %cst_59 = arith.constant dense<0.000000e+00> : vector<512x64xf32>
    %82 = tpu.matmul %79, %81, %cst_59 {dimension_numbers = #tpu.dot_dimension_numbers<[1], [0], [0], [1], [0, 0, 1, 1], [], []>} : vector<512x3xf32>, vector<3x64xbf16>, vector<512x64xf32> -> vector<512x64xf32>
    %83 = arith.addf %74, %82 : vector<512x64xf32>
    %c0_60 = arith.constant 0 : index
    %c0_61 = arith.constant 0 : index
    %84 = vector.load %arg5[%c0_60, %c0_61] : memref<1x64xf32, #tpu.memory_space<vmem>>, vector<1x64xf32>
    %85 = vector.broadcast %84 : vector<1x64xf32> to vector<512x64xf32>
    %86 = arith.addf %83, %85 : vector<512x64xf32>
    %87 = vector.shape_cast %86 : vector<512x64xf32> to vector<1x8x64x64xf32>
    %cst_62 = arith.constant 0.000000e+00 : f32
    %88 = vector.broadcast %cst_62 : f32 to vector<1x8x64x64xf32>
    %89 = arith.maximumf %87, %88 : vector<1x8x64x64xf32>
    %c0_63 = arith.constant 0 : index
    %c0_64 = arith.constant 0 : index
    %c0_65 = arith.constant 0 : index
    %c0_66 = arith.constant 0 : index
    %90 = vector.load %arg6[%c0_63, %c0_64, %c0_65, %c0_66] : memref<1x8x64x64xf32, #tpu.memory_space<vmem>>, vector<1x8x64x64xf32>
    tpu.vector_store %arg6[%c0_63, %c0_64, %c0_65, %c0_66], %89 {strides = array<i32>} : memref<1x8x64x64xf32, #tpu.memory_space<vmem>>, vector<1x8x64x64xf32>,
    return
  }
  func.func @transform_0(%arg0: i32, %arg1: i32, %arg2: i32) -> (i32, i32, i32, i32) {
    %c0_i32 = arith.constant 0 : i32
    %c0_i32_0 = arith.constant 0 : i32
    %c0_i32_1 = arith.constant 0 : i32
    %c0_i32_2 = arith.constant 0 : i32
    return %arg0, %c0_i32, %c0_i32_0, %c0_i32_1 : i32, i32, i32, i32
  }
  func.func @transform_1(%arg0: i32, %arg1: i32, %arg2: i32) -> (i32, i32, i32) {
    %c0_i32 = arith.constant 0 : i32
    %c0_i32_0 = arith.constant 0 : i32
    %c0_i32_1 = arith.constant 0 : i32
    return %c0_i32, %c0_i32_0, %arg1 : i32, i32, i32
  }
  func.func @transform_2(%arg0: i32, %arg1: i32, %arg2: i32) -> (i32, i32) {
    %c0_i32 = arith.constant 0 : i32
    %c0_i32_0 = arith.constant 0 : i32
    return %c0_i32, %arg1 : i32, i32
  }
  func.func @transform_3(%arg0: i32, %arg1: i32, %arg2: i32) -> (i32, i32, i32, i32) {
    %c0_i32 = arith.constant 0 : i32
    %c0_i32_0 = arith.constant 0 : i32
    return %arg0, %arg2, %c0_i32, %arg1 : i32, i32, i32, i32
  }
}

</mosaic_0001>

<llo_original>
// kernel: _conv2d_jit.1
$region0: #{_conv2d_jit.1}
  #allocation0 [shape = 'u32[]', space=smem, size = 0x4, offset = 0x4, fixed_abs, tag = 'smem constant byte address 0x4 - core index']
  #allocation1 [shape = 'u32[144,128]{1,0:T(1,128)}', space=vmem, size = 0x12000, scoped, tag = 'internal scratch']
  %s0 = inlined_call_operand.vmem [shape: f32[2,66,66,3], index: 0, kind: input, shape index: {}]
  %s1 = inlined_call_operand.vmem [shape: bf16[9,3,64], index: 1, kind: input, shape index: {}]
  %s2 = inlined_call_operand.vmem [shape: f32[1,64], index: 2, kind: input, shape index: {}]
  %s3 = inlined_call_operand.hbm [shape: f32[2,64,64,64], index: 3, kind: output, shape index: {}]
  %s4 = sld [smem:[#allocation0]]
  $region45: #{_conv2d_jit.1} parent=0
    _
  %s6 = ssub.s32 1, %s4
  %s7 = scalar_select 0, %s6, %s4
  $region1: #{_conv2d_jit.1} parent=0
    #allocation2 [shape = 'u8[524288]{0}', space=vmem, size = 0x80000, scoped, tag = 'output window, operand 0']
    #allocation3 [shape = 's32[2]{0}', space=sflag, size = 0x8, scoped, tag = 'scoped memory for _conv2d_jit.1']
    %8 = vsyncpa [#allocation3], 0
    %s9 = scalar_lea.sflag [#allocation3], 1
    %10 = vsyncpa %s9, 0
    loop: start=0, step=1, limit=18
    $region2: #{_conv2d_jit.1} parent=1 // loop_pre_header
      _
    $region3: #{_conv2d_jit.1} parent=1 // loop_header
      %s12 = sphi 0, %s16
      %p13 = scmp.ge.s32.totalorder %s12, 18
      %s19 = sphi 0, %s38
      %s20 = sphi 0, %s34
      %s21 = sphi 0, %s30
      %s22 = sphi 0, %s19
      %s23 = sphi 0, %s20
      %s24 = sphi 0, %s21
      %s25 = sphi 0, %s22
      %s26 = sphi 0, %s23
      %s27 = sphi 0, %s24
      %s41 = sphi 0, %s43
      %s44 = sphi 0, %s41
      %s45 = sphi 0, %s44
      %s61 = sphi 0, %s45
      %s67 = sphi 0, %s69
      %s70 = sphi 0, %s67
      %s71 = sphi 0, %s70
      %s87 = sphi 0, %s71
      %s93 = sphi 0, %s95
      %s96 = sphi 0, %s93
      %s97 = sphi 0, %s96
      %s113 = sphi 0, %s97
      %s123 = sphi 0, %s125
      %s126 = sphi 0, %s123
      %s127 = sphi 0, %s126
      %s143 = sphi 0, %s127
    $region4: #{_conv2d_jit.1} parent=1 // loop_header_branch
      %15 = sbr.rel (%p13) target = $region8
    $region5: #{_conv2d_jit.1} parent=1 // loop_body
      %s17 = ssub.s32 %s12, 1
      %s18 = ssub.s32 %s12, 2
      %s28 = sadd.s32 1, %s21
      %p29 = scmp.ge.s32.totalorder %s28, 8
      %s30 = scalar_select %p29, 0, %s28
      %s31 = sadd.s32 1, %s20
      %s32 = scalar_select %p29, %s31, %s20
      %p33 = scmp.ge.s32.totalorder %s32, 1
      %s34 = scalar_select %p33, 0, %s32
      %s35 = sadd.s32 1, %s19
      %s36 = scalar_select %p33, %s35, %s19
      %p37 = scmp.ge.s32.totalorder %s36, 2
      %s38 = scalar_select %p37, 0, %s36
      %s39 = ssub.s32 %s19, %s38
      %p40 = scmp.eq.s32.totalorder %s39, 0
      %s42 = sadd.s32 %s41, 1
      %s43 = scalar_select %p40, %s41, %s42
      %p46 = pneg %p40
      %p47 = scmp.eq.s32.totalorder %s12, 15
      %p48 = por %p46, %p47
      %p49 = scmp.ne.s32.totalorder %s41, %s44
      %p50 = scmp.eq.s32.totalorder %s12, 0
      %p51 = por %p49, %p50
      %p52 = scmp.ne.s32.totalorder %s41, %s44
      %p53 = scmp.eq.s32.totalorder %s17, 15
      %p54 = por %p52, %p53
      %p55 = scmp.ne.s32.totalorder %s44, %s45
      %p56 = scmp.eq.s32.totalorder %s17, 0
      %p57 = por %p55, %p56
      %p58 = scmp.ne.s32.totalorder %s44, %s45
      %p59 = scmp.eq.s32.totalorder %s18, 15
      %p60 = por %p58, %p59
      %p62 = scmp.ne.s32.totalorder %s45, %s61
      %p63 = scmp.eq.s32.totalorder %s18, 0
      %p64 = por %p62, %p63
      %s65 = ssub.s32 %s20, %s34
      %p66 = scmp.eq.s32.totalorder %s65, 0
      %s68 = sadd.s32 %s67, 1
      %s69 = scalar_select %p66, %s67, %s68
      %p72 = pneg %p66
      %p73 = scmp.eq.s32.totalorder %s12, 15
      %p74 = por %p72, %p73
      %p75 = scmp.ne.s32.totalorder %s67, %s70
      %p76 = scmp.eq.s32.totalorder %s12, 0
      %p77 = por %p75, %p76
      %p78 = scmp.ne.s32.totalorder %s67, %s70
      %p79 = scmp.eq.s32.totalorder %s17, 15
      %p80 = por %p78, %p79
      %p81 = scmp.ne.s32.totalorder %s70, %s71
      %p82 = scmp.eq.s32.totalorder %s17, 0
      %p83 = por %p81, %p82
      %p84 = scmp.ne.s32.totalorder %s70, %s71
      %p85 = scmp.eq.s32.totalorder %s18, 15
      %p86 = por %p84, %p85
      %p88 = scmp.ne.s32.totalorder %s71, %s87
      %p89 = scmp.eq.s32.totalorder %s18, 0
      %p90 = por %p88, %p89
      %s91 = ssub.s32 %s20, %s34
      %p92 = scmp.eq.s32.totalorder %s91, 0
      %s94 = sadd.s32 %s93, 1
      %s95 = scalar_select %p92, %s93, %s94
      %p98 = pneg %p92
      %p99 = scmp.eq.s32.totalorder %s12, 15
      %p100 = por %p98, %p99
      %p101 = scmp.ne.s32.totalorder %s93, %s96
      %p102 = scmp.eq.s32.totalorder %s12, 0
      %p103 = por %p101, %p102
      %p104 = scmp.ne.s32.totalorder %s93, %s96
      %p105 = scmp.eq.s32.totalorder %s17, 15
      %p106 = por %p104, %p105
      %p107 = scmp.ne.s32.totalorder %s96, %s97
      %p108 = scmp.eq.s32.totalorder %s17, 0
      %p109 = por %p107, %p108
      %p110 = scmp.ne.s32.totalorder %s96, %s97
      %p111 = scmp.eq.s32.totalorder %s18, 15
      %p112 = por %p110, %p111
      %p114 = scmp.ne.s32.totalorder %s97, %s113
      %p115 = scmp.eq.s32.totalorder %s18, 0
      %p116 = por %p114, %p115
      %s117 = ssub.s32 %s19, %s38
      %s118 = ssub.s32 %s21, %s30
      %s119 = sor.u32 %s117, %s118
      %s120 = ssub.s32 %s20, %s34
      %s121 = sor.u32 %s119, %s120
      %p122 = scmp.eq.s32.totalorder %s121, 0
      %s124 = sadd.s32 %s123, 1
      %s125 = scalar_select %p122, %s123, %s124
      %p128 = pneg %p122
      %p129 = scmp.eq.s32.totalorder %s12, 15
      %p130 = por %p128, %p129
      %p131 = scmp.ne.s32.totalorder %s123, %s126
      %p132 = scmp.eq.s32.totalorder %s12, 0
      %p133 = por %p131, %p132
      %p134 = scmp.ne.s32.totalorder %s123, %s126
      %p135 = scmp.eq.s32.totalorder %s17, 15
      %p136 = por %p134, %p135
      %p137 = scmp.ne.s32.totalorder %s126, %s127
      %p138 = scmp.eq.s32.totalorder %s17, 0
      %p139 = por %p137, %p138
      %p140 = scmp.ne.s32.totalorder %s126, %s127
      %p141 = scmp.eq.s32.totalorder %s18, 15
      %p142 = por %p140, %p141
      %p144 = scmp.ne.s32.totalorder %s127, %s143
      %p145 = scmp.eq.s32.totalorder %s18, 0
      %p146 = por %p144, %p145
      %p147 = scmp.le.s32.totalorder 1, %s12
      %p148 = scmp.lt.s32.totalorder %s12, 17
      %p149 = pnand %p147, %p148
      %p150 = pneg %p149
      // Predicated region
      $region9: #{_conv2d_jit.1} parent=5 // pred_check
        _
      $region10: #{_conv2d_jit.1} parent=5 // pred_check_branch
        %152 = sbr.rel (%p149) target = $region12
      $region11: #{_conv2d_jit.1} parent=5 // pred_region
        %s153 = ssub.s32 %s12, 1
        // Predicated region
        $region13: #{_conv2d_jit.1} parent=11 // pred_check
          %p154 = pneg %p83
        $region14: #{_conv2d_jit.1} parent=11 // pred_check_branch
          %156 = sbr.rel (%p154) target = $region16
        $region15: #{_conv2d_jit.1} parent=11 // pred_region
          %p157 = scmp.lt.s32.totalorder %s23, 0
          %s158 = scalar_select %p157, %s23, 0
          %s159 = smul.addr %s158, 2
          %s160 = scalar_lea.vmem %s1, %s159
        $region16: #{_conv2d_jit.1} parent=11 // pred_fallthru
          _
        // Predicated region
        $region17: #{_conv2d_jit.1} parent=11 // pred_check
          %p161 = pneg %p109
        $region18: #{_conv2d_jit.1} parent=11 // pred_check_branch
          %163 = sbr.rel (%p161) target = $region20
        $region19: #{_conv2d_jit.1} parent=11 // pred_region
          %p164 = scmp.lt.s32.totalorder %s23, 0
          %s165 = scalar_select %p164, %s23, 0
          %s166 = scalar_lea.vmem %s2, %s165
        $region20: #{_conv2d_jit.1} parent=11 // pred_fallthru
          _
      $region12: #{_conv2d_jit.1} parent=5 // pred_fallthru
        _
      %p167 = scmp.lt.s32.totalorder %s12, 16
      // Predicated region
      $region21: #{_conv2d_jit.1} parent=5 // pred_check
        %p168 = pneg %p167
      $region22: #{_conv2d_jit.1} parent=5 // pred_check_branch
        %170 = sbr.rel (%p168) target = $region24
      $region23: #{_conv2d_jit.1} parent=5 // pred_region
        // Predicated region
        $region25: #{_conv2d_jit.1} parent=23 // pred_check
          %p171 = pneg %p51
        $region26: #{_conv2d_jit.1} parent=23 // pred_check_branch
          %173 = sbr.rel (%p171) target = $region28
        $region27: #{_conv2d_jit.1} parent=23 // pred_region
          %p174 = scmp.lt.s32.totalorder %s19, 1
          %s175 = scalar_select %p174, %s19, 1
          %s176 = smul.addr %s175, 594
          %s177 = smul.addr %s176, 8
          %s178 = scalar_lea.vmem %s0, %s177
        $region28: #{_conv2d_jit.1} parent=23 // pred_fallthru
          _
      $region24: #{_conv2d_jit.1} parent=5 // pred_fallthru
        _
      %p179 = scmp.le.s32.totalorder 1, %s12
      %p180 = scmp.lt.s32.totalorder %s12, 17
      %p181 = pnand %p179, %p180
      %p182 = pneg %p181
      // Predicated region
      $region29: #{_conv2d_jit.1} parent=5 // pred_check
        _
      $region30: #{_conv2d_jit.1} parent=5 // pred_check_branch
        %184 = sbr.rel (%p181) target = $region32
      $region31: #{_conv2d_jit.1} parent=5 // pred_region
        %s185 = ssub.s32 %s12, 1
        %p186 = scmp.lt.s32.totalorder %s22, 1
        %s187 = scalar_select %p186, %s22, 1
        %s188 = smul.addr %s187, 594
        %s189 = smul.addr %s188, 8
        %s190 = scalar_lea.vmem %s0, %s189
        %p191 = pneg %p57
        %p192 = pneg %p54
        %p193 = scmp.lt.s32.totalorder %s23, 0
        %s194 = scalar_select %p193, %s23, 0
        %s195 = smul.addr %s194, 2
        %s196 = scalar_lea.vmem %s1, %s195
        %p197 = pneg %p83
        %p198 = pneg %p80
        %p199 = scmp.lt.s32.totalorder %s23, 0
        %s200 = scalar_select %p199, %s23, 0
        %s201 = scalar_lea.vmem %s2, %s200
        %p202 = pneg %p109
        %p203 = pneg %p106
        %p204 = pneg %p139
        %p205 = pneg %p136
        %s206 = sand.u32 %s126, 1
        %s207 = scalar_lea.sflag [#allocation3], %s206
        %s208 = sand.u32 %s126, 1
        %s209 = smul.addr %s208, 512
        %s210 = scalar_lea.vmem [#allocation2], %s209
        %p211 = scmp.lt.s32.totalorder %s22, 1
        %s212 = scalar_select %p211, %s22, 1
        %s213 = smul.addr %s212, 594
        %s214 = smul.addr %s213, 8
        %s215 = scalar_lea.vmem %s0, %s214
        %p216 = scmp.lt.s32.totalorder %s23, 0
        %s217 = scalar_select %p216, %s23, 0
        %s218 = smul.addr %s217, 2
        %s219 = scalar_lea.vmem %s1, %s218
        %p220 = scmp.lt.s32.totalorder %s23, 0
        %s221 = scalar_select %p220, %s23, 0
        %s222 = scalar_lea.vmem %s2, %s221
        %s223 = smul.u32 8, %s24
        %s225 = smul.u32 %s24, 8
        %s226 = smul.u32 %s225, 72
        %s227 = scalar_lea.vmem %s215, %s226
        %v228 = vld [vmem:[%s227] sm:$0xff]
        %v229 = vld [vmem:[%s227 + $0x8] sm:$0xff]
        %v230 = vld [vmem:[%s227 + $0x10] sm:$0xff]
        %v231 = vld [vmem:[%s227 + $0x18] sm:$0xff]
        %v232 = vld [vmem:[%s227 + $0x20] sm:$0xff]
        %v233 = vld [vmem:[%s227 + $0x28] sm:$0xff]
        %v234 = vld [vmem:[%s227 + $0x30] sm:$0xff]
        %v235 = vld [vmem:[%s227 + $0x38] sm:$0xff]
        %v236 = vld [vmem:[%s227 + $0x48] sm:$0xff]
        %v237 = vld [vmem:[%s227 + $0x50] sm:$0xff]
        %v238 = vld [vmem:[%s227 + $0x58] sm:$0xff]
        %v239 = vld [vmem:[%s227 + $0x60] sm:$0xff]
        %v240 = vld [vmem:[%s227 + $0x68] sm:$0xff]
        %v241 = vld [vmem:[%s227 + $0x70] sm:$0xff]
        %v242 = vld [vmem:[%s227 + $0x78] sm:$0xff]
        %v243 = vld [vmem:[%s227 + $0x80] sm:$0xff]
        %v244 = vld [vmem:[%s227 + $0x90] sm:$0xff]
        %v245 = vld [vmem:[%s227 + $0x98] sm:$0xff]
        %v246 = vld [vmem:[%s227 + $0xa0] sm:$0xff]
        %v247 = vld [vmem:[%s227 + $0xa8] sm:$0xff]
        %v248 = vld [vmem:[%s227 + $0xb0] sm:$0xff]
        %v249 = vld [vmem:[%s227 + $0xb8] sm:$0xff]
        %v250 = vld [vmem:[%s227 + $0xc0] sm:$0xff]
        %v251 = vld [vmem:[%s227 + $0xc8] sm:$0xff]
        %v252 = vld [vmem:[%s227 + $0xd8] sm:$0xff]
        %v253 = vld [vmem:[%s227 + $0xe0] sm:$0xff]
        %v254 = vld [vmem:[%s227 + $0xe8] sm:$0xff]
        %v255 = vld [vmem:[%s227 + $0xf0] sm:$0xff]
        %v256 = vld [vmem:[%s227 + $0xf8] sm:$0xff]
        %v257 = vld [vmem:[%s227 + $0x100] sm:$0xff]
        %v258 = vld [vmem:[%s227 + $0x108] sm:$0xff]
        %v259 = vld [vmem:[%s227 + $0x110] sm:$0xff]
        %v260 = vld [vmem:[%s227 + $0x120] sm:$0xff]
        %v261 = vld [vmem:[%s227 + $0x128] sm:$0xff]
        %v262 = vld [vmem:[%s227 + $0x130] sm:$0xff]
        %v263 = vld [vmem:[%s227 + $0x138] sm:$0xff]
        %v264 = vld [vmem:[%s227 + $0x140] sm:$0xff]
        %v265 = vld [vmem:[%s227 + $0x148] sm:$0xff]
        %v266 = vld [vmem:[%s227 + $0x150] sm:$0xff]
        %v267 = vld [vmem:[%s227 + $0x158] sm:$0xff]
        %v268 = vld [vmem:[%s227 + $0x168] sm:$0xff]
        %v269 = vld [vmem:[%s227 + $0x170] sm:$0xff]
        %v270 = vld [vmem:[%s227 + $0x178] sm:$0xff]
        %v271 = vld [vmem:[%s227 + $0x180] sm:$0xff]
        %v272 = vld [vmem:[%s227 + $0x188] sm:$0xff]
        %v273 = vld [vmem:[%s227 + $0x190] sm:$0xff]
        %v274 = vld [vmem:[%s227 + $0x198] sm:$0xff]
        %v275 = vld [vmem:[%s227 + $0x1a0] sm:$0xff]
        %v276 = vld [vmem:[%s227 + $0x1b0] sm:$0xff]
        %v277 = vld [vmem:[%s227 + $0x1b8] sm:$0xff]
        %v278 = vld [vmem:[%s227 + $0x1c0] sm:$0xff]
        %v279 = vld [vmem:[%s227 + $0x1c8] sm:$0xff]
        %v280 = vld [vmem:[%s227 + $0x1d0] sm:$0xff]
        %v281 = vld [vmem:[%s227 + $0x1d8] sm:$0xff]
        %v282 = vld [vmem:[%s227 + $0x1e0] sm:$0xff]
        %v283 = vld [vmem:[%s227 + $0x1e8] sm:$0xff]
        %v284 = vld [vmem:[%s227 + $0x1f8] sm:$0xff]
        %v285 = vld [vmem:[%s227 + $0x200] sm:$0xff]
        %v286 = vld [vmem:[%s227 + $0x208] sm:$0xff]
        %v287 = vld [vmem:[%s227 + $0x210] sm:$0xff]
        %v288 = vld [vmem:[%s227 + $0x218] sm:$0xff]
        %v289 = vld [vmem:[%s227 + $0x220] sm:$0xff]
        %v290 = vld [vmem:[%s227 + $0x228] sm:$0xff]
        %v291 = vld [vmem:[%s227 + $0x230] sm:$0xff]
        %v292 = vld [vmem:[%s219] sm:$0x3]
        %v293 = vld [vmem:[%s227 + $0x1] sm:$0xff]
        %v294 = vld [vmem:[%s227 + $0x9] sm:$0xff]
        %v295 = vld [vmem:[%s227 + $0x11] sm:$0xff]
        %v296 = vld [vmem:[%s227 + $0x19] sm:$0xff]
        %v297 = vld [vmem:[%s227 + $0x21] sm:$0xff]
        %v298 = vld [vmem:[%s227 + $0x29] sm:$0xff]
        %v299 = vld [vmem:[%s227 + $0x31] sm:$0xff]
        %v300 = vld [vmem:[%s227 + $0x39] sm:$0xff]
        %v301 = vld [vmem:[%s227 + $0x49] sm:$0xff]
        %v302 = vld [vmem:[%s227 + $0x51] sm:$0xff]
        %v303 = vld [vmem:[%s227 + $0x59] sm:$0xff]
        %v304 = vld [vmem:[%s227 + $0x61] sm:$0xff]
        %v305 = vld [vmem:[%s227 + $0x69] sm:$0xff]
        %v306 = vld [vmem:[%s227 + $0x71] sm:$0xff]
        %v307 = vld [vmem:[%s227 + $0x79] sm:$0xff]
        %v308 = vld [vmem:[%s227 + $0x81] sm:$0xff]
        %v309 = vld [vmem:[%s227 + $0x91] sm:$0xff]
        %v310 = vld [vmem:[%s227 + $0x99] sm:$0xff]
        %v311 = vld [vmem:[%s227 + $0xa1] sm:$0xff]
        %v312 = vld [vmem:[%s227 + $0xa9] sm:$0xff]
        %v313 = vld [vmem:[%s227 + $0xb1] sm:$0xff]
        %v314 = vld [vmem:[%s227 + $0xb9] sm:$0xff]
        %v315 = vld [vmem:[%s227 + $0xc1] sm:$0xff]
        %v316 = vld [vmem:[%s227 + $0xc9] sm:$0xff]
        %v317 = vld [vmem:[%s227 + $0xd9] sm:$0xff]
        %v318 = vld [vmem:[%s227 + $0xe1] sm:$0xff]
        %v319 = vld [vmem:[%s227 + $0xe9] sm:$0xff]
        %v320 = vld [vmem:[%s227 + $0xf1] sm:$0xff]
        %v321 = vld [vmem:[%s227 + $0xf9] sm:$0xff]
        %v322 = vld [vmem:[%s227 + $0x101] sm:$0xff]
        %v323 = vld [vmem:[%s227 + $0x109] sm:$0xff]
        %v324 = vld [vmem:[%s227 + $0x111] sm:$0xff]
        %v325 = vld [vmem:[%s227 + $0x121] sm:$0xff]
        %v326 = vld [vmem:[%s227 + $0x129] sm:$0xff]
        %v327 = vld [vmem:[%s227 + $0x131] sm:$0xff]
        %v328 = vld [vmem:[%s227 + $0x139] sm:$0xff]
        %v329 = vld [vmem:[%s227 + $0x141] sm:$0xff]
        %v330 = vld [vmem:[%s227 + $0x149] sm:$0xff]
        %v331 = vld [vmem:[%s227 + $0x151] sm:$0xff]
        %v332 = vld [vmem:[%s227 + $0x159] sm:$0xff]
        %v333 = vld [vmem:[%s227 + $0x169] sm:$0xff]
        %v334 = vld [vmem:[%s227 + $0x171] sm:$0xff]
        %v335 = vld [vmem:[%s227 + $0x179] sm:$0xff]
        %v336 = vld [vmem:[%s227 + $0x181] sm:$0xff]
        %v337 = vld [vmem:[%s227 + $0x189] sm:$0xff]
        %v338 = vld [vmem:[%s227 + $0x191] sm:$0xff]
        %v339 = vld [vmem:[%s227 + $0x199] sm:$0xff]
        %v340 = vld [vmem:[%s227 + $0x1a1] sm:$0xff]
        %v341 = vld [vmem:[%s227 + $0x1b1] sm:$0xff]
        %v342 = vld [vmem:[%s227 + $0x1b9] sm:$0xff]
        %v343 = vld [vmem:[%s227 + $0x1c1] sm:$0xff]
        %v344 = vld [vmem:[%s227 + $0x1c9] sm:$0xff]
        %v345 = vld [vmem:[%s227 + $0x1d1] sm:$0xff]
        %v346 = vld [vmem:[%s227 + $0x1d9] sm:$0xff]
        %v347 = vld [vmem:[%s227 + $0x1e1] sm:$0xff]
        %v348 = vld [vmem:[%s227 + $0x1e9] sm:$0xff]
        %v349 = vld [vmem:[%s227 + $0x1f9] sm:$0xff]
        %v350 = vld [vmem:[%s227 + $0x201] sm:$0xff]
        %v351 = vld [vmem:[%s227 + $0x209] sm:$0xff]
        %v352 = vld [vmem:[%s227 + $0x211] sm:$0xff]
        %v353 = vld [vmem:[%s227 + $0x219] sm:$0xff]
        %v354 = vld [vmem:[%s227 + $0x221] sm:$0xff]
        %v355 = vld [vmem:[%s227 + $0x229] sm:$0xff]
        %v356 = vld [vmem:[%s227 + $0x231] sm:$0xff]
        %s357 = scalar_lea.vmem %s219, 2
        %v358 = vld [vmem:[%s357] sm:$0x3]
        %vm359 = vcmask 23552
        %v361 = vsel %vm359, %v293, 0
        %v364 = vsel %vm359, %v294, 0
        %v367 = vsel %vm359, %v295, 0
        %v370 = vsel %vm359, %v296, 0
        %v373 = vsel %vm359, %v297, 0
        %v376 = vsel %vm359, %v298, 0
        %v379 = vsel %vm359, %v299, 0
        %v382 = vsel %vm359, %v300, 0
        %v385 = vsel %vm359, %v301, 0
        %v388 = vsel %vm359, %v302, 0
        %v391 = vsel %vm359, %v303, 0
        %v394 = vsel %vm359, %v304, 0
        %v397 = vsel %vm359, %v305, 0
        %v400 = vsel %vm359, %v306, 0
        %v403 = vsel %vm359, %v307, 0
        %v406 = vsel %vm359, %v308, 0
        %v409 = vsel %vm359, %v309, 0
        %v412 = vsel %vm359, %v310, 0
        %v415 = vsel %vm359, %v311, 0
        %v418 = vsel %vm359, %v312, 0
        %v421 = vsel %vm359, %v313, 0
        %v424 = vsel %vm359, %v314, 0
        %v427 = vsel %vm359, %v315, 0
        %v430 = vsel %vm359, %v316, 0
        %v433 = vsel %vm359, %v317, 0
        %v436 = vsel %vm359, %v318, 0
        %v439 = vsel %vm359, %v319, 0
        %v442 = vsel %vm359, %v320, 0
        %v445 = vsel %vm359, %v321, 0
        %v448 = vsel %vm359, %v322, 0
        %v451 = vsel %vm359, %v323, 0
        %v454 = vsel %vm359, %v324, 0
        %v457 = vsel %vm359, %v325, 0
        %v460 = vsel %vm359, %v326, 0
        %v463 = vsel %vm359, %v327, 0
        %v466 = vsel %vm359, %v328, 0
        %v469 = vsel %vm359, %v329, 0
        %v472 = vsel %vm359, %v330, 0
        %v475 = vsel %vm359, %v331, 0
        %v478 = vsel %vm359, %v332, 0
        %v481 = vsel %vm359, %v333, 0
        %v484 = vsel %vm359, %v334, 0
        %v487 = vsel %vm359, %v335, 0
        %v490 = vsel %vm359, %v336, 0
        %v493 = vsel %vm359, %v337, 0
        %v496 = vsel %vm359, %v338, 0
        %v499 = vsel %vm359, %v339, 0
        %v502 = vsel %vm359, %v340, 0
        %v505 = vsel %vm359, %v341, 0
        %v508 = vsel %vm359, %v342, 0
        %v511 = vsel %vm359, %v343, 0
        %v514 = vsel %vm359, %v344, 0
        %v517 = vsel %vm359, %v345, 0
        %v520 = vsel %vm359, %v346, 0
        %v523 = vsel %vm359, %v347, 0
        %v526 = vsel %vm359, %v348, 0
        %v529 = vsel %vm359, %v349, 0
        %v532 = vsel %vm359, %v350, 0
        %v535 = vsel %vm359, %v351, 0
        %v538 = vsel %vm359, %v352, 0
        %v541 = vsel %vm359, %v353, 0
        %v544 = vsel %vm359, %v354, 0
        %v547 = vsel %vm359, %v355, 0
        %v550 = vsel %vm359, %v356, 0
        %vm552 = vcmask 1040384
        %vm553 = vcmask 1041408
        %v554 = vsel %vm552, 4294967295, 65535
        %v555 = vsel %vm553, %v554, 0
        %v557 = vand.u32 %v358, %v555
        %559 = vmatprep.subr.bf16.mxu0 0
        %560 = vmatpush1.bf16.msra.mxu0 %v557
        %561 = vmatprep.subr.bf16.mxu0 0
        %562 = vmatpush1.bf16.msra.mxu0 0
        %563 = vmatprep.subr.bf16.mxu0 0
        %564 = vmatpush1.bf16.msra.mxu0 0
        %565 = vmatprep.subr.bf16.mxu0 0
        %566 = vmatpush1.bf16.msra.mxu0 0
        %567 = vmatprep.subr.bf16.mxu0 0
        %568 = vmatpush1.bf16.msra.mxu0 0
        %569 = vmatprep.subr.bf16.mxu0 0
        %570 = vmatpush1.bf16.msra.mxu0 0
        %571 = vmatprep.subr.bf16.mxu0 0
        %572 = vmatpush1.bf16.msra.mxu0 0
        %573 = vmatprep.subr.bf16.mxu0 0
        %574 = vmatpush1.bf16.msra.mxu0 0
        %575 = vmatprep.subr.bf16.mxu0 0
        %576 = vmatpush1.bf16.msra.mxu0 0
        %577 = vmatprep.subr.bf16.mxu0 0
        %578 = vmatpush1.bf16.msra.mxu0 0
        %579 = vmatprep.subr.bf16.mxu0 0
        %580 = vmatpush1.bf16.msra.mxu0 0
        %581 = vmatprep.subr.bf16.mxu0 0
        %582 = vmatpush1.bf16.msra.mxu0 0
        %583 = vmatprep.subr.bf16.mxu0 0
        %584 = vmatpush1.bf16.msra.mxu0 0
        %585 = vmatprep.subr.bf16.mxu0 0
        %586 = vmatpush1.bf16.msra.mxu0 0
        %587 = vmatprep.subr.bf16.mxu0 0
        %588 = vmatpush1.bf16.msra.mxu0 0
        %589 = vmatprep.subr.bf16.mxu0 0
        %590 = vmatpush1.bf16.msra.mxu0 0
        %591 = vmatprep.mubr.f32.mxu0 0.0
        %592 = vmatmul.mubr.f32.gmra.mrb[0].mxu0 %v361
        %v593 = vpop.f32.mrb[0].mxu0
        %v594 = vadd.f32 0.0, %v593
        %v595 = vpop.f32.mrb[0].mxu0
        %596 = vmatprep.mubr.f32.mxu0 0.0
        %597 = vmatmul.mubr.f32.gmra.mrb[0].mxu0 %v364
        %v598 = vpop.f32.mrb[0].mxu0
        %v599 = vadd.f32 0.0, %v598
        %v600 = vpop.f32.mrb[0].mxu0
        %601 = vmatprep.mubr.f32.mxu0 0.0
        %602 = vmatmul.mubr.f32.gmra.mrb[0].mxu0 %v367
        %v603 = vpop.f32.mrb[0].mxu0
        %v604 = vadd.f32 0.0, %v603
        %v605 = vpop.f32.mrb[0].mxu0
        %606 = vmatprep.mubr.f32.mxu0 0.0
        %607 = vmatmul.mubr.f32.gmra.mrb[0].mxu0 %v370
        %v608 = vpop.f32.mrb[0].mxu0
        %v609 = vadd.f32 0.0, %v608
        %v610 = vpop.f32.mrb[0].mxu0
        %611 = vmatprep.mubr.f32.mxu0 0.0
        %612 = vmatmul.mubr.f32.gmra.mrb[0].mxu0 %v373
        %v613 = vpop.f32.mrb[0].mxu0
        %v614 = vadd.f32 0.0, %v613
        %v615 = vpop.f32.mrb[0].mxu0
        %616 = vmatprep.mubr.f32.mxu0 0.0
        %617 = vmatmul.mubr.f32.gmra.mrb[0].mxu0 %v376
        %v618 = vpop.f32.mrb[0].mxu0
        %v619 = vadd.f32 0.0, %v618
        %v620 = vpop.f32.mrb[0].mxu0
        %621 = vmatprep.mubr.f32.mxu0 0.0
        %622 = vmatmul.mubr.f32.gmra.mrb[0].mxu0 %v379
        %v623 = vpop.f32.mrb[0].mxu0
        %v624 = vadd.f32 0.0, %v623
        %v625 = vpop.f32.mrb[0].mxu0
        %626 = vmatprep.mubr.f32.mxu0 0.0
        %627 = vmatmul.mubr.f32.gmra.mrb[0].mxu0 %v382
        %v628 = vpop.f32.mrb[0].mxu0
        %v629 = vadd.f32 0.0, %v628
        %v630 = vpop.f32.mrb[0].mxu0
        %631 = vmatprep.mubr.f32.mxu0 0.0
        %632 = vmatmul.mubr.f32.gmra.mrb[0].mxu0 %v385
        %v633 = vpop.f32.mrb[0].mxu0
        %v634 = vadd.f32 0.0, %v633
        %v635 = vpop.f32.mrb[0].mxu0
        %636 = vmatprep.mubr.f32.mxu0 0.0
        %637 = vmatmul.mubr.f32.gmra.mrb[0].mxu0 %v388
        %v638 = vpop.f32.mrb[0].mxu0
        %v639 = vadd.f32 0.0, %v638
        %v640 = vpop.f32.mrb[0].mxu0
        %641 = vmatprep.mubr.f32.mxu0 0.0
        %642 = vmatmul.mubr.f32.gmra.mrb[0].mxu0 %v391
        %v643 = vpop.f32.mrb[0].mxu0
        %v644 = vadd.f32 0.0, %v643
        %v645 = vpop.f32.mrb[0].mxu0
        %646 = vmatprep.mubr.f32.mxu0 0.0
        %647 = vmatmul.mubr.f32.gmra.mrb[0].mxu0 %v394
        %v648 = vpop.f32.mrb[0].mxu0
        %v649 = vadd.f32 0.0, %v648
        %v650 = vpop.f32.mrb[0].mxu0
        %651 = vmatprep.mubr.f32.mxu0 0.0
        %652 = vmatmul.mubr.f32.gmra.mrb[0].mxu0 %v397
        %v653 = vpop.f32.mrb[0].mxu0
        %v654 = vadd.f32 0.0, %v653
        %v655 = vpop.f32.mrb[0].mxu0
        %656 = vmatprep.mubr.f32.mxu0 0.0
        %657 = vmatmul.mubr.f32.gmra.mrb[0].mxu0 %v400
        %v658 = vpop.f32.mrb[0].mxu0
        %v659 = vadd.f32 0.0, %v658
        %v660 = vpop.f32.mrb[0].mxu0
        %661 = vmatprep.mubr.f32.mxu0 0.0
        %662 = vmatmul.mubr.f32.gmra.mrb[0].mxu0 %v403
        %v663 = vpop.f32.mrb[0].mxu0
        %v664 = vadd.f32 0.0, %v663
        %v665 = vpop.f32.mrb[0].mxu0
        %666 = vmatprep.mubr.f32.mxu0 0.0
        %667 = vmatmul.mubr.f32.gmra.mrb[0].mxu0 %v406
        %v668 = vpop.f32.mrb[0].mxu0
        %v669 = vadd.f32 0.0, %v668
        %v670 = vpop.f32.mrb[0].mxu0
        %671 = vmatprep.mubr.f32.mxu0 0.0
        %672 = vmatmul.mubr.f32.gmra.mrb[0].mxu0 %v409
        %v673 = vpop.f32.mrb[0].mxu0
        %v674 = vadd.f32 0.0, %v673
        %v675 = vpop.f32.mrb[0].mxu0
        %676 = vmatprep.mubr.f32.mxu0 0.0
        %677 = vmatmul.mubr.f32.gmra.mrb[0].mxu0 %v412
        %v678 = vpop.f32.mrb[0].mxu0
        %v679 = vadd.f32 0.0, %v678
        %v680 = vpop.f32.mrb[0].mxu0
        %681 = vmatprep.mubr.f32.mxu0 0.0
        %682 = vmatmul.mubr.f32.gmra.mrb[0].mxu0 %v415
        %v683 = vpop.f32.mrb[0].mxu0
        %v684 = vadd.f32 0.0, %v683
        %v685 = vpop.f32.mrb[0].mxu0
        %686 = vmatprep.mubr.f32.mxu0 0.0
        %687 = vmatmul.mubr.f32.gmra.mrb[0].mxu0 %v418
        %v688 = vpop.f32.mrb[0].mxu0
        %v689 = vadd.f32 0.0, %v688
        %v690 = vpop.f32.mrb[0].mxu0
        %691 = vmatprep.mubr.f32.mxu0 0.0
        %692 = vmatmul.mubr.f32.gmra.mrb[0].mxu0 %v421
        %v693 = vpop.f32.mrb[0].mxu0
        %v694 = vadd.f32 0.0, %v693
        %v695 = vpop.f32.mrb[0].mxu0
        %696 = vmatprep.mubr.f32.mxu0 0.0
        %697 = vmatmul.mubr.f32.gmra.mrb[0].mxu0 %v424
        %v698 = vpop.f32.mrb[0].mxu0
        %v699 = vadd.f32 0.0, %v698
        %v700 = vpop.f32.mrb[0].mxu0
        %701 = vmatprep.mubr.f32.mxu0 0.0
        %702 = vmatmul.mubr.f32.gmra.mrb[0].mxu0 %v427
        %v703 = vpop.f32.mrb[0].mxu0
        %v704 = vadd.f32 0.0, %v703
        %v705 = vpop.f32.mrb[0].mxu0
        %706 = vmatprep.mubr.f32.mxu0 0.0
        %707 = vmatmul.mubr.f32.gmra.mrb[0].mxu0 %v430
        %v708 = vpop.f32.mrb[0].mxu0
        %v709 = vadd.f32 0.0, %v708
        %v710 = vpop.f32.mrb[0].mxu0
        %711 = vmatprep.mubr.f32.mxu0 0.0
        %712 = vmatmul.mubr.f32.gmra.mrb[0].mxu0 %v433
        %v713 = vpop.f32.mrb[0].mxu0
        %v714 = vadd.f32 0.0, %v713
        %v715 = vpop.f32.mrb[0].mxu0
        %716 = vmatprep.mubr.f32.mxu0 0.0
        %717 = vmatmul.mubr.f32.gmra.mrb[0].mxu0 %v436
        %v718 = vpop.f32.mrb[0].mxu0
        %v719 = vadd.f32 0.0, %v718
        %v720 = vpop.f32.mrb[0].mxu0
        %721 = vmatprep.mubr.f32.mxu0 0.0
        %722 = vmatmul.mubr.f32.gmra.mrb[0].mxu0 %v439
        %v723 = vpop.f32.mrb[0].mxu0
        %v724 = vadd.f32 0.0, %v723
        %v725 = vpop.f32.mrb[0].mxu0
        %726 = vmatprep.mubr.f32.mxu0 0.0
        %727 = vmatmul.mubr.f32.gmra.mrb[0].mxu0 %v442
        %v728 = vpop.f32.mrb[0].mxu0
        %v729 = vadd.f32 0.0, %v728
        %v730 = vpop.f32.mrb[0].mxu0
        %731 = vmatprep.mubr.f32.mxu0 0.0
        %732 = vmatmul.mubr.f32.gmra.mrb[0].mxu0 %v445
        %v733 = vpop.f32.mrb[0].mxu0
        %v734 = vadd.f32 0.0, %v733
        %v735 = vpop.f32.mrb[0].mxu0
        %736 = vmatprep.mubr.f32.mxu0 0.0
        %737 = vmatmul.mubr.f32.gmra.mrb[0].mxu0 %v448
        %v738 = vpop.f32.mrb[0].mxu0
        %v739 = vadd.f32 0.0, %v738
        %v740 = vpop.f32.mrb[0].mxu0
        %741 = vmatprep.mubr.f32.mxu0 0.0
        %742 = vmatmul.mubr.f32.gmra.mrb[0].mxu0 %v451
        %v743 = vpop.f32.mrb[0].mxu0
        %v744 = vadd.f32 0.0, %v743
        %v745 = vpop.f32.mrb[0].mxu0
        %746 = vmatprep.mubr.f32.mxu0 0.0
        %747 = vmatmul.mubr.f32.gmra.mrb[0].mxu0 %v454
        %v748 = vpop.f32.mrb[0].mxu0
        %v749 = vadd.f32 0.0, %v748
        %v750 = vpop.f32.mrb[0].mxu0
        %751 = vmatprep.mubr.f32.mxu0 0.0
        %752 = vmatmul.mubr.f32.gmra.mrb[0].mxu0 %v457
        %v753 = vpop.f32.mrb[0].mxu0
        %v754 = vadd.f32 0.0, %v753
        %v755 = vpop.f32.mrb[0].mxu0
        %756 = vmatprep.mubr.f32.mxu0 0.0
        %757 = vmatmul.mubr.f32.gmra.mrb[0].mxu0 %v460
        %v758 = vpop.f32.mrb[0].mxu0
        %v759 = vadd.f32 0.0, %v758
        %v760 = vpop.f32.mrb[0].mxu0
        %761 = vmatprep.mubr.f32.mxu0 0.0
        %762 = vmatmul.mubr.f32.gmra.mrb[0].mxu0 %v463
        %v763 = vpop.f32.mrb[0].mxu0
        %v764 = vadd.f32 0.0, %v763
        %v765 = vpop.f32.mrb[0].mxu0
        %766 = vmatprep.mubr.f32.mxu0 0.0
        %767 = vmatmul.mubr.f32.gmra.mrb[0].mxu0 %v466
        %v768 = vpop.f32.mrb[0].mxu0
        %v769 = vadd.f32 0.0, %v768
        %v770 = vpop.f32.mrb[0].mxu0
        %771 = vmatprep.mubr.f32.mxu0 0.0
        %772 = vmatmul.mubr.f32.gmra.mrb[0].mxu0 %v469
        %v773 = vpop.f32.mrb[0].mxu0
        %v774 = vadd.f32 0.0, %v773
        %v775 = vpop.f32.mrb[0].mxu0
        %776 = vmatprep.mubr.f32.mxu0 0.0
        %777 = vmatmul.mubr.f32.gmra.mrb[0].mxu0 %v472
        %v778 = vpop.f32.mrb[0].mxu0
        %v779 = vadd.f32 0.0, %v778
        %v780 = vpop.f32.mrb[0].mxu0
        %781 = vmatprep.mubr.f32.mxu0 0.0
        %782 = vmatmul.mubr.f32.gmra.mrb[0].mxu0 %v475
        %v783 = vpop.f32.mrb[0].mxu0
        %v784 = vadd.f32 0.0, %v783
        %v785 = vpop.f32.mrb[0].mxu0
        %786 = vmatprep.mubr.f32.mxu0 0.0
        %787 = vmatmul.mubr.f32.gmra.mrb[0].mxu0 %v478
        %v788 = vpop.f32.mrb[0].mxu0
        %v789 = vadd.f32 0.0, %v788
        %v790 = vpop.f32.mrb[0].mxu0
        %791 = vmatprep.mubr.f32.mxu0 0.0
        %792 = vmatmul.mubr.f32.gmra.mrb[0].mxu0 %v481
        %v793 = vpop.f32.mrb[0].mxu0
        %v794 = vadd.f32 0.0, %v793
        %v795 = vpop.f32.mrb[0].mxu0
        %796 = vmatprep.mubr.f32.mxu0 0.0
        %797 = vmatmul.mubr.f32.gmra.mrb[0].mxu0 %v484
        %v798 = vpop.f32.mrb[0].mxu0
        %v799 = vadd.f32 0.0, %v798
        %v800 = vpop.f32.mrb[0].mxu0
        %801 = vmatprep.mubr.f32.mxu0 0.0
        %802 = vmatmul.mubr.f32.gmra.mrb[0].mxu0 %v487
        %v803 = vpop.f32.mrb[0].mxu0
        %v804 = vadd.f32 0.0, %v803
        %v805 = vpop.f32.mrb[0].mxu0
        %806 = vmatprep.mubr.f32.mxu0 0.0
        %807 = vmatmul.mubr.f32.gmra.mrb[0].mxu0 %v490
        %v808 = vpop.f32.mrb[0].mxu0
        %v809 = vadd.f32 0.0, %v808
        %v810 = vpop.f32.mrb[0].mxu0
        %811 = vmatprep.mubr.f32.mxu0 0.0
        %812 = vmatmul.mubr.f32.gmra.mrb[0].mxu0 %v493
        %v813 = vpop.f32.mrb[0].mxu0
        %v814 = vadd.f32 0.0, %v813
        %v815 = vpop.f32.mrb[0].mxu0
        %816 = vmatprep.mubr.f32.mxu0 0.0
        %817 = vmatmul.mubr.f32.gmra.mrb[0].mxu0 %v496
        %v818 = vpop.f32.mrb[0].mxu0
        %v819 = vadd.f32 0.0, %v818
        %v820 = vpop.f32.mrb[0].mxu0
        %821 = vmatprep.mubr.f32.mxu0 0.0
        %822 = vmatmul.mubr.f32.gmra.mrb[0].mxu0 %v499
        %v823 = vpop.f32.mrb[0].mxu0
        %v824 = vadd.f32 0.0, %v823
        %v825 = vpop.f32.mrb[0].mxu0
        %826 = vmatprep.mubr.f32.mxu0 0.0
        %827 = vmatmul.mubr.f32.gmra.mrb[0].mxu0 %v502
        %v828 = vpop.f32.mrb[0].mxu0
        %v829 = vadd.f32 0.0, %v828
        %v830 = vpop.f32.mrb[0].mxu0
        %831 = vmatprep.mubr.f32.mxu0 0.0
        %832 = vmatmul.mubr.f32.gmra.mrb[0].mxu0 %v505
        %v833 = vpop.f32.mrb[0].mxu0
        %v834 = vadd.f32 0.0, %v833
        %v835 = vpop.f32.mrb[0].mxu0
        %836 = vmatprep.mubr.f32.mxu0 0.0
        %837 = vmatmul.mubr.f32.gmra.mrb[0].mxu0 %v508
        %v838 = vpop.f32.mrb[0].mxu0
        %v839 = vadd.f32 0.0, %v838
        %v840 = vpop.f32.mrb[0].mxu0
        %841 = vmatprep.mubr.f32.mxu0 0.0
        %842 = vmatmul.mubr.f32.gmra.mrb[0].mxu0 %v511
        %v843 = vpop.f32.mrb[0].mxu0
        %v844 = vadd.f32 0.0, %v843
        %v845 = vpop.f32.mrb[0].mxu0
        %846 = vmatprep.mubr.f32.mxu0 0.0
        %847 = vmatmul.mubr.f32.gmra.mrb[0].mxu0 %v514
        %v848 = vpop.f32.mrb[0].mxu0
        %v849 = vadd.f32 0.0, %v848
        %v850 = vpop.f32.mrb[0].mxu0
        %851 = vmatprep.mubr.f32.mxu0 0.0
        %852 = vmatmul.mubr.f32.gmra.mrb[0].mxu0 %v517
        %v853 = vpop.f32.mrb[0].mxu0
        %v854 = vadd.f32 0.0, %v853
        %v855 = vpop.f32.mrb[0].mxu0
        %856 = vmatprep.mubr.f32.mxu0 0.0
        %857 = vmatmul.mubr.f32.gmra.mrb[0].mxu0 %v520
        %v858 = vpop.f32.mrb[0].mxu0
        %v859 = vadd.f32 0.0, %v858
        %v860 = vpop.f32.mrb[0].mxu0
        %861 = vmatprep.mubr.f32.mxu0 0.0
        %862 = vmatmul.mubr.f32.gmra.mrb[0].mxu0 %v523
        %v863 = vpop.f32.mrb[0].mxu0
        %v864 = vadd.f32 0.0, %v863
        %v865 = vpop.f32.mrb[0].mxu0
        %866 = vmatprep.mubr.f32.mxu0 0.0
        %867 = vmatmul.mubr.f32.gmra.mrb[0].mxu0 %v526
        %v868 = vpop.f32.mrb[0].mxu0
        %v869 = vadd.f32 0.0, %v868
        %v870 = vpop.f32.mrb[0].mxu0
        %871 = vmatprep.mubr.f32.mxu0 0.0
        %872 = vmatmul.mubr.f32.gmra.mrb[0].mxu0 %v529
        %v873 = vpop.f32.mrb[0].mxu0
        %v874 = vadd.f32 0.0, %v873
        %v875 = vpop.f32.mrb[0].mxu0
        %876 = vmatprep.mubr.f32.mxu0 0.0
        %877 = vmatmul.mubr.f32.gmra.mrb[0].mxu0 %v532
        %v878 = vpop.f32.mrb[0].mxu0
        %v879 = vadd.f32 0.0, %v878
        %v880 = vpop.f32.mrb[0].mxu0
        %881 = vmatprep.mubr.f32.mxu0 0.0
        %882 = vmatmul.mubr.f32.gmra.mrb[0].mxu0 %v535
        %v883 = vpop.f32.mrb[0].mxu0
        %v884 = vadd.f32 0.0, %v883
        %v885 = vpop.f32.mrb[0].mxu0
        %886 = vmatprep.mubr.f32.mxu0 0.0
        %887 = vmatmul.mubr.f32.gmra.mrb[0].mxu0 %v538
        %v888 = vpop.f32.mrb[0].mxu0
        %v889 = vadd.f32 0.0, %v888
        %v890 = vpop.f32.mrb[0].mxu0
        %891 = vmatprep.mubr.f32.mxu0 0.0
        %892 = vmatmul.mubr.f32.gmra.mrb[0].mxu0 %v541
        %v893 = vpop.f32.mrb[0].mxu0
        %v894 = vadd.f32 0.0, %v893
        %v895 = vpop.f32.mrb[0].mxu0
        %896 = vmatprep.mubr.f32.mxu0 0.0
        %897 = vmatmul.mubr.f32.gmra.mrb[0].mxu0 %v544
        %v898 = vpop.f32.mrb[0].mxu0
        %v899 = vadd.f32 0.0, %v898
        %v900 = vpop.f32.mrb[0].mxu0
        %901 = vmatprep.mubr.f32.mxu0 0.0
        %902 = vmatmul.mubr.f32.gmra.mrb[0].mxu0 %v547
        %v903 = vpop.f32.mrb[0].mxu0
        %v904 = vadd.f32 0.0, %v903
        %v905 = vpop.f32.mrb[0].mxu0
        %906 = vmatprep.mubr.f32.mxu0 0.0
        %907 = vmatmul.mubr.f32.gmra.mrb[0].mxu0 %v550
        %v908 = vpop.f32.mrb[0].mxu0
        %v909 = vadd.f32 0.0, %v908
        %v910 = vpop.f32.mrb[0].mxu0
        %911 = vdwg.mxu0
        %v913 = vsel %vm359, %v228, 0
        %v916 = vsel %vm359, %v229, 0
        %v919 = vsel %vm359, %v230, 0
        %v922 = vsel %vm359, %v231, 0
        %v925 = vsel %vm359, %v232, 0
        %v928 = vsel %vm359, %v233, 0
        %v931 = vsel %vm359, %v234, 0
        %v934 = vsel %vm359, %v235, 0
        %v937 = vsel %vm359, %v236, 0
        %v940 = vsel %vm359, %v237, 0
        %v943 = vsel %vm359, %v238, 0
        %v946 = vsel %vm359, %v239, 0
        %v949 = vsel %vm359, %v240, 0
        %v952 = vsel %vm359, %v241, 0
        %v955 = vsel %vm359, %v242, 0
        %v958 = vsel %vm359, %v243, 0
        %v961 = vsel %vm359, %v244, 0
        %v964 = vsel %vm359, %v245, 0
        %v967 = vsel %vm359, %v246, 0
        %v970 = vsel %vm359, %v247, 0
        %v973 = vsel %vm359, %v248, 0
        %v976 = vsel %vm359, %v249, 0
        %v979 = vsel %vm359, %v250, 0
        %v982 = vsel %vm359, %v251, 0
        %v985 = vsel %vm359, %v252, 0
        %v988 = vsel %vm359, %v253, 0
        %v991 = vsel %vm359, %v254, 0
        %v994 = vsel %vm359, %v255, 0
        %v997 = vsel %vm359, %v256, 0
        %v1000 = vsel %vm359, %v257, 0
        %v1003 = vsel %vm359, %v258, 0
        %v1006 = vsel %vm359, %v259, 0
        %v1009 = vsel %vm359, %v260, 0
        %v1012 = vsel %vm359, %v261, 0
        %v1015 = vsel %vm359, %v262, 0
        %v1018 = vsel %vm359, %v263, 0
        %v1021 = vsel %vm359, %v264, 0
        %v1024 = vsel %vm359, %v265, 0
        %v1027 = vsel %vm359, %v266, 0
        %v1030 = vsel %vm359, %v267, 0
        %v1033 = vsel %vm359, %v268, 0
        %v1036 = vsel %vm359, %v269, 0
        %v1039 = vsel %vm359, %v270, 0
        %v1042 = vsel %vm359, %v271, 0
        %v1045 = vsel %vm359, %v272, 0
        %v1048 = vsel %vm359, %v273, 0
        %v1051 = vsel %vm359, %v274, 0
        %v1054 = vsel %vm359, %v275, 0
        %v1057 = vsel %vm359, %v276, 0
        %v1060 = vsel %vm359, %v277, 0
        %v1063 = vsel %vm359, %v278, 0
        %v1066 = vsel %vm359, %v279, 0
        %v1069 = vsel %vm359, %v280, 0
        %v1072 = vsel %vm359, %v281, 0
        %v1075 = vsel %vm359, %v282, 0
        %v1078 = vsel %vm359, %v283, 0
        %v1081 = vsel %vm359, %v284, 0
        %v1084 = vsel %vm359, %v285, 0
        %v1087 = vsel %vm359, %v286, 0
        %v1090 = vsel %vm359, %v287, 0
        %v1093 = vsel %vm359, %v288, 0
        %v1096 = vsel %vm359, %v289, 0
        %v1099 = vsel %vm359, %v290, 0
        %v1102 = vsel %vm359, %v291, 0
        %v1105 = vand.u32 %v292, %v555
        %1107 = vmatprep.subr.bf16.mxu0 0
        %1108 = vmatpush1.bf16.msra.mxu0 %v1105
        %1109 = vmatprep.subr.bf16.mxu0 0
        %1110 = vmatpush1.bf16.msra.mxu0 0
        %1111 = vmatprep.subr.bf16.mxu0 0
        %1112 = vmatpush1.bf16.msra.mxu0 0
        %1113 = vmatprep.subr.bf16.mxu0 0
        %1114 = vmatpush1.bf16.msra.mxu0 0
        %1115 = vmatprep.subr.bf16.mxu0 0
        %1116 = vmatpush1.bf16.msra.mxu0 0
        %1117 = vmatprep.subr.bf16.mxu0 0
        %1118 = vmatpush1.bf16.msra.mxu0 0
        %1119 = vmatprep.subr.bf16.mxu0 0
        %1120 = vmatpush1.bf16.msra.mxu0 0
        %1121 = vmatprep.subr.bf16.mxu0 0
        %1122 = vmatpush1.bf16.msra.mxu0 0
        %1123 = vmatprep.subr.bf16.mxu0 0
        %1124 = vmatpush1.bf16.msra.mxu0 0
        %1125 = vmatprep.subr.bf16.mxu0 0
        %1126 = vmatpush1.bf16.msra.mxu0 0
        %1127 = vmatprep.subr.bf16.mxu0 0
        %1128 = vmatpush1.bf16.msra.mxu0 0
        %1129 = vmatprep.subr.bf16.mxu0 0
        %1130 = vmatpush1.bf16.msra.mxu0 0
        %1131 = vmatprep.subr.bf16.mxu0 0
        %1132 = vmatpush1.bf16.msra.mxu0 0
        %1133 = vmatprep.subr.bf16.mxu0 0
        %1134 = vmatpush1.bf16.msra.mxu0 0
        %1135 = vmatprep.subr.bf16.mxu0 0
        %1136 = vmatpush1.bf16.msra.mxu0 0
        %1137 = vmatprep.subr.bf16.mxu0 0
        %1138 = vmatpush1.bf16.msra.mxu0 0
        %1139 = vmatprep.mubr.f32.mxu0 0.0
        %1140 = vmatmul.mubr.f32.gmra.mrb[0].mxu0 %v913
        %v1141 = vpop.f32.mrb[0].mxu0
        %v1142 = vadd.f32 %v594, %v1141
        %v1143 = vpop.f32.mrb[0].mxu0
        %1144 = vmatprep.mubr.f32.mxu0 0.0
        %1145 = vmatmul.mubr.f32.gmra.mrb[0].mxu0 %v916
        %v1146 = vpop.f32.mrb[0].mxu0
        %v1147 = vadd.f32 %v599, %v1146
        %v1148 = vpop.f32.mrb[0].mxu0
        %1149 = vmatprep.mubr.f32.mxu0 0.0
        %1150 = vmatmul.mubr.f32.gmra.mrb[0].mxu0 %v919
        %v1151 = vpop.f32.mrb[0].mxu0
        %v1152 = vadd.f32 %v604, %v1151
        %v1153 = vpop.f32.mrb[0].mxu0
        %1154 = vmatprep.mubr.f32.mxu0 0.0
        %1155 = vmatmul.mubr.f32.gmra.mrb[0].mxu0 %v922
        %v1156 = vpop.f32.mrb[0].mxu0
        %v1157 = vadd.f32 %v609, %v1156
        %v1158 = vpop.f32.mrb[0].mxu0
        %1159 = vmatprep.mubr.f32.mxu0 0.0
        %1160 = vmatmul.mubr.f32.gmra.mrb[0].mxu0 %v925
        %v1161 = vpop.f32.mrb[0].mxu0
        %v1162 = vadd.f32 %v614, %v1161
        %v1163 = vpop.f32.mrb[0].mxu0
        %1164 = vmatprep.mubr.f32.mxu0 0.0
        %1165 = vmatmul.mubr.f32.gmra.mrb[0].mxu0 %v928
        %v1166 = vpop.f32.mrb[0].mxu0
        %v1167 = vadd.f32 %v619, %v1166
        %v1168 = vpop.f32.mrb[0].mxu0
        %1169 = vmatprep.mubr.f32.mxu0 0.0
        %1170 = vmatmul.mubr.f32.gmra.mrb[0].mxu0 %v931
        %v1171 = vpop.f32.mrb[0].mxu0
        %v1172 = vadd.f32 %v624, %v1171
        %v1173 = vpop.f32.mrb[0].mxu0
        %1174 = vmatprep.mubr.f32.mxu0 0.0
        %1175 = vmatmul.mubr.f32.gmra.mrb[0].mxu0 %v934
        %v1176 = vpop.f32.mrb[0].mxu0
        %v1177 = vadd.f32 %v629, %v1176
        %v1178 = vpop.f32.mrb[0].mxu0
        %1179 = vmatprep.mubr.f32.mxu0 0.0
        %1180 = vmatmul.mubr.f32.gmra.mrb[0].mxu0 %v937
        %v1181 = vpop.f32.mrb[0].mxu0
        %v1182 = vadd.f32 %v634, %v1181
        %v1183 = vpop.f32.mrb[0].mxu0
        %1184 = vmatprep.mubr.f32.mxu0 0.0
        %1185 = vmatmul.mubr.f32.gmra.mrb[0].mxu0 %v940
        %v1186 = vpop.f32.mrb[0].mxu0
        %v1187 = vadd.f32 %v639, %v1186
        %v1188 = vpop.f32.mrb[0].mxu0
        %1189 = vmatprep.mubr.f32.mxu0 0.0
        %1190 = vmatmul.mubr.f32.gmra.mrb[0].mxu0 %v943
        %v1191 = vpop.f32.mrb[0].mxu0
        %v1192 = vadd.f32 %v644, %v1191
        %v1193 = vpop.f32.mrb[0].mxu0
        %1194 = vmatprep.mubr.f32.mxu0 0.0
        %1195 = vmatmul.mubr.f32.gmra.mrb[0].mxu0 %v946
        %v1196 = vpop.f32.mrb[0].mxu0
        %v1197 = vadd.f32 %v649, %v1196
        %v1198 = vpop.f32.mrb[0].mxu0
        %1199 = vmatprep.mubr.f32.mxu0 0.0
        %1200 = vmatmul.mubr.f32.gmra.mrb[0].mxu0 %v949
        %v1201 = vpop.f32.mrb[0].mxu0
        %v1202 = vadd.f32 %v654, %v1201
        %v1203 = vpop.f32.mrb[0].mxu0
        %1204 = vmatprep.mubr.f32.mxu0 0.0
        %1205 = vmatmul.mubr.f32.gmra.mrb[0].mxu0 %v952
        %v1206 = vpop.f32.mrb[0].mxu0
        %v1207 = vadd.f32 %v659, %v1206
        %v1208 = vpop.f32.mrb[0].mxu0
        %1209 = vmatprep.mubr.f32.mxu0 0.0
        %1210 = vmatmul.mubr.f32.gmra.mrb[0].mxu0 %v955
        %v1211 = vpop.f32.mrb[0].mxu0
        %v1212 = vadd.f32 %v664, %v1211
        %v1213 = vpop.f32.mrb[0].mxu0
        %1214 = vmatprep.mubr.f32.mxu0 0.0
        %1215 = vmatmul.mubr.f32.gmra.mrb[0].mxu0 %v958
        %v1216 = vpop.f32.mrb[0].mxu0
        %v1217 = vadd.f32 %v669, %v1216
        %v1218 = vpop.f32.mrb[0].mxu0
        %1219 = vmatprep.mubr.f32.mxu0 0.0
        %1220 = vmatmul.mubr.f32.gmra.mrb[0].mxu0 %v961
        %v1221 = vpop.f32.mrb[0].mxu0
        %v1222 = vadd.f32 %v674, %v1221
        %v1223 = vpop.f32.mrb[0].mxu0
        %1224 = vmatprep.mubr.f32.mxu0 0.0
        %1225 = vmatmul.mubr.f32.gmra.mrb[0].mxu0 %v964
        %v1226 = vpop.f32.mrb[0].mxu0
        %v1227 = vadd.f32 %v679, %v1226
        %v1228 = vpop.f32.mrb[0].mxu0
        %1229 = vmatprep.mubr.f32.mxu0 0.0
        %1230 = vmatmul.mubr.f32.gmra.mrb[0].mxu0 %v967
        %v1231 = vpop.f32.mrb[0].mxu0
        %v1232 = vadd.f32 %v684, %v1231
        %v1233 = vpop.f32.mrb[0].mxu0
        %1234 = vmatprep.mubr.f32.mxu0 0.0
        %1235 = vmatmul.mubr.f32.gmra.mrb[0].mxu0 %v970
        %v1236 = vpop.f32.mrb[0].mxu0
        %v1237 = vadd.f32 %v689, %v1236
        %v1238 = vpop.f32.mrb[0].mxu0
        %1239 = vmatprep.mubr.f32.mxu0 0.0
        %1240 = vmatmul.mubr.f32.gmra.mrb[0].mxu0 %v973
        %v1241 = vpop.f32.mrb[0].mxu0
        %v1242 = vadd.f32 %v694, %v1241
        %v1243 = vpop.f32.mrb[0].mxu0
        %1244 = vmatprep.mubr.f32.mxu0 0.0
        %1245 = vmatmul.mubr.f32.gmra.mrb[0].mxu0 %v976
        %v1246 = vpop.f32.mrb[0].mxu0
        %v1247 = vadd.f32 %v699, %v1246
        %v1248 = vpop.f32.mrb[0].mxu0
        %1249 = vmatprep.mubr.f32.mxu0 0.0
        %1250 = vmatmul.mubr.f32.gmra.mrb[0].mxu0 %v979
        %v1251 = vpop.f32.mrb[0].mxu0
        %v1252 = vadd.f32 %v704, %v1251
        %v1253 = vpop.f32.mrb[0].mxu0
        %1254 = vmatprep.mubr.f32.mxu0 0.0
        %1255 = vmatmul.mubr.f32.gmra.mrb[0].mxu0 %v982
        %v1256 = vpop.f32.mrb[0].mxu0
        %v1257 = vadd.f32 %v709, %v1256
        %v1258 = vpop.f32.mrb[0].mxu0
        %1259 = vmatprep.mubr.f32.mxu0 0.0
        %1260 = vmatmul.mubr.f32.gmra.mrb[0].mxu0 %v985
        %v1261 = vpop.f32.mrb[0].mxu0
        %v1262 = vadd.f32 %v714, %v1261
        %v1263 = vpop.f32.mrb[0].mxu0
        %1264 = vmatprep.mubr.f32.mxu0 0.0
        %1265 = vmatmul.mubr.f32.gmra.mrb[0].mxu0 %v988
        %v1266 = vpop.f32.mrb[0].mxu0
        %v1267 = vadd.f32 %v719, %v1266
        %v1268 = vpop.f32.mrb[0].mxu0
        %1269 = vmatprep.mubr.f32.mxu0 0.0
        %1270 = vmatmul.mubr.f32.gmra.mrb[0].mxu0 %v991
        %v1271 = vpop.f32.mrb[0].mxu0
        %v1272 = vadd.f32 %v724, %v1271
        %v1273 = vpop.f32.mrb[0].mxu0
        %1274 = vmatprep.mubr.f32.mxu0 0.0
        %1275 = vmatmul.mubr.f32.gmra.mrb[0].mxu0 %v994
        %v1276 = vpop.f32.mrb[0].mxu0
        %v1277 = vadd.f32 %v729, %v1276
        %v1278 = vpop.f32.mrb[0].mxu0
        %1279 = vmatprep.mubr.f32.mxu0 0.0
        %1280 = vmatmul.mubr.f32.gmra.mrb[0].mxu0 %v997
        %v1281 = vpop.f32.mrb[0].mxu0
        %v1282 = vadd.f32 %v734, %v1281
        %v1283 = vpop.f32.mrb[0].mxu0
        %1284 = vmatprep.mubr.f32.mxu0 0.0
        %1285 = vmatmul.mubr.f32.gmra.mrb[0].mxu0 %v1000
        %v1286 = vpop.f32.mrb[0].mxu0
        %v1287 = vadd.f32 %v739, %v1286
        %v1288 = vpop.f32.mrb[0].mxu0
        %1289 = vmatprep.mubr.f32.mxu0 0.0
        %1290 = vmatmul.mubr.f32.gmra.mrb[0].mxu0 %v1003
        %v1291 = vpop.f32.mrb[0].mxu0
        %v1292 = vadd.f32 %v744, %v1291
        %v1293 = vpop.f32.mrb[0].mxu0
        %1294 = vmatprep.mubr.f32.mxu0 0.0
        %1295 = vmatmul.mubr.f32.gmra.mrb[0].mxu0 %v1006
        %v1296 = vpop.f32.mrb[0].mxu0
        %v1297 = vadd.f32 %v749, %v1296
        %v1298 = vpop.f32.mrb[0].mxu0
        %1299 = vmatprep.mubr.f32.mxu0 0.0
        %1300 = vmatmul.mubr.f32.gmra.mrb[0].mxu0 %v1009
        %v1301 = vpop.f32.mrb[0].mxu0
        %v1302 = vadd.f32 %v754, %v1301
        %v1303 = vpop.f32.mrb[0].mxu0
        %1304 = vmatprep.mubr.f32.mxu0 0.0
        %1305 = vmatmul.mubr.f32.gmra.mrb[0].mxu0 %v1012
        %v1306 = vpop.f32.mrb[0].mxu0
        %v1307 = vadd.f32 %v759, %v1306
        %v1308 = vpop.f32.mrb[0].mxu0
        %1309 = vmatprep.mubr.f32.mxu0 0.0
        %1310 = vmatmul.mubr.f32.gmra.mrb[0].mxu0 %v1015
        %v1311 = vpop.f32.mrb[0].mxu0
        %v1312 = vadd.f32 %v764, %v1311
        %v1313 = vpop.f32.mrb[0].mxu0
        %1314 = vmatprep.mubr.f32.mxu0 0.0
        %1315 = vmatmul.mubr.f32.gmra.mrb[0].mxu0 %v1018
        %v1316 = vpop.f32.mrb[0].mxu0
        %v1317 = vadd.f32 %v769, %v1316
        %v1318 = vpop.f32.mrb[0].mxu0
        %1319 = vmatprep.mubr.f32.mxu0 0.0
        %1320 = vmatmul.mubr.f32.gmra.mrb[0].mxu0 %v1021
        %v1321 = vpop.f32.mrb[0].mxu0
        %v1322 = vadd.f32 %v774, %v1321
        %v1323 = vpop.f32.mrb[0].mxu0
        %1324 = vmatprep.mubr.f32.mxu0 0.0
        %1325 = vmatmul.mubr.f32.gmra.mrb[0].mxu0 %v1024
        %v1326 = vpop.f32.mrb[0].mxu0
        %v1327 = vadd.f32 %v779, %v1326
        %v1328 = vpop.f32.mrb[0].mxu0
        %1329 = vmatprep.mubr.f32.mxu0 0.0
        %1330 = vmatmul.mubr.f32.gmra.mrb[0].mxu0 %v1027
        %v1331 = vpop.f32.mrb[0].mxu0
        %v1332 = vadd.f32 %v784, %v1331
        %v1333 = vpop.f32.mrb[0].mxu0
        %1334 = vmatprep.mubr.f32.mxu0 0.0
        %1335 = vmatmul.mubr.f32.gmra.mrb[0].mxu0 %v1030
        %v1336 = vpop.f32.mrb[0].mxu0
        %v1337 = vadd.f32 %v789, %v1336
        %v1338 = vpop.f32.mrb[0].mxu0
        %1339 = vmatprep.mubr.f32.mxu0 0.0
        %1340 = vmatmul.mubr.f32.gmra.mrb[0].mxu0 %v1033
        %v1341 = vpop.f32.mrb[0].mxu0
        %v1342 = vadd.f32 %v794, %v1341
        %v1343 = vpop.f32.mrb[0].mxu0
        %1344 = vmatprep.mubr.f32.mxu0 0.0
        %1345 = vmatmul.mubr.f32.gmra.mrb[0].mxu0 %v1036
        %v1346 = vpop.f32.mrb[0].mxu0
        %v1347 = vadd.f32 %v799, %v1346
        %v1348 = vpop.f32.mrb[0].mxu0
        %1349 = vmatprep.mubr.f32.mxu0 0.0
        %1350 = vmatmul.mubr.f32.gmra.mrb[0].mxu0 %v1039
        %v1351 = vpop.f32.mrb[0].mxu0
        %v1352 = vadd.f32 %v804, %v1351
        %v1353 = vpop.f32.mrb[0].mxu0
        %1354 = vmatprep.mubr.f32.mxu0 0.0
        %1355 = vmatmul.mubr.f32.gmra.mrb[0].mxu0 %v1042
        %v1356 = vpop.f32.mrb[0].mxu0
        %v1357 = vadd.f32 %v809, %v1356
        %v1358 = vpop.f32.mrb[0].mxu0
        %1359 = vmatprep.mubr.f32.mxu0 0.0
        %1360 = vmatmul.mubr.f32.gmra.mrb[0].mxu0 %v1045
        %v1361 = vpop.f32.mrb[0].mxu0
        %v1362 = vadd.f32 %v814, %v1361
        %v1363 = vpop.f32.mrb[0].mxu0
        %1364 = vmatprep.mubr.f32.mxu0 0.0
        %1365 = vmatmul.mubr.f32.gmra.mrb[0].mxu0 %v1048
        %v1366 = vpop.f32.mrb[0].mxu0
        %v1367 = vadd.f32 %v819, %v1366
        %v1368 = vpop.f32.mrb[0].mxu0
        %1369 = vmatprep.mubr.f32.mxu0 0.0
        %1370 = vmatmul.mubr.f32.gmra.mrb[0].mxu0 %v1051
        %v1371 = vpop.f32.mrb[0].mxu0
        %v1372 = vadd.f32 %v824, %v1371
        %v1373 = vpop.f32.mrb[0].mxu0
        %1374 = vmatprep.mubr.f32.mxu0 0.0
        %1375 = vmatmul.mubr.f32.gmra.mrb[0].mxu0 %v1054
        %v1376 = vpop.f32.mrb[0].mxu0
        %v1377 = vadd.f32 %v829, %v1376
        %v1378 = vpop.f32.mrb[0].mxu0
        %1379 = vmatprep.mubr.f32.mxu0 0.0
        %1380 = vmatmul.mubr.f32.gmra.mrb[0].mxu0 %v1057
        %v1381 = vpop.f32.mrb[0].mxu0
        %v1382 = vadd.f32 %v834, %v1381
        %v1383 = vpop.f32.mrb[0].mxu0
        %1384 = vmatprep.mubr.f32.mxu0 0.0
        %1385 = vmatmul.mubr.f32.gmra.mrb[0].mxu0 %v1060
        %v1386 = vpop.f32.mrb[0].mxu0
        %v1387 = vadd.f32 %v839, %v1386
        %v1388 = vpop.f32.mrb[0].mxu0
        %1389 = vmatprep.mubr.f32.mxu0 0.0
        %1390 = vmatmul.mubr.f32.gmra.mrb[0].mxu0 %v1063
        %v1391 = vpop.f32.mrb[0].mxu0
        %v1392 = vadd.f32 %v844, %v1391
        %v1393 = vpop.f32.mrb[0].mxu0
        %1394 = vmatprep.mubr.f32.mxu0 0.0
        %1395 = vmatmul.mubr.f32.gmra.mrb[0].mxu0 %v1066
        %v1396 = vpop.f32.mrb[0].mxu0
        %v1397 = vadd.f32 %v849, %v1396
        %v1398 = vpop.f32.mrb[0].mxu0
        %1399 = vmatprep.mubr.f32.mxu0 0.0
        %1400 = vmatmul.mubr.f32.gmra.mrb[0].mxu0 %v1069
        %v1401 = vpop.f32.mrb[0].mxu0
        %v1402 = vadd.f32 %v854, %v1401
        %v1403 = vpop.f32.mrb[0].mxu0
        %1404 = vmatprep.mubr.f32.mxu0 0.0
        %1405 = vmatmul.mubr.f32.gmra.mrb[0].mxu0 %v1072
        %v1406 = vpop.f32.mrb[0].mxu0
        %v1407 = vadd.f32 %v859, %v1406
        %v1408 = vpop.f32.mrb[0].mxu0
        %1409 = vmatprep.mubr.f32.mxu0 0.0
        %1410 = vmatmul.mubr.f32.gmra.mrb[0].mxu0 %v1075
        %v1411 = vpop.f32.mrb[0].mxu0
        %v1412 = vadd.f32 %v864, %v1411
        %v1413 = vpop.f32.mrb[0].mxu0
        %1414 = vmatprep.mubr.f32.mxu0 0.0
        %1415 = vmatmul.mubr.f32.gmra.mrb[0].mxu0 %v1078
        %v1416 = vpop.f32.mrb[0].mxu0
        %v1417 = vadd.f32 %v869, %v1416
        %v1418 = vpop.f32.mrb[0].mxu0
        %1419 = vmatprep.mubr.f32.mxu0 0.0
        %1420 = vmatmul.mubr.f32.gmra.mrb[0].mxu0 %v1081
        %v1421 = vpop.f32.mrb[0].mxu0
        %v1422 = vadd.f32 %v874, %v1421
        %v1423 = vpop.f32.mrb[0].mxu0
        %1424 = vmatprep.mubr.f32.mxu0 0.0
        %1425 = vmatmul.mubr.f32.gmra.mrb[0].mxu0 %v1084
        %v1426 = vpop.f32.mrb[0].mxu0
        %v1427 = vadd.f32 %v879, %v1426
        %v1428 = vpop.f32.mrb[0].mxu0
        %1429 = vmatprep.mubr.f32.mxu0 0.0
        %1430 = vmatmul.mubr.f32.gmra.mrb[0].mxu0 %v1087
        %v1431 = vpop.f32.mrb[0].mxu0
        %v1432 = vadd.f32 %v884, %v1431
        %v1433 = vpop.f32.mrb[0].mxu0
        %1434 = vmatprep.mubr.f32.mxu0 0.0
        %1435 = vmatmul.mubr.f32.gmra.mrb[0].mxu0 %v1090
        %v1436 = vpop.f32.mrb[0].mxu0
        %v1437 = vadd.f32 %v889, %v1436
        %v1438 = vpop.f32.mrb[0].mxu0
        %1439 = vmatprep.mubr.f32.mxu0 0.0
        %1440 = vmatmul.mubr.f32.gmra.mrb[0].mxu0 %v1093
        %v1441 = vpop.f32.mrb[0].mxu0
        %v1442 = vadd.f32 %v894, %v1441
        %v1443 = vpop.f32.mrb[0].mxu0
        %1444 = vmatprep.mubr.f32.mxu0 0.0
        %1445 = vmatmul.mubr.f32.gmra.mrb[0].mxu0 %v1096
        %v1446 = vpop.f32.mrb[0].mxu0
        %v1447 = vadd.f32 %v899, %v1446
        %v1448 = vpop.f32.mrb[0].mxu0
        %1449 = vmatprep.mubr.f32.mxu0 0.0
        %1450 = vmatmul.mubr.f32.gmra.mrb[0].mxu0 %v1099
        %v1451 = vpop.f32.mrb[0].mxu0
        %v1452 = vadd.f32 %v904, %v1451
        %v1453 = vpop.f32.mrb[0].mxu0
        %1454 = vmatprep.mubr.f32.mxu0 0.0
        %1455 = vmatmul.mubr.f32.gmra.mrb[0].mxu0 %v1102
        %v1456 = vpop.f32.mrb[0].mxu0
        %v1457 = vadd.f32 %v909, %v1456
        %v1458 = vpop.f32.mrb[0].mxu0
        %1459 = vdwg.mxu0
        %v1460 = vld [vmem:[%s227 + $0x2] sm:$0xff]
        %v1461 = vld [vmem:[%s227 + $0xa] sm:$0xff]
        %v1462 = vld [vmem:[%s227 + $0x12] sm:$0xff]
        %v1463 = vld [vmem:[%s227 + $0x1a] sm:$0xff]
        %v1464 = vld [vmem:[%s227 + $0x22] sm:$0xff]
        %v1465 = vld [vmem:[%s227 + $0x2a] sm:$0xff]
        %v1466 = vld [vmem:[%s227 + $0x32] sm:$0xff]
        %v1467 = vld [vmem:[%s227 + $0x3a] sm:$0xff]
        %v1468 = vld [vmem:[%s227 + $0x4a] sm:$0xff]
        %v1469 = vld [vmem:[%s227 + $0x52] sm:$0xff]
        %v1470 = vld [vmem:[%s227 + $0x5a] sm:$0xff]
        %v1471 = vld [vmem:[%s227 + $0x62] sm:$0xff]
        %v1472 = vld [vmem:[%s227 + $0x6a] sm:$0xff]
        %v1473 = vld [vmem:[%s227 + $0x72] sm:$0xff]
        %v1474 = vld [vmem:[%s227 + $0x7a] sm:$0xff]
        %v1475 = vld [vmem:[%s227 + $0x82] sm:$0xff]
        %v1476 = vld [vmem:[%s227 + $0x92] sm:$0xff]
        %v1477 = vld [vmem:[%s227 + $0x9a] sm:$0xff]
        %v1478 = vld [vmem:[%s227 + $0xa2] sm:$0xff]
        %v1479 = vld [vmem:[%s227 + $0xaa] sm:$0xff]
        %v1480 = vld [vmem:[%s227 + $0xb2] sm:$0xff]
        %v1481 = vld [vmem:[%s227 + $0xba] sm:$0xff]
        %v1482 = vld [vmem:[%s227 + $0xc2] sm:$0xff]
        %v1483 = vld [vmem:[%s227 + $0xca] sm:$0xff]
        %v1484 = vld [vmem:[%s227 + $0xda] sm:$0xff]
        %v1485 = vld [vmem:[%s227 + $0xe2] sm:$0xff]
        %v1486 = vld [vmem:[%s227 + $0xea] sm:$0xff]
        %v1487 = vld [vmem:[%s227 + $0xf2] sm:$0xff]
        %v1488 = vld [vmem:[%s227 + $0xfa] sm:$0xff]
        %v1489 = vld [vmem:[%s227 + $0x102] sm:$0xff]
        %v1490 = vld [vmem:[%s227 + $0x10a] sm:$0xff]
        %v1491 = vld [vmem:[%s227 + $0x112] sm:$0xff]
        %v1492 = vld [vmem:[%s227 + $0x122] sm:$0xff]
        %v1493 = vld [vmem:[%s227 + $0x12a] sm:$0xff]
        %v1494 = vld [vmem:[%s227 + $0x132] sm:$0xff]
        %v1495 = vld [vmem:[%s227 + $0x13a] sm:$0xff]
        %v1496 = vld [vmem:[%s227 + $0x142] sm:$0xff]
        %v1497 = vld [vmem:[%s227 + $0x14a] sm:$0xff]
        %v1498 = vld [vmem:[%s227 + $0x152] sm:$0xff]
        %v1499 = vld [vmem:[%s227 + $0x15a] sm:$0xff]
        %v1500 = vld [vmem:[%s227 + $0x16a] sm:$0xff]
        %v1501 = vld [vmem:[%s227 + $0x172] sm:$0xff]
        %v1502 = vld [vmem:[%s227 + $0x17a] sm:$0xff]
        %v1503 = vld [vmem:[%s227 + $0x182] sm:$0xff]
        %v1504 = vld [vmem:[%s227 + $0x18a] sm:$0xff]
        %v1505 = vld [vmem:[%s227 + $0x192] sm:$0xff]
        %v1506 = vld [vmem:[%s227 + $0x19a] sm:$0xff]
        %v1507 = vld [vmem:[%s227 + $0x1a2] sm:$0xff]
        %v1508 = vld [vmem:[%s227 + $0x1b2] sm:$0xff]
        %v1509 = vld [vmem:[%s227 + $0x1ba] sm:$0xff]
        %v1510 = vld [vmem:[%s227 + $0x1c2] sm:$0xff]
        %v1511 = vld [vmem:[%s227 + $0x1ca] sm:$0xff]
        %v1512 = vld [vmem:[%s227 + $0x1d2] sm:$0xff]
        %v1513 = vld [vmem:[%s227 + $0x1da] sm:$0xff]
        %v1514 = vld [vmem:[%s227 + $0x1e2] sm:$0xff]
        %v1515 = vld [vmem:[%s227 + $0x1ea] sm:$0xff]
        %v1516 = vld [vmem:[%s227 + $0x1fa] sm:$0xff]
        %v1517 = vld [vmem:[%s227 + $0x202] sm:$0xff]
        %v1518 = vld [vmem:[%s227 + $0x20a] sm:$0xff]
        %v1519 = vld [vmem:[%s227 + $0x212] sm:$0xff]
        %v1520 = vld [vmem:[%s227 + $0x21a] sm:$0xff]
        %v1521 = vld [vmem:[%s227 + $0x222] sm:$0xff]
        %v1522 = vld [vmem:[%s227 + $0x22a] sm:$0xff]
        %v1523 = vld [vmem:[%s227 + $0x232] sm:$0xff]
        %s1524 = scalar_lea.vmem %s219, 4
        %v1525 = vld [vmem:[%s1524] sm:$0x3]
        %v1527 = vsel %vm359, %v1460, 0
        %v1530 = vsel %vm359, %v1461, 0
        %v1533 = vsel %vm359, %v1462, 0
        %v1536 = vsel %vm359, %v1463, 0
        %v1539 = vsel %vm359, %v1464, 0
        %v1542 = vsel %vm359, %v1465, 0
        %v1545 = vsel %vm359, %v1466, 0
        %v1548 = vsel %vm359, %v1467, 0
        %v1551 = vsel %vm359, %v1468, 0
        %v1554 = vsel %vm359, %v1469, 0
        %v1557 = vsel %vm359, %v1470, 0
        %v1560 = vsel %vm359, %v1471, 0
        %v1563 = vsel %vm359, %v1472, 0
        %v1566 = vsel %vm359, %v1473, 0
        %v1569 = vsel %vm359, %v1474, 0
        %v1572 = vsel %vm359, %v1475, 0
        %v1575 = vsel %vm359, %v1476, 0
        %v1578 = vsel %vm359, %v1477, 0
        %v1581 = vsel %vm359, %v1478, 0
        %v1584 = vsel %vm359, %v1479, 0
        %v1587 = vsel %vm359, %v1480, 0
        %v1590 = vsel %vm359, %v1481, 0
        %v1593 = vsel %vm359, %v1482, 0
        %v1596 = vsel %vm359, %v1483, 0
        %v1599 = vsel %vm359, %v1484, 0
        %v1602 = vsel %vm359, %v1485, 0
        %v1605 = vsel %vm359, %v1486, 0
        %v1608 = vsel %vm359, %v1487, 0
        %v1611 = vsel %vm359, %v1488, 0
        %v1614 = vsel %vm359, %v1489, 0
        %v1617 = vsel %vm359, %v1490, 0
        %v1620 = vsel %vm359, %v1491, 0
        %v1623 = vsel %vm359, %v1492, 0
        %v1626 = vsel %vm359, %v1493, 0
        %v1629 = vsel %vm359, %v1494, 0
        %v1632 = vsel %vm359, %v1495, 0
        %v1635 = vsel %vm359, %v1496, 0
        %v1638 = vsel %vm359, %v1497, 0
        %v1641 = vsel %vm359, %v1498, 0
        %v1644 = vsel %vm359, %v1499, 0
        %v1647 = vsel %vm359, %v1500, 0
        %v1650 = vsel %vm359, %v1501, 0
        %v1653 = vsel %vm359, %v1502, 0
        %v1656 = vsel %vm359, %v1503, 0
        %v1659 = vsel %vm359, %v1504, 0
        %v1662 = vsel %vm359, %v1505, 0
        %v1665 = vsel %vm359, %v1506, 0
        %v1668 = vsel %vm359, %v1507, 0
        %v1671 = vsel %vm359, %v1508, 0
        %v1674 = vsel %vm359, %v1509, 0
        %v1677 = vsel %vm359, %v1510, 0
        %v1680 = vsel %vm359, %v1511, 0
        %v1683 = vsel %vm359, %v1512, 0
        %v1686 = vsel %vm359, %v1513, 0
        %v1689 = vsel %vm359, %v1514, 0
        %v1692 = vsel %vm359, %v1515, 0
        %v1695 = vsel %vm359, %v1516, 0
        %v1698 = vsel %vm359, %v1517, 0
        %v1701 = vsel %vm359, %v1518, 0
        %v1704 = vsel %vm359, %v1519, 0
        %v1707 = vsel %vm359, %v1520, 0
        %v1710 = vsel %vm359, %v1521, 0
        %v1713 = vsel %vm359, %v1522, 0
        %v1716 = vsel %vm359, %v1523, 0
        %v1719 = vand.u32 %v1525, %v555
        %1721 = vmatprep.subr.bf16.mxu0 0
        %1722 = vmatpush1.bf16.msra.mxu0 %v1719
        %1723 = vmatprep.subr.bf16.mxu0 0
        %1724 = vmatpush1.bf16.msra.mxu0 0
        %1725 = vmatprep.subr.bf16.mxu0 0
        %1726 = vmatpush1.bf16.msra.mxu0 0
        %1727 = vmatprep.subr.bf16.mxu0 0
        %1728 = vmatpush1.bf16.msra.mxu0 0
        %1729 = vmatprep.subr.bf16.mxu0 0
        %1730 = vmatpush1.bf16.msra.mxu0 0
        %1731 = vmatprep.subr.bf16.mxu0 0
        %1732 = vmatpush1.bf16.msra.mxu0 0
        %1733 = vmatprep.subr.bf16.mxu0 0
        %1734 = vmatpush1.bf16.msra.mxu0 0
        %1735 = vmatprep.subr.bf16.mxu0 0
        %1736 = vmatpush1.bf16.msra.mxu0 0
        %1737 = vmatprep.subr.bf16.mxu0 0
        %1738 = vmatpush1.bf16.msra.mxu0 0
        %1739 = vmatprep.subr.bf16.mxu0 0
        %1740 = vmatpush1.bf16.msra.mxu0 0
        %1741 = vmatprep.subr.bf16.mxu0 0
        %1742 = vmatpush1.bf16.msra.mxu0 0
        %1743 = vmatprep.subr.bf16.mxu0 0
        %1744 = vmatpush1.bf16.msra.mxu0 0
        %1745 = vmatprep.subr.bf16.mxu0 0
        %1746 = vmatpush1.bf16.msra.mxu0 0
        %1747 = vmatprep.subr.bf16.mxu0 0
        %1748 = vmatpush1.bf16.msra.mxu0 0
        %1749 = vmatprep.subr.bf16.mxu0 0
        %1750 = vmatpush1.bf16.msra.mxu0 0
        %1751 = vmatprep.subr.bf16.mxu0 0
        %1752 = vmatpush1.bf16.msra.mxu0 0
        %1753 = vmatprep.mubr.f32.mxu0 0.0
        %1754 = vmatmul.mubr.f32.gmra.mrb[0].mxu0 %v1527
        %v1755 = vpop.f32.mrb[0].mxu0
        %v1756 = vadd.f32 0.0, %v1755
        %v1757 = vpop.f32.mrb[0].mxu0
        %1758 = vmatprep.mubr.f32.mxu0 0.0
        %1759 = vmatmul.mubr.f32.gmra.mrb[0].mxu0 %v1530
        %v1760 = vpop.f32.mrb[0].mxu0
        %v1761 = vadd.f32 0.0, %v1760
        %v1762 = vpop.f32.mrb[0].mxu0
        %1763 = vmatprep.mubr.f32.mxu0 0.0
        %1764 = vmatmul.mubr.f32.gmra.mrb[0].mxu0 %v1533
        %v1765 = vpop.f32.mrb[0].mxu0
        %v1766 = vadd.f32 0.0, %v1765
        %v1767 = vpop.f32.mrb[0].mxu0
        %1768 = vmatprep.mubr.f32.mxu0 0.0
        %1769 = vmatmul.mubr.f32.gmra.mrb[0].mxu0 %v1536
        %v1770 = vpop.f32.mrb[0].mxu0
        %v1771 = vadd.f32 0.0, %v1770
        %v1772 = vpop.f32.mrb[0].mxu0
        %1773 = vmatprep.mubr.f32.mxu0 0.0
        %1774 = vmatmul.mubr.f32.gmra.mrb[0].mxu0 %v1539
        %v1775 = vpop.f32.mrb[0].mxu0
        %v1776 = vadd.f32 0.0, %v1775
        %v1777 = vpop.f32.mrb[0].mxu0
        %1778 = vmatprep.mubr.f32.mxu0 0.0
        %1779 = vmatmul.mubr.f32.gmra.mrb[0].mxu0 %v1542
        %v1780 = vpop.f32.mrb[0].mxu0
        %v1781 = vadd.f32 0.0, %v1780
        %v1782 = vpop.f32.mrb[0].mxu0
        %1783 = vmatprep.mubr.f32.mxu0 0.0
        %1784 = vmatmul.mubr.f32.gmra.mrb[0].mxu0 %v1545
        %v1785 = vpop.f32.mrb[0].mxu0
        %v1786 = vadd.f32 0.0, %v1785
        %v1787 = vpop.f32.mrb[0].mxu0
        %1788 = vmatprep.mubr.f32.mxu0 0.0
        %1789 = vmatmul.mubr.f32.gmra.mrb[0].mxu0 %v1548
        %v1790 = vpop.f32.mrb[0].mxu0
        %v1791 = vadd.f32 0.0, %v1790
        %v1792 = vpop.f32.mrb[0].mxu0
        %1793 = vmatprep.mubr.f32.mxu0 0.0
        %1794 = vmatmul.mubr.f32.gmra.mrb[0].mxu0 %v1551
        %v1795 = vpop.f32.mrb[0].mxu0
        %v1796 = vadd.f32 0.0, %v1795
        %v1797 = vpop.f32.mrb[0].mxu0
        %1798 = vmatprep.mubr.f32.mxu0 0.0
        %1799 = vmatmul.mubr.f32.gmra.mrb[0].mxu0 %v1554
        %v1800 = vpop.f32.mrb[0].mxu0
        %v1801 = vadd.f32 0.0, %v1800
        %v1802 = vpop.f32.mrb[0].mxu0
        %1803 = vmatprep.mubr.f32.mxu0 0.0
        %1804 = vmatmul.mubr.f32.gmra.mrb[0].mxu0 %v1557
        %v1805 = vpop.f32.mrb[0].mxu0
        %v1806 = vadd.f32 0.0, %v1805
        %v1807 = vpop.f32.mrb[0].mxu0
        %1808 = vmatprep.mubr.f32.mxu0 0.0
        %1809 = vmatmul.mubr.f32.gmra.mrb[0].mxu0 %v1560
        %v1810 = vpop.f32.mrb[0].mxu0
        %v1811 = vadd.f32 0.0, %v1810
        %v1812 = vpop.f32.mrb[0].mxu0
        %1813 = vmatprep.mubr.f32.mxu0 0.0
        %1814 = vmatmul.mubr.f32.gmra.mrb[0].mxu0 %v1563
        %v1815 = vpop.f32.mrb[0].mxu0
        %v1816 = vadd.f32 0.0, %v1815
        %v1817 = vpop.f32.mrb[0].mxu0
        %1818 = vmatprep.mubr.f32.mxu0 0.0
        %1819 = vmatmul.mubr.f32.gmra.mrb[0].mxu0 %v1566
        %v1820 = vpop.f32.mrb[0].mxu0
        %v1821 = vadd.f32 0.0, %v1820
        %v1822 = vpop.f32.mrb[0].mxu0
        %1823 = vmatprep.mubr.f32.mxu0 0.0
        %1824 = vmatmul.mubr.f32.gmra.mrb[0].mxu0 %v1569
        %v1825 = vpop.f32.mrb[0].mxu0
        %v1826 = vadd.f32 0.0, %v1825
        %v1827 = vpop.f32.mrb[0].mxu0
        %1828 = vmatprep.mubr.f32.mxu0 0.0
        %1829 = vmatmul.mubr.f32.gmra.mrb[0].mxu0 %v1572
        %v1830 = vpop.f32.mrb[0].mxu0
        %v1831 = vadd.f32 0.0, %v1830
        %v1832 = vpop.f32.mrb[0].mxu0
        %1833 = vmatprep.mubr.f32.mxu0 0.0
        %1834 = vmatmul.mubr.f32.gmra.mrb[0].mxu0 %v1575
        %v1835 = vpop.f32.mrb[0].mxu0
        %v1836 = vadd.f32 0.0, %v1835
        %v1837 = vpop.f32.mrb[0].mxu0
        %1838 = vmatprep.mubr.f32.mxu0 0.0
        %1839 = vmatmul.mubr.f32.gmra.mrb[0].mxu0 %v1578
        %v1840 = vpop.f32.mrb[0].mxu0
        %v1841 = vadd.f32 0.0, %v1840
        %v1842 = vpop.f32.mrb[0].mxu0
        %1843 = vmatprep.mubr.f32.mxu0 0.0
        %1844 = vmatmul.mubr.f32.gmra.mrb[0].mxu0 %v1581
        %v1845 = vpop.f32.mrb[0].mxu0
        %v1846 = vadd.f32 0.0, %v1845
        %v1847 = vpop.f32.mrb[0].mxu0
        %1848 = vmatprep.mubr.f32.mxu0 0.0
        %1849 = vmatmul.mubr.f32.gmra.mrb[0].mxu0 %v1584
        %v1850 = vpop.f32.mrb[0].mxu0
        %v1851 = vadd.f32 0.0, %v1850
        %v1852 = vpop.f32.mrb[0].mxu0
        %1853 = vmatprep.mubr.f32.mxu0 0.0
        %1854 = vmatmul.mubr.f32.gmra.mrb[0].mxu0 %v1587
        %v1855 = vpop.f32.mrb[0].mxu0
        %v1856 = vadd.f32 0.0, %v1855
        %v1857 = vpop.f32.mrb[0].mxu0
        %1858 = vmatprep.mubr.f32.mxu0 0.0
        %1859 = vmatmul.mubr.f32.gmra.mrb[0].mxu0 %v1590
        %v1860 = vpop.f32.mrb[0].mxu0
        %v1861 = vadd.f32 0.0, %v1860
        %v1862 = vpop.f32.mrb[0].mxu0
        %1863 = vmatprep.mubr.f32.mxu0 0.0
        %1864 = vmatmul.mubr.f32.gmra.mrb[0].mxu0 %v1593
        %v1865 = vpop.f32.mrb[0].mxu0
        %v1866 = vadd.f32 0.0, %v1865
        %v1867 = vpop.f32.mrb[0].mxu0
        %1868 = vmatprep.mubr.f32.mxu0 0.0
        %1869 = vmatmul.mubr.f32.gmra.mrb[0].mxu0 %v1596
        %v1870 = vpop.f32.mrb[0].mxu0
        %v1871 = vadd.f32 0.0, %v1870
        %v1872 = vpop.f32.mrb[0].mxu0
        %1873 = vmatprep.mubr.f32.mxu0 0.0
        %1874 = vmatmul.mubr.f32.gmra.mrb[0].mxu0 %v1599
        %v1875 = vpop.f32.mrb[0].mxu0
        %v1876 = vadd.f32 0.0, %v1875
        %v1877 = vpop.f32.mrb[0].mxu0
        %1878 = vmatprep.mubr.f32.mxu0 0.0
        %1879 = vmatmul.mubr.f32.gmra.mrb[0].mxu0 %v1602
        %v1880 = vpop.f32.mrb[0].mxu0
        %v1881 = vadd.f32 0.0, %v1880
        %v1882 = vpop.f32.mrb[0].mxu0
        %1883 = vmatprep.mubr.f32.mxu0 0.0
        %1884 = vmatmul.mubr.f32.gmra.mrb[0].mxu0 %v1605
        %v1885 = vpop.f32.mrb[0].mxu0
        %v1886 = vadd.f32 0.0, %v1885
        %v1887 = vpop.f32.mrb[0].mxu0
        %1888 = vmatprep.mubr.f32.mxu0 0.0
        %1889 = vmatmul.mubr.f32.gmra.mrb[0].mxu0 %v1608
        %v1890 = vpop.f32.mrb[0].mxu0
        %v1891 = vadd.f32 0.0, %v1890
        %v1892 = vpop.f32.mrb[0].mxu0
        %1893 = vmatprep.mubr.f32.mxu0 0.0
        %1894 = vmatmul.mubr.f32.gmra.mrb[0].mxu0 %v1611
        %v1895 = vpop.f32.mrb[0].mxu0
        %v1896 = vadd.f32 0.0, %v1895
        %v1897 = vpop.f32.mrb[0].mxu0
        %1898 = vmatprep.mubr.f32.mxu0 0.0
        %1899 = vmatmul.mubr.f32.gmra.mrb[0].mxu0 %v1614
        %v1900 = vpop.f32.mrb[0].mxu0
        %v1901 = vadd.f32 0.0, %v1900
        %v1902 = vpop.f32.mrb[0].mxu0
        %1903 = vmatprep.mubr.f32.mxu0 0.0
        %1904 = vmatmul.mubr.f32.gmra.mrb[0].mxu0 %v1617
        %v1905 = vpop.f32.mrb[0].mxu0
        %v1906 = vadd.f32 0.0, %v1905
        %v1907 = vpop.f32.mrb[0].mxu0
        %1908 = vmatprep.mubr.f32.mxu0 0.0
        %1909 = vmatmul.mubr.f32.gmra.mrb[0].mxu0 %v1620
        %v1910 = vpop.f32.mrb[0].mxu0
        %v1911 = vadd.f32 0.0, %v1910
        %v1912 = vpop.f32.mrb[0].mxu0
        %1913 = vmatprep.mubr.f32.mxu0 0.0
        %1914 = vmatmul.mubr.f32.gmra.mrb[0].mxu0 %v1623
        %v1915 = vpop.f32.mrb[0].mxu0
        %v1916 = vadd.f32 0.0, %v1915
        %v1917 = vpop.f32.mrb[0].mxu0
        %1918 = vmatprep.mubr.f32.mxu0 0.0
        %1919 = vmatmul.mubr.f32.gmra.mrb[0].mxu0 %v1626
        %v1920 = vpop.f32.mrb[0].mxu0
        %v1921 = vadd.f32 0.0, %v1920
        %v1922 = vpop.f32.mrb[0].mxu0
        %1923 = vmatprep.mubr.f32.mxu0 0.0
        %1924 = vmatmul.mubr.f32.gmra.mrb[0].mxu0 %v1629
        %v1925 = vpop.f32.mrb[0].mxu0
        %v1926 = vadd.f32 0.0, %v1925
        %v1927 = vpop.f32.mrb[0].mxu0
        %1928 = vmatprep.mubr.f32.mxu0 0.0
        %1929 = vmatmul.mubr.f32.gmra.mrb[0].mxu0 %v1632
        %v1930 = vpop.f32.mrb[0].mxu0
        %v1931 = vadd.f32 0.0, %v1930
        %v1932 = vpop.f32.mrb[0].mxu0
        %1933 = vmatprep.mubr.f32.mxu0 0.0
        %1934 = vmatmul.mubr.f32.gmra.mrb[0].mxu0 %v1635
        %v1935 = vpop.f32.mrb[0].mxu0
        %v1936 = vadd.f32 0.0, %v1935
        %v1937 = vpop.f32.mrb[0].mxu0
        %1938 = vmatprep.mubr.f32.mxu0 0.0
        %1939 = vmatmul.mubr.f32.gmra.mrb[0].mxu0 %v1638
        %v1940 = vpop.f32.mrb[0].mxu0
        %v1941 = vadd.f32 0.0, %v1940
        %v1942 = vpop.f32.mrb[0].mxu0
        %1943 = vmatprep.mubr.f32.mxu0 0.0
        %1944 = vmatmul.mubr.f32.gmra.mrb[0].mxu0 %v1641
        %v1945 = vpop.f32.mrb[0].mxu0
        %v1946 = vadd.f32 0.0, %v1945
        %v1947 = vpop.f32.mrb[0].mxu0
        %1948 = vmatprep.mubr.f32.mxu0 0.0
        %1949 = vmatmul.mubr.f32.gmra.mrb[0].mxu0 %v1644
        %v1950 = vpop.f32.mrb[0].mxu0
        %v1951 = vadd.f32 0.0, %v1950
        %v1952 = vpop.f32.mrb[0].mxu0
        %1953 = vmatprep.mubr.f32.mxu0 0.0
        %1954 = vmatmul.mubr.f32.gmra.mrb[0].mxu0 %v1647
        %v1955 = vpop.f32.mrb[0].mxu0
        %v1956 = vadd.f32 0.0, %v1955
        %v1957 = vpop.f32.mrb[0].mxu0
        %1958 = vmatprep.mubr.f32.mxu0 0.0
        %1959 = vmatmul.mubr.f32.gmra.mrb[0].mxu0 %v1650
        %v1960 = vpop.f32.mrb[0].mxu0
        %v1961 = vadd.f32 0.0, %v1960
        %v1962 = vpop.f32.mrb[0].mxu0
        %1963 = vmatprep.mubr.f32.mxu0 0.0
        %1964 = vmatmul.mubr.f32.gmra.mrb[0].mxu0 %v1653
        %v1965 = vpop.f32.mrb[0].mxu0
        %v1966 = vadd.f32 0.0, %v1965
        %v1967 = vpop.f32.mrb[0].mxu0
        %1968 = vmatprep.mubr.f32.mxu0 0.0
        %1969 = vmatmul.mubr.f32.gmra.mrb[0].mxu0 %v1656
        %v1970 = vpop.f32.mrb[0].mxu0
        %v1971 = vadd.f32 0.0, %v1970
        %v1972 = vpop.f32.mrb[0].mxu0
        %1973 = vmatprep.mubr.f32.mxu0 0.0
        %1974 = vmatmul.mubr.f32.gmra.mrb[0].mxu0 %v1659
        %v1975 = vpop.f32.mrb[0].mxu0
        %v1976 = vadd.f32 0.0, %v1975
        %v1977 = vpop.f32.mrb[0].mxu0
        %1978 = vmatprep.mubr.f32.mxu0 0.0
        %1979 = vmatmul.mubr.f32.gmra.mrb[0].mxu0 %v1662
        %v1980 = vpop.f32.mrb[0].mxu0
        %v1981 = vadd.f32 0.0, %v1980
        %v1982 = vpop.f32.mrb[0].mxu0
        %1983 = vmatprep.mubr.f32.mxu0 0.0
        %1984 = vmatmul.mubr.f32.gmra.mrb[0].mxu0 %v1665
        %v1985 = vpop.f32.mrb[0].mxu0
        %v1986 = vadd.f32 0.0, %v1985
        %v1987 = vpop.f32.mrb[0].mxu0
        %1988 = vmatprep.mubr.f32.mxu0 0.0
        %1989 = vmatmul.mubr.f32.gmra.mrb[0].mxu0 %v1668
        %v1990 = vpop.f32.mrb[0].mxu0
        %v1991 = vadd.f32 0.0, %v1990
        %v1992 = vpop.f32.mrb[0].mxu0
        %1993 = vmatprep.mubr.f32.mxu0 0.0
        %1994 = vmatmul.mubr.f32.gmra.mrb[0].mxu0 %v1671
        %v1995 = vpop.f32.mrb[0].mxu0
        %v1996 = vadd.f32 0.0, %v1995
        %v1997 = vpop.f32.mrb[0].mxu0
        %1998 = vmatprep.mubr.f32.mxu0 0.0
        %1999 = vmatmul.mubr.f32.gmra.mrb[0].mxu0 %v1674
        %v2000 = vpop.f32.mrb[0].mxu0
        %v2001 = vadd.f32 0.0, %v2000
        %v2002 = vpop.f32.mrb[0].mxu0
        %2003 = vmatprep.mubr.f32.mxu0 0.0
        %2004 = vmatmul.mubr.f32.gmra.mrb[0].mxu0 %v1677
        %v2005 = vpop.f32.mrb[0].mxu0
        %v2006 = vadd.f32 0.0, %v2005
        %v2007 = vpop.f32.mrb[0].mxu0
        %2008 = vmatprep.mubr.f32.mxu0 0.0
        %2009 = vmatmul.mubr.f32.gmra.mrb[0].mxu0 %v1680
        %v2010 = vpop.f32.mrb[0].mxu0
        %v2011 = vadd.f32 0.0, %v2010
        %v2012 = vpop.f32.mrb[0].mxu0
        %2013 = vmatprep.mubr.f32.mxu0 0.0
        %2014 = vmatmul.mubr.f32.gmra.mrb[0].mxu0 %v1683
        %v2015 = vpop.f32.mrb[0].mxu0
        %v2016 = vadd.f32 0.0, %v2015
        %v2017 = vpop.f32.mrb[0].mxu0
        %2018 = vmatprep.mubr.f32.mxu0 0.0
        %2019 = vmatmul.mubr.f32.gmra.mrb[0].mxu0 %v1686
        %v2020 = vpop.f32.mrb[0].mxu0
        %v2021 = vadd.f32 0.0, %v2020
        %v2022 = vpop.f32.mrb[0].mxu0
        %2023 = vmatprep.mubr.f32.mxu0 0.0
        %2024 = vmatmul.mubr.f32.gmra.mrb[0].mxu0 %v1689
        %v2025 = vpop.f32.mrb[0].mxu0
        %v2026 = vadd.f32 0.0, %v2025
        %v2027 = vpop.f32.mrb[0].mxu0
        %2028 = vmatprep.mubr.f32.mxu0 0.0
        %2029 = vmatmul.mubr.f32.gmra.mrb[0].mxu0 %v1692
        %v2030 = vpop.f32.mrb[0].mxu0
        %v2031 = vadd.f32 0.0, %v2030
        %v2032 = vpop.f32.mrb[0].mxu0
        %2033 = vmatprep.mubr.f32.mxu0 0.0
        %2034 = vmatmul.mubr.f32.gmra.mrb[0].mxu0 %v1695
        %v2035 = vpop.f32.mrb[0].mxu0
        %v2036 = vadd.f32 0.0, %v2035
        %v2037 = vpop.f32.mrb[0].mxu0
        %2038 = vmatprep.mubr.f32.mxu0 0.0
        %2039 = vmatmul.mubr.f32.gmra.mrb[0].mxu0 %v1698
        %v2040 = vpop.f32.mrb[0].mxu0
        %v2041 = vadd.f32 0.0, %v2040
        %v2042 = vpop.f32.mrb[0].mxu0
        %2043 = vmatprep.mubr.f32.mxu0 0.0
        %2044 = vmatmul.mubr.f32.gmra.mrb[0].mxu0 %v1701
        %v2045 = vpop.f32.mrb[0].mxu0
        %v2046 = vadd.f32 0.0, %v2045
        %v2047 = vpop.f32.mrb[0].mxu0
        %2048 = vmatprep.mubr.f32.mxu0 0.0
        %2049 = vmatmul.mubr.f32.gmra.mrb[0].mxu0 %v1704
        %v2050 = vpop.f32.mrb[0].mxu0
        %v2051 = vadd.f32 0.0, %v2050
        %v2052 = vpop.f32.mrb[0].mxu0
        %2053 = vmatprep.mubr.f32.mxu0 0.0
        %2054 = vmatmul.mubr.f32.gmra.mrb[0].mxu0 %v1707
        %v2055 = vpop.f32.mrb[0].mxu0
        %v2056 = vadd.f32 0.0, %v2055
        %v2057 = vpop.f32.mrb[0].mxu0
        %2058 = vmatprep.mubr.f32.mxu0 0.0
        %2059 = vmatmul.mubr.f32.gmra.mrb[0].mxu0 %v1710
        %v2060 = vpop.f32.mrb[0].mxu0
        %v2061 = vadd.f32 0.0, %v2060
        %v2062 = vpop.f32.mrb[0].mxu0
        %2063 = vmatprep.mubr.f32.mxu0 0.0
        %2064 = vmatmul.mubr.f32.gmra.mrb[0].mxu0 %v1713
        %v2065 = vpop.f32.mrb[0].mxu0
        %v2066 = vadd.f32 0.0, %v2065
        %v2067 = vpop.f32.mrb[0].mxu0
        %2068 = vmatprep.mubr.f32.mxu0 0.0
        %2069 = vmatmul.mubr.f32.gmra.mrb[0].mxu0 %v1716
        %v2070 = vpop.f32.mrb[0].mxu0
        %v2071 = vadd.f32 0.0, %v2070
        %v2072 = vpop.f32.mrb[0].mxu0
        %2073 = vdwg.mxu0
        %v2074 = vadd.f32 %v1142, %v1756
        %v2075 = vadd.f32 %v1147, %v1761
        %v2076 = vadd.f32 %v1152, %v1766
        %v2077 = vadd.f32 %v1157, %v1771
        %v2078 = vadd.f32 %v1162, %v1776
        %v2079 = vadd.f32 %v1167, %v1781
        %v2080 = vadd.f32 %v1172, %v1786
        %v2081 = vadd.f32 %v1177, %v1791
        %v2082 = vadd.f32 %v1182, %v1796
        %v2083 = vadd.f32 %v1187, %v1801
        %v2084 = vadd.f32 %v1192, %v1806
        %v2085 = vadd.f32 %v1197, %v1811
        %v2086 = vadd.f32 %v1202, %v1816
        %v2087 = vadd.f32 %v1207, %v1821
        %v2088 = vadd.f32 %v1212, %v1826
        %v2089 = vadd.f32 %v1217, %v1831
        %v2090 = vadd.f32 %v1222, %v1836
        %v2091 = vadd.f32 %v1227, %v1841
        %v2092 = vadd.f32 %v1232, %v1846
        %v2093 = vadd.f32 %v1237, %v1851
        %v2094 = vadd.f32 %v1242, %v1856
        %v2095 = vadd.f32 %v1247, %v1861
        %v2096 = vadd.f32 %v1252, %v1866
        %v2097 = vadd.f32 %v1257, %v1871
        %v2098 = vadd.f32 %v1262, %v1876
        %v2099 = vadd.f32 %v1267, %v1881
        %v2100 = vadd.f32 %v1272, %v1886
        %v2101 = vadd.f32 %v1277, %v1891
        %v2102 = vadd.f32 %v1282, %v1896
        %v2103 = vadd.f32 %v1287, %v1901
        %v2104 = vadd.f32 %v1292, %v1906
        %v2105 = vadd.f32 %v1297, %v1911
        %v2106 = vadd.f32 %v1302, %v1916
        %v2107 = vadd.f32 %v1307, %v1921
        %v2108 = vadd.f32 %v1312, %v1926
        %v2109 = vadd.f32 %v1317, %v1931
        %v2110 = vadd.f32 %v1322, %v1936
        %v2111 = vadd.f32 %v1327, %v1941
        %v2112 = vadd.f32 %v1332, %v1946
        %v2113 = vadd.f32 %v1337, %v1951
        %v2114 = vadd.f32 %v1342, %v1956
        %v2115 = vadd.f32 %v1347, %v1961
        %v2116 = vadd.f32 %v1352, %v1966
        %v2117 = vadd.f32 %v1357, %v1971
        %v2118 = vadd.f32 %v1362, %v1976
        %v2119 = vadd.f32 %v1367, %v1981
        %v2120 = vadd.f32 %v1372, %v1986
        %v2121 = vadd.f32 %v1377, %v1991
        %v2122 = vadd.f32 %v1382, %v1996
        %v2123 = vadd.f32 %v1387, %v2001
        %v2124 = vadd.f32 %v1392, %v2006
        %v2125 = vadd.f32 %v1397, %v2011
        %v2126 = vadd.f32 %v1402, %v2016
        %v2127 = vadd.f32 %v1407, %v2021
        %v2128 = vadd.f32 %v1412, %v2026
        %v2129 = vadd.f32 %v1417, %v2031
        %v2130 = vadd.f32 %v1422, %v2036
        %v2131 = vadd.f32 %v1427, %v2041
        %v2132 = vadd.f32 %v1432, %v2046
        %v2133 = vadd.f32 %v1437, %v2051
        %v2134 = vadd.f32 %v1442, %v2056
        %v2135 = vadd.f32 %v1447, %v2061
        %v2136 = vadd.f32 %v1452, %v2066
        %v2137 = vadd.f32 %v1457, %v2071
        %s2138 = sadd.s32 %s225, 1
        %s2139 = smul.u32 %s2138, 72
        %s2140 = scalar_lea.vmem %s215, %s2139
        %v2141 = vld [vmem:[%s2140] sm:$0xff]
        %v2142 = vld [vmem:[%s2140 + $0x8] sm:$0xff]
        %v2143 = vld [vmem:[%s2140 + $0x10] sm:$0xff]
        %v2144 = vld [vmem:[%s2140 + $0x18] sm:$0xff]
        %v2145 = vld [vmem:[%s2140 + $0x20] sm:$0xff]
        %v2146 = vld [vmem:[%s2140 + $0x28] sm:$0xff]
        %v2147 = vld [vmem:[%s2140 + $0x30] sm:$0xff]
        %v2148 = vld [vmem:[%s2140 + $0x38] sm:$0xff]
        %v2149 = vld [vmem:[%s2140 + $0x48] sm:$0xff]
        %v2150 = vld [vmem:[%s2140 + $0x50] sm:$0xff]
        %v2151 = vld [vmem:[%s2140 + $0x58] sm:$0xff]
        %v2152 = vld [vmem:[%s2140 + $0x60] sm:$0xff]
        %v2153 = vld [vmem:[%s2140 + $0x68] sm:$0xff]
        %v2154 = vld [vmem:[%s2140 + $0x70] sm:$0xff]
        %v2155 = vld [vmem:[%s2140 + $0x78] sm:$0xff]
        %v2156 = vld [vmem:[%s2140 + $0x80] sm:$0xff]
        %v2157 = vld [vmem:[%s2140 + $0x90] sm:$0xff]
        %v2158 = vld [vmem:[%s2140 + $0x98] sm:$0xff]
        %v2159 = vld [vmem:[%s2140 + $0xa0] sm:$0xff]
        %v2160 = vld [vmem:[%s2140 + $0xa8] sm:$0xff]
        %v2161 = vld [vmem:[%s2140 + $0xb0] sm:$0xff]
        %v2162 = vld [vmem:[%s2140 + $0xb8] sm:$0xff]
        %v2163 = vld [vmem:[%s2140 + $0xc0] sm:$0xff]
        %v2164 = vld [vmem:[%s2140 + $0xc8] sm:$0xff]
        %v2165 = vld [vmem:[%s2140 + $0xd8] sm:$0xff]
        %v2166 = vld [vmem:[%s2140 + $0xe0] sm:$0xff]
        %v2167 = vld [vmem:[%s2140 + $0xe8] sm:$0xff]
        %v2168 = vld [vmem:[%s2140 + $0xf0] sm:$0xff]
        %v2169 = vld [vmem:[%s2140 + $0xf8] sm:$0xff]
        %v2170 = vld [vmem:[%s2140 + $0x100] sm:$0xff]
        %v2171 = vld [vmem:[%s2140 + $0x108] sm:$0xff]
        %v2172 = vld [vmem:[%s2140 + $0x110] sm:$0xff]
        %v2173 = vld [vmem:[%s2140 + $0x120] sm:$0xff]
        %v2174 = vld [vmem:[%s2140 + $0x128] sm:$0xff]
        %v2175 = vld [vmem:[%s2140 + $0x130] sm:$0xff]
        %v2176 = vld [vmem:[%s2140 + $0x138] sm:$0xff]
        %v2177 = vld [vmem:[%s2140 + $0x140] sm:$0xff]
        %v2178 = vld [vmem:[%s2140 + $0x148] sm:$0xff]
        %v2179 = vld [vmem:[%s2140 + $0x150] sm:$0xff]
        %v2180 = vld [vmem:[%s2140 + $0x158] sm:$0xff]
        %v2181 = vld [vmem:[%s2140 + $0x168] sm:$0xff]
        %v2182 = vld [vmem:[%s2140 + $0x170] sm:$0xff]
        %v2183 = vld [vmem:[%s2140 + $0x178] sm:$0xff]
        %v2184 = vld [vmem:[%s2140 + $0x180] sm:$0xff]
        %v2185 = vld [vmem:[%s2140 + $0x188] sm:$0xff]
        %v2186 = vld [vmem:[%s2140 + $0x190] sm:$0xff]
        %v2187 = vld [vmem:[%s2140 + $0x198] sm:$0xff]
        %v2188 = vld [vmem:[%s2140 + $0x1a0] sm:$0xff]
        %v2189 = vld [vmem:[%s2140 + $0x1b0] sm:$0xff]
        %v2190 = vld [vmem:[%s2140 + $0x1b8] sm:$0xff]
        %v2191 = vld [vmem:[%s2140 + $0x1c0] sm:$0xff]
        %v2192 = vld [vmem:[%s2140 + $0x1c8] sm:$0xff]
        %v2193 = vld [vmem:[%s2140 + $0x1d0] sm:$0xff]
        %v2194 = vld [vmem:[%s2140 + $0x1d8] sm:$0xff]
        %v2195 = vld [vmem:[%s2140 + $0x1e0] sm:$0xff]
        %v2196 = vld [vmem:[%s2140 + $0x1e8] sm:$0xff]
        %v2197 = vld [vmem:[%s2140 + $0x1f8] sm:$0xff]
        %v2198 = vld [vmem:[%s2140 + $0x200] sm:$0xff]
        %v2199 = vld [vmem:[%s2140 + $0x208] sm:$0xff]
        %v2200 = vld [vmem:[%s2140 + $0x210] sm:$0xff]
        %v2201 = vld [vmem:[%s2140 + $0x218] sm:$0xff]
        %v2202 = vld [vmem:[%s2140 + $0x220] sm:$0xff]
        %v2203 = vld [vmem:[%s2140 + $0x228] sm:$0xff]
        %v2204 = vld [vmem:[%s2140 + $0x230] sm:$0xff]
        %s2205 = scalar_lea.vmem %s219, 6
        %v2206 = vld [vmem:[%s2205] sm:$0x3]
        %v2208 = vsel %vm359, %v2141, 0
        %v2211 = vsel %vm359, %v2142, 0
        %v2214 = vsel %vm359, %v2143, 0
        %v2217 = vsel %vm359, %v2144, 0
        %v2220 = vsel %vm359, %v2145, 0
        %v2223 = vsel %vm359, %v2146, 0
        %v2226 = vsel %vm359, %v2147, 0
        %v2229 = vsel %vm359, %v2148, 0
        %v2232 = vsel %vm359, %v2149, 0
        %v2235 = vsel %vm359, %v2150, 0
        %v2238 = vsel %vm359, %v2151, 0
        %v2241 = vsel %vm359, %v2152, 0
        %v2244 = vsel %vm359, %v2153, 0
        %v2247 = vsel %vm359, %v2154, 0
        %v2250 = vsel %vm359, %v2155, 0
        %v2253 = vsel %vm359, %v2156, 0
        %v2256 = vsel %vm359, %v2157, 0
        %v2259 = vsel %vm359, %v2158, 0
        %v2262 = vsel %vm359, %v2159, 0
        %v2265 = vsel %vm359, %v2160, 0
        %v2268 = vsel %vm359, %v2161, 0
        %v2271 = vsel %vm359, %v2162, 0
        %v2274 = vsel %vm359, %v2163, 0
        %v2277 = vsel %vm359, %v2164, 0
        %v2280 = vsel %vm359, %v2165, 0
        %v2283 = vsel %vm359, %v2166, 0
        %v2286 = vsel %vm359, %v2167, 0
        %v2289 = vsel %vm359, %v2168, 0
        %v2292 = vsel %vm359, %v2169, 0
        %v2295 = vsel %vm359, %v2170, 0
        %v2298 = vsel %vm359, %v2171, 0
        %v2301 = vsel %vm359, %v2172, 0
        %v2304 = vsel %vm359, %v2173, 0
        %v2307 = vsel %vm359, %v2174, 0
        %v2310 = vsel %vm359, %v2175, 0
        %v2313 = vsel %vm359, %v2176, 0
        %v2316 = vsel %vm359, %v2177, 0
        %v2319 = vsel %vm359, %v2178, 0
        %v2322 = vsel %vm359, %v2179, 0
        %v2325 = vsel %vm359, %v2180, 0
        %v2328 = vsel %vm359, %v2181, 0
        %v2331 = vsel %vm359, %v2182, 0
        %v2334 = vsel %vm359, %v2183, 0
        %v2337 = vsel %vm359, %v2184, 0
        %v2340 = vsel %vm359, %v2185, 0
        %v2343 = vsel %vm359, %v2186, 0
        %v2346 = vsel %vm359, %v2187, 0
        %v2349 = vsel %vm359, %v2188, 0
        %v2352 = vsel %vm359, %v2189, 0
        %v2355 = vsel %vm359, %v2190, 0
        %v2358 = vsel %vm359, %v2191, 0
        %v2361 = vsel %vm359, %v2192, 0
        %v2364 = vsel %vm359, %v2193, 0
        %v2367 = vsel %vm359, %v2194, 0
        %v2370 = vsel %vm359, %v2195, 0
        %v2373 = vsel %vm359, %v2196, 0
        %v2376 = vsel %vm359, %v2197, 0
        %v2379 = vsel %vm359, %v2198, 0
        %v2382 = vsel %vm359, %v2199, 0
        %v2385 = vsel %vm359, %v2200, 0
        %v2388 = vsel %vm359, %v2201, 0
        %v2391 = vsel %vm359, %v2202, 0
        %v2394 = vsel %vm359, %v2203, 0
        %v2397 = vsel %vm359, %v2204, 0
        %v2400 = vand.u32 %v2206, %v555
        %2402 = vmatprep.subr.bf16.mxu0 0
        %2403 = vmatpush1.bf16.msra.mxu0 %v2400
        %2404 = vmatprep.subr.bf16.mxu0 0
        %2405 = vmatpush1.bf16.msra.mxu0 0
        %2406 = vmatprep.subr.bf16.mxu0 0
        %2407 = vmatpush1.bf16.msra.mxu0 0
        %2408 = vmatprep.subr.bf16.mxu0 0
        %2409 = vmatpush1.bf16.msra.mxu0 0
        %2410 = vmatprep.subr.bf16.mxu0 0
        %2411 = vmatpush1.bf16.msra.mxu0 0
        %2412 = vmatprep.subr.bf16.mxu0 0
        %2413 = vmatpush1.bf16.msra.mxu0 0
        %2414 = vmatprep.subr.bf16.mxu0 0
        %2415 = vmatpush1.bf16.msra.mxu0 0
        %2416 = vmatprep.subr.bf16.mxu0 0
        %2417 = vmatpush1.bf16.msra.mxu0 0
        %2418 = vmatprep.subr.bf16.mxu0 0
        %2419 = vmatpush1.bf16.msra.mxu0 0
        %2420 = vmatprep.subr.bf16.mxu0 0
        %2421 = vmatpush1.bf16.msra.mxu0 0
        %2422 = vmatprep.subr.bf16.mxu0 0
        %2423 = vmatpush1.bf16.msra.mxu0 0
        %2424 = vmatprep.subr.bf16.mxu0 0
        %2425 = vmatpush1.bf16.msra.mxu0 0
        %2426 = vmatprep.subr.bf16.mxu0 0
        %2427 = vmatpush1.bf16.msra.mxu0 0
        %2428 = vmatprep.subr.bf16.mxu0 0
        %2429 = vmatpush1.bf16.msra.mxu0 0
        %2430 = vmatprep.subr.bf16.mxu0 0
        %2431 = vmatpush1.bf16.msra.mxu0 0
        %2432 = vmatprep.subr.bf16.mxu0 0
        %2433 = vmatpush1.bf16.msra.mxu0 0
        %2434 = vmatprep.mubr.f32.mxu0 0.0
        %2435 = vmatmul.mubr.f32.gmra.mrb[0].mxu0 %v2208
        %v2436 = vpop.f32.mrb[0].mxu0
        %v2437 = vadd.f32 0.0, %v2436
        %v2438 = vpop.f32.mrb[0].mxu0
        %2439 = vmatprep.mubr.f32.mxu0 0.0
        %2440 = vmatmul.mubr.f32.gmra.mrb[0].mxu0 %v2211
        %v2441 = vpop.f32.mrb[0].mxu0
        %v2442 = vadd.f32 0.0, %v2441
        %v2443 = vpop.f32.mrb[0].mxu0
        %2444 = vmatprep.mubr.f32.mxu0 0.0
        %2445 = vmatmul.mubr.f32.gmra.mrb[0].mxu0 %v2214
        %v2446 = vpop.f32.mrb[0].mxu0
        %v2447 = vadd.f32 0.0, %v2446
        %v2448 = vpop.f32.mrb[0].mxu0
        %2449 = vmatprep.mubr.f32.mxu0 0.0
        %2450 = vmatmul.mubr.f32.gmra.mrb[0].mxu0 %v2217
        %v2451 = vpop.f32.mrb[0].mxu0
        %v2452 = vadd.f32 0.0, %v2451
        %v2453 = vpop.f32.mrb[0].mxu0
        %2454 = vmatprep.mubr.f32.mxu0 0.0
        %2455 = vmatmul.mubr.f32.gmra.mrb[0].mxu0 %v2220
        %v2456 = vpop.f32.mrb[0].mxu0
        %v2457 = vadd.f32 0.0, %v2456
        %v2458 = vpop.f32.mrb[0].mxu0
        %2459 = vmatprep.mubr.f32.mxu0 0.0
        %2460 = vmatmul.mubr.f32.gmra.mrb[0].mxu0 %v2223
        %v2461 = vpop.f32.mrb[0].mxu0
        %v2462 = vadd.f32 0.0, %v2461
        %v2463 = vpop.f32.mrb[0].mxu0
        %2464 = vmatprep.mubr.f32.mxu0 0.0
        %2465 = vmatmul.mubr.f32.gmra.mrb[0].mxu0 %v2226
        %v2466 = vpop.f32.mrb[0].mxu0
        %v2467 = vadd.f32 0.0, %v2466
        %v2468 = vpop.f32.mrb[0].mxu0
        %2469 = vmatprep.mubr.f32.mxu0 0.0
        %2470 = vmatmul.mubr.f32.gmra.mrb[0].mxu0 %v2229
        %v2471 = vpop.f32.mrb[0].mxu0
        %v2472 = vadd.f32 0.0, %v2471
        %v2473 = vpop.f32.mrb[0].mxu0
        %2474 = vmatprep.mubr.f32.mxu0 0.0
        %2475 = vmatmul.mubr.f32.gmra.mrb[0].mxu0 %v2232
        %v2476 = vpop.f32.mrb[0].mxu0
        %v2477 = vadd.f32 0.0, %v2476
        %v2478 = vpop.f32.mrb[0].mxu0
        %2479 = vmatprep.mubr.f32.mxu0 0.0
        %2480 = vmatmul.mubr.f32.gmra.mrb[0].mxu0 %v2235
        %v2481 = vpop.f32.mrb[0].mxu0
        %v2482 = vadd.f32 0.0, %v2481
        %v2483 = vpop.f32.mrb[0].mxu0
        %2484 = vmatprep.mubr.f32.mxu0 0.0
        %2485 = vmatmul.mubr.f32.gmra.mrb[0].mxu0 %v2238
        %v2486 = vpop.f32.mrb[0].mxu0
        %v2487 = vadd.f32 0.0, %v2486
        %v2488 = vpop.f32.mrb[0].mxu0
        %2489 = vmatprep.mubr.f32.mxu0 0.0
        %2490 = vmatmul.mubr.f32.gmra.mrb[0].mxu0 %v2241
        %v2491 = vpop.f32.mrb[0].mxu0
        %v2492 = vadd.f32 0.0, %v2491
        %v2493 = vpop.f32.mrb[0].mxu0
        %2494 = vmatprep.mubr.f32.mxu0 0.0
        %2495 = vmatmul.mubr.f32.gmra.mrb[0].mxu0 %v2244
        %v2496 = vpop.f32.mrb[0].mxu0
        %v2497 = vadd.f32 0.0, %v2496
        %v2498 = vpop.f32.mrb[0].mxu0
        %2499 = vmatprep.mubr.f32.mxu0 0.0
        %2500 = vmatmul.mubr.f32.gmra.mrb[0].mxu0 %v2247
        %v2501 = vpop.f32.mrb[0].mxu0
        %v2502 = vadd.f32 0.0, %v2501
        %v2503 = vpop.f32.mrb[0].mxu0
        %2504 = vmatprep.mubr.f32.mxu0 0.0
        %2505 = vmatmul.mubr.f32.gmra.mrb[0].mxu0 %v2250
        %v2506 = vpop.f32.mrb[0].mxu0
        %v2507 = vadd.f32 0.0, %v2506
        %v2508 = vpop.f32.mrb[0].mxu0
        %2509 = vmatprep.mubr.f32.mxu0 0.0
        %2510 = vmatmul.mubr.f32.gmra.mrb[0].mxu0 %v2253
        %v2511 = vpop.f32.mrb[0].mxu0
        %v2512 = vadd.f32 0.0, %v2511
        %v2513 = vpop.f32.mrb[0].mxu0
        %2514 = vmatprep.mubr.f32.mxu0 0.0
        %2515 = vmatmul.mubr.f32.gmra.mrb[0].mxu0 %v2256
        %v2516 = vpop.f32.mrb[0].mxu0
        %v2517 = vadd.f32 0.0, %v2516
        %v2518 = vpop.f32.mrb[0].mxu0
        %2519 = vmatprep.mubr.f32.mxu0 0.0
        %2520 = vmatmul.mubr.f32.gmra.mrb[0].mxu0 %v2259
        %v2521 = vpop.f32.mrb[0].mxu0
        %v2522 = vadd.f32 0.0, %v2521
        %v2523 = vpop.f32.mrb[0].mxu0
        %2524 = vmatprep.mubr.f32.mxu0 0.0
        %2525 = vmatmul.mubr.f32.gmra.mrb[0].mxu0 %v2262
        %v2526 = vpop.f32.mrb[0].mxu0
        %v2527 = vadd.f32 0.0, %v2526
        %v2528 = vpop.f32.mrb[0].mxu0
        %2529 = vmatprep.mubr.f32.mxu0 0.0
        %2530 = vmatmul.mubr.f32.gmra.mrb[0].mxu0 %v2265
        %v2531 = vpop.f32.mrb[0].mxu0
        %v2532 = vadd.f32 0.0, %v2531
        %v2533 = vpop.f32.mrb[0].mxu0
        %2534 = vmatprep.mubr.f32.mxu0 0.0
        %2535 = vmatmul.mubr.f32.gmra.mrb[0].mxu0 %v2268
        %v2536 = vpop.f32.mrb[0].mxu0
        %v2537 = vadd.f32 0.0, %v2536
        %v2538 = vpop.f32.mrb[0].mxu0
        %2539 = vmatprep.mubr.f32.mxu0 0.0
        %2540 = vmatmul.mubr.f32.gmra.mrb[0].mxu0 %v2271
        %v2541 = vpop.f32.mrb[0].mxu0
        %v2542 = vadd.f32 0.0, %v2541
        %v2543 = vpop.f32.mrb[0].mxu0
        %2544 = vmatprep.mubr.f32.mxu0 0.0
        %2545 = vmatmul.mubr.f32.gmra.mrb[0].mxu0 %v2274
        %v2546 = vpop.f32.mrb[0].mxu0
        %v2547 = vadd.f32 0.0, %v2546
        %v2548 = vpop.f32.mrb[0].mxu0
        %2549 = vmatprep.mubr.f32.mxu0 0.0
        %2550 = vmatmul.mubr.f32.gmra.mrb[0].mxu0 %v2277
        %v2551 = vpop.f32.mrb[0].mxu0
        %v2552 = vadd.f32 0.0, %v2551
        %v2553 = vpop.f32.mrb[0].mxu0
        %2554 = vmatprep.mubr.f32.mxu0 0.0
        %2555 = vmatmul.mubr.f32.gmra.mrb[0].mxu0 %v2280
        %v2556 = vpop.f32.mrb[0].mxu0
        %v2557 = vadd.f32 0.0, %v2556
        %v2558 = vpop.f32.mrb[0].mxu0
        %2559 = vmatprep.mubr.f32.mxu0 0.0
        %2560 = vmatmul.mubr.f32.gmra.mrb[0].mxu0 %v2283
        %v2561 = vpop.f32.mrb[0].mxu0
        %v2562 = vadd.f32 0.0, %v2561
        %v2563 = vpop.f32.mrb[0].mxu0
        %2564 = vmatprep.mubr.f32.mxu0 0.0
        %2565 = vmatmul.mubr.f32.gmra.mrb[0].mxu0 %v2286
        %v2566 = vpop.f32.mrb[0].mxu0
        %v2567 = vadd.f32 0.0, %v2566
        %v2568 = vpop.f32.mrb[0].mxu0
        %2569 = vmatprep.mubr.f32.mxu0 0.0
        %2570 = vmatmul.mubr.f32.gmra.mrb[0].mxu0 %v2289
        %v2571 = vpop.f32.mrb[0].mxu0
        %v2572 = vadd.f32 0.0, %v2571
        %v2573 = vpop.f32.mrb[0].mxu0
        %2574 = vmatprep.mubr.f32.mxu0 0.0
        %2575 = vmatmul.mubr.f32.gmra.mrb[0].mxu0 %v2292
        %v2576 = vpop.f32.mrb[0].mxu0
        %v2577 = vadd.f32 0.0, %v2576
        %v2578 = vpop.f32.mrb[0].mxu0
        %2579 = vmatprep.mubr.f32.mxu0 0.0
        %2580 = vmatmul.mubr.f32.gmra.mrb[0].mxu0 %v2295
        %v2581 = vpop.f32.mrb[0].mxu0
        %v2582 = vadd.f32 0.0, %v2581
        %v2583 = vpop.f32.mrb[0].mxu0
        %2584 = vmatprep.mubr.f32.mxu0 0.0
        %2585 = vmatmul.mubr.f32.gmra.mrb[0].mxu0 %v2298
        %v2586 = vpop.f32.mrb[0].mxu0
        %v2587 = vadd.f32 0.0, %v2586
        %v2588 = vpop.f32.mrb[0].mxu0
        %2589 = vmatprep.mubr.f32.mxu0 0.0
        %2590 = vmatmul.mubr.f32.gmra.mrb[0].mxu0 %v2301
        %v2591 = vpop.f32.mrb[0].mxu0
        %v2592 = vadd.f32 0.0, %v2591
        %v2593 = vpop.f32.mrb[0].mxu0
        %2594 = vmatprep.mubr.f32.mxu0 0.0
        %2595 = vmatmul.mubr.f32.gmra.mrb[0].mxu0 %v2304
        %v2596 = vpop.f32.mrb[0].mxu0
        %v2597 = vadd.f32 0.0, %v2596
        %v2598 = vpop.f32.mrb[0].mxu0
        %2599 = vmatprep.mubr.f32.mxu0 0.0
        %2600 = vmatmul.mubr.f32.gmra.mrb[0].mxu0 %v2307
        %v2601 = vpop.f32.mrb[0].mxu0
        %v2602 = vadd.f32 0.0, %v2601
        %v2603 = vpop.f32.mrb[0].mxu0
        %2604 = vmatprep.mubr.f32.mxu0 0.0
        %2605 = vmatmul.mubr.f32.gmra.mrb[0].mxu0 %v2310
        %v2606 = vpop.f32.mrb[0].mxu0
        %v2607 = vadd.f32 0.0, %v2606
        %v2608 = vpop.f32.mrb[0].mxu0
        %2609 = vmatprep.mubr.f32.mxu0 0.0
        %2610 = vmatmul.mubr.f32.gmra.mrb[0].mxu0 %v2313
        %v2611 = vpop.f32.mrb[0].mxu0
        %v2612 = vadd.f32 0.0, %v2611
        %v2613 = vpop.f32.mrb[0].mxu0
        %2614 = vmatprep.mubr.f32.mxu0 0.0
        %2615 = vmatmul.mubr.f32.gmra.mrb[0].mxu0 %v2316
        %v2616 = vpop.f32.mrb[0].mxu0
        %v2617 = vadd.f32 0.0, %v2616
        %v2618 = vpop.f32.mrb[0].mxu0
        %2619 = vmatprep.mubr.f32.mxu0 0.0
        %2620 = vmatmul.mubr.f32.gmra.mrb[0].mxu0 %v2319
        %v2621 = vpop.f32.mrb[0].mxu0
        %v2622 = vadd.f32 0.0, %v2621
        %v2623 = vpop.f32.mrb[0].mxu0
        %2624 = vmatprep.mubr.f32.mxu0 0.0
        %2625 = vmatmul.mubr.f32.gmra.mrb[0].mxu0 %v2322
        %v2626 = vpop.f32.mrb[0].mxu0
        %v2627 = vadd.f32 0.0, %v2626
        %v2628 = vpop.f32.mrb[0].mxu0
        %2629 = vmatprep.mubr.f32.mxu0 0.0
        %2630 = vmatmul.mubr.f32.gmra.mrb[0].mxu0 %v2325
        %v2631 = vpop.f32.mrb[0].mxu0
        %v2632 = vadd.f32 0.0, %v2631
        %v2633 = vpop.f32.mrb[0].mxu0
        %2634 = vmatprep.mubr.f32.mxu0 0.0
        %2635 = vmatmul.mubr.f32.gmra.mrb[0].mxu0 %v2328
        %v2636 = vpop.f32.mrb[0].mxu0
        %v2637 = vadd.f32 0.0, %v2636
        %v2638 = vpop.f32.mrb[0].mxu0
        %2639 = vmatprep.mubr.f32.mxu0 0.0
        %2640 = vmatmul.mubr.f32.gmra.mrb[0].mxu0 %v2331
        %v2641 = vpop.f32.mrb[0].mxu0
        %v2642 = vadd.f32 0.0, %v2641
        %v2643 = vpop.f32.mrb[0].mxu0
        %2644 = vmatprep.mubr.f32.mxu0 0.0
        %2645 = vmatmul.mubr.f32.gmra.mrb[0].mxu0 %v2334
        %v2646 = vpop.f32.mrb[0].mxu0
        %v2647 = vadd.f32 0.0, %v2646
        %v2648 = vpop.f32.mrb[0].mxu0
        %2649 = vmatprep.mubr.f32.mxu0 0.0
        %2650 = vmatmul.mubr.f32.gmra.mrb[0].mxu0 %v2337
        %v2651 = vpop.f32.mrb[0].mxu0
        %v2652 = vadd.f32 0.0, %v2651
        %v2653 = vpop.f32.mrb[0].mxu0
        %2654 = vmatprep.mubr.f32.mxu0 0.0
        %2655 = vmatmul.mubr.f32.gmra.mrb[0].mxu0 %v2340
        %v2656 = vpop.f32.mrb[0].mxu0
        %v2657 = vadd.f32 0.0, %v2656
        %v2658 = vpop.f32.mrb[0].mxu0
        %2659 = vmatprep.mubr.f32.mxu0 0.0
        %2660 = vmatmul.mubr.f32.gmra.mrb[0].mxu0 %v2343
        %v2661 = vpop.f32.mrb[0].mxu0
        %v2662 = vadd.f32 0.0, %v2661
        %v2663 = vpop.f32.mrb[0].mxu0
        %2664 = vmatprep.mubr.f32.mxu0 0.0
        %2665 = vmatmul.mubr.f32.gmra.mrb[0].mxu0 %v2346
        %v2666 = vpop.f32.mrb[0].mxu0
        %v2667 = vadd.f32 0.0, %v2666
        %v2668 = vpop.f32.mrb[0].mxu0
        %2669 = vmatprep.mubr.f32.mxu0 0.0
        %2670 = vmatmul.mubr.f32.gmra.mrb[0].mxu0 %v2349
        %v2671 = vpop.f32.mrb[0].mxu0
        %v2672 = vadd.f32 0.0, %v2671
        %v2673 = vpop.f32.mrb[0].mxu0
        %2674 = vmatprep.mubr.f32.mxu0 0.0
        %2675 = vmatmul.mubr.f32.gmra.mrb[0].mxu0 %v2352
        %v2676 = vpop.f32.mrb[0].mxu0
        %v2677 = vadd.f32 0.0, %v2676
        %v2678 = vpop.f32.mrb[0].mxu0
        %2679 = vmatprep.mubr.f32.mxu0 0.0
        %2680 = vmatmul.mubr.f32.gmra.mrb[0].mxu0 %v2355
        %v2681 = vpop.f32.mrb[0].mxu0
        %v2682 = vadd.f32 0.0, %v2681
        %v2683 = vpop.f32.mrb[0].mxu0
        %2684 = vmatprep.mubr.f32.mxu0 0.0
        %2685 = vmatmul.mubr.f32.gmra.mrb[0].mxu0 %v2358
        %v2686 = vpop.f32.mrb[0].mxu0
        %v2687 = vadd.f32 0.0, %v2686
        %v2688 = vpop.f32.mrb[0].mxu0
        %2689 = vmatprep.mubr.f32.mxu0 0.0
        %2690 = vmatmul.mubr.f32.gmra.mrb[0].mxu0 %v2361
        %v2691 = vpop.f32.mrb[0].mxu0
        %v2692 = vadd.f32 0.0, %v2691
        %v2693 = vpop.f32.mrb[0].mxu0
        %2694 = vmatprep.mubr.f32.mxu0 0.0
        %2695 = vmatmul.mubr.f32.gmra.mrb[0].mxu0 %v2364
        %v2696 = vpop.f32.mrb[0].mxu0
        %v2697 = vadd.f32 0.0, %v2696
        %v2698 = vpop.f32.mrb[0].mxu0
        %2699 = vmatprep.mubr.f32.mxu0 0.0
        %2700 = vmatmul.mubr.f32.gmra.mrb[0].mxu0 %v2367
        %v2701 = vpop.f32.mrb[0].mxu0
        %v2702 = vadd.f32 0.0, %v2701
        %v2703 = vpop.f32.mrb[0].mxu0
        %2704 = vmatprep.mubr.f32.mxu0 0.0
        %2705 = vmatmul.mubr.f32.gmra.mrb[0].mxu0 %v2370
        %v2706 = vpop.f32.mrb[0].mxu0
        %v2707 = vadd.f32 0.0, %v2706
        %v2708 = vpop.f32.mrb[0].mxu0
        %2709 = vmatprep.mubr.f32.mxu0 0.0
        %2710 = vmatmul.mubr.f32.gmra.mrb[0].mxu0 %v2373
        %v2711 = vpop.f32.mrb[0].mxu0
        %v2712 = vadd.f32 0.0, %v2711
        %v2713 = vpop.f32.mrb[0].mxu0
        %2714 = vmatprep.mubr.f32.mxu0 0.0
        %2715 = vmatmul.mubr.f32.gmra.mrb[0].mxu0 %v2376
        %v2716 = vpop.f32.mrb[0].mxu0
        %v2717 = vadd.f32 0.0, %v2716
        %v2718 = vpop.f32.mrb[0].mxu0
        %2719 = vmatprep.mubr.f32.mxu0 0.0
        %2720 = vmatmul.mubr.f32.gmra.mrb[0].mxu0 %v2379
        %v2721 = vpop.f32.mrb[0].mxu0
        %v2722 = vadd.f32 0.0, %v2721
        %v2723 = vpop.f32.mrb[0].mxu0
        %2724 = vmatprep.mubr.f32.mxu0 0.0
        %2725 = vmatmul.mubr.f32.gmra.mrb[0].mxu0 %v2382
        %v2726 = vpop.f32.mrb[0].mxu0
        %v2727 = vadd.f32 0.0, %v2726
        %v2728 = vpop.f32.mrb[0].mxu0
        %2729 = vmatprep.mubr.f32.mxu0 0.0
        %2730 = vmatmul.mubr.f32.gmra.mrb[0].mxu0 %v2385
        %v2731 = vpop.f32.mrb[0].mxu0
        %v2732 = vadd.f32 0.0, %v2731
        %v2733 = vpop.f32.mrb[0].mxu0
        %2734 = vmatprep.mubr.f32.mxu0 0.0
        %2735 = vmatmul.mubr.f32.gmra.mrb[0].mxu0 %v2388
        %v2736 = vpop.f32.mrb[0].mxu0
        %v2737 = vadd.f32 0.0, %v2736
        %v2738 = vpop.f32.mrb[0].mxu0
        %2739 = vmatprep.mubr.f32.mxu0 0.0
        %2740 = vmatmul.mubr.f32.gmra.mrb[0].mxu0 %v2391
        %v2741 = vpop.f32.mrb[0].mxu0
        %v2742 = vadd.f32 0.0, %v2741
        %v2743 = vpop.f32.mrb[0].mxu0
        %2744 = vmatprep.mubr.f32.mxu0 0.0
        %2745 = vmatmul.mubr.f32.gmra.mrb[0].mxu0 %v2394
        %v2746 = vpop.f32.mrb[0].mxu0
        %v2747 = vadd.f32 0.0, %v2746
        %v2748 = vpop.f32.mrb[0].mxu0
        %2749 = vmatprep.mubr.f32.mxu0 0.0
        %2750 = vmatmul.mubr.f32.gmra.mrb[0].mxu0 %v2397
        %v2751 = vpop.f32.mrb[0].mxu0
        %v2752 = vadd.f32 0.0, %v2751
        %v2753 = vpop.f32.mrb[0].mxu0
        %2754 = vdwg.mxu0
        %v2755 = vadd.f32 %v2074, %v2437
        %v2756 = vadd.f32 %v2075, %v2442
        %v2757 = vadd.f32 %v2076, %v2447
        %v2758 = vadd.f32 %v2077, %v2452
        %v2759 = vadd.f32 %v2078, %v2457
        %v2760 = vadd.f32 %v2079, %v2462
        %v2761 = vadd.f32 %v2080, %v2467
        %v2762 = vadd.f32 %v2081, %v2472
        %v2763 = vadd.f32 %v2082, %v2477
        %v2764 = vadd.f32 %v2083, %v2482
        %v2765 = vadd.f32 %v2084, %v2487
        %v2766 = vadd.f32 %v2085, %v2492
        %v2767 = vadd.f32 %v2086, %v2497
        %v2768 = vadd.f32 %v2087, %v2502
        %v2769 = vadd.f32 %v2088, %v2507
        %v2770 = vadd.f32 %v2089, %v2512
        %v2771 = vadd.f32 %v2090, %v2517
        %v2772 = vadd.f32 %v2091, %v2522
        %v2773 = vadd.f32 %v2092, %v2527
        %v2774 = vadd.f32 %v2093, %v2532
        %v2775 = vadd.f32 %v2094, %v2537
        %v2776 = vadd.f32 %v2095, %v2542
        %v2777 = vadd.f32 %v2096, %v2547
        %v2778 = vadd.f32 %v2097, %v2552
        %v2779 = vadd.f32 %v2098, %v2557
        %v2780 = vadd.f32 %v2099, %v2562
        %v2781 = vadd.f32 %v2100, %v2567
        %v2782 = vadd.f32 %v2101, %v2572
        %v2783 = vadd.f32 %v2102, %v2577
        %v2784 = vadd.f32 %v2103, %v2582
        %v2785 = vadd.f32 %v2104, %v2587
        %v2786 = vadd.f32 %v2105, %v2592
        %v2787 = vadd.f32 %v2106, %v2597
        %v2788 = vadd.f32 %v2107, %v2602
        %v2789 = vadd.f32 %v2108, %v2607
        %v2790 = vadd.f32 %v2109, %v2612
        %v2791 = vadd.f32 %v2110, %v2617
        %v2792 = vadd.f32 %v2111, %v2622
        %v2793 = vadd.f32 %v2112, %v2627
        %v2794 = vadd.f32 %v2113, %v2632
        %v2795 = vadd.f32 %v2114, %v2637
        %v2796 = vadd.f32 %v2115, %v2642
        %v2797 = vadd.f32 %v2116, %v2647
        %v2798 = vadd.f32 %v2117, %v2652
        %v2799 = vadd.f32 %v2118, %v2657
        %v2800 = vadd.f32 %v2119, %v2662
        %v2801 = vadd.f32 %v2120, %v2667
        %v2802 = vadd.f32 %v2121, %v2672
        %v2803 = vadd.f32 %v2122, %v2677
        %v2804 = vadd.f32 %v2123, %v2682
        %v2805 = vadd.f32 %v2124, %v2687
        %v2806 = vadd.f32 %v2125, %v2692
        %v2807 = vadd.f32 %v2126, %v2697
        %v2808 = vadd.f32 %v2127, %v2702
        %v2809 = vadd.f32 %v2128, %v2707
        %v2810 = vadd.f32 %v2129, %v2712
        %v2811 = vadd.f32 %v2130, %v2717
        %v2812 = vadd.f32 %v2131, %v2722
        %v2813 = vadd.f32 %v2132, %v2727
        %v2814 = vadd.f32 %v2133, %v2732
        %v2815 = vadd.f32 %v2134, %v2737
        %v2816 = vadd.f32 %v2135, %v2742
        %v2817 = vadd.f32 %v2136, %v2747
        %v2818 = vadd.f32 %v2137, %v2752
        %v2819 = vld [vmem:[%s2140 + $0x1] sm:$0xff]
        %v2820 = vld [vmem:[%s2140 + $0x9] sm:$0xff]
        %v2821 = vld [vmem:[%s2140 + $0x11] sm:$0xff]
        %v2822 = vld [vmem:[%s2140 + $0x19] sm:$0xff]
        %v2823 = vld [vmem:[%s2140 + $0x21] sm:$0xff]
        %v2824 = vld [vmem:[%s2140 + $0x29] sm:$0xff]
        %v2825 = vld [vmem:[%s2140 + $0x31] sm:$0xff]
        %v2826 = vld [vmem:[%s2140 + $0x39] sm:$0xff]
        %v2827 = vld [vmem:[%s2140 + $0x49] sm:$0xff]
        %v2828 = vld [vmem:[%s2140 + $0x51] sm:$0xff]
        %v2829 = vld [vmem:[%s2140 + $0x59] sm:$0xff]
        %v2830 = vld [vmem:[%s2140 + $0x61] sm:$0xff]
        %v2831 = vld [vmem:[%s2140 + $0x69] sm:$0xff]
        %v2832 = vld [vmem:[%s2140 + $0x71] sm:$0xff]
        %v2833 = vld [vmem:[%s2140 + $0x79] sm:$0xff]
        %v2834 = vld [vmem:[%s2140 + $0x81] sm:$0xff]
        %v2835 = vld [vmem:[%s2140 + $0x91] sm:$0xff]
        %v2836 = vld [vmem:[%s2140 + $0x99] sm:$0xff]
        %v2837 = vld [vmem:[%s2140 + $0xa1] sm:$0xff]
        %v2838 = vld [vmem:[%s2140 + $0xa9] sm:$0xff]
        %v2839 = vld [vmem:[%s2140 + $0xb1] sm:$0xff]
        %v2840 = vld [vmem:[%s2140 + $0xb9] sm:$0xff]
        %v2841 = vld [vmem:[%s2140 + $0xc1] sm:$0xff]
        %v2842 = vld [vmem:[%s2140 + $0xc9] sm:$0xff]
        %v2843 = vld [vmem:[%s2140 + $0xd9] sm:$0xff]
        %v2844 = vld [vmem:[%s2140 + $0xe1] sm:$0xff]
        %v2845 = vld [vmem:[%s2140 + $0xe9] sm:$0xff]
        %v2846 = vld [vmem:[%s2140 + $0xf1] sm:$0xff]
        %v2847 = vld [vmem:[%s2140 + $0xf9] sm:$0xff]
        %v2848 = vld [vmem:[%s2140 + $0x101] sm:$0xff]
        %v2849 = vld [vmem:[%s2140 + $0x109] sm:$0xff]
        %v2850 = vld [vmem:[%s2140 + $0x111] sm:$0xff]
        %v2851 = vld [vmem:[%s2140 + $0x121] sm:$0xff]
        %v2852 = vld [vmem:[%s2140 + $0x129] sm:$0xff]
        %v2853 = vld [vmem:[%s2140 + $0x131] sm:$0xff]
        %v2854 = vld [vmem:[%s2140 + $0x139] sm:$0xff]
        %v2855 = vld [vmem:[%s2140 + $0x141] sm:$0xff]
        %v2856 = vld [vmem:[%s2140 + $0x149] sm:$0xff]
        %v2857 = vld [vmem:[%s2140 + $0x151] sm:$0xff]
        %v2858 = vld [vmem:[%s2140 + $0x159] sm:$0xff]
        %v2859 = vld [vmem:[%s2140 + $0x169] sm:$0xff]
        %v2860 = vld [vmem:[%s2140 + $0x171] sm:$0xff]
        %v2861 = vld [vmem:[%s2140 + $0x179] sm:$0xff]
        %v2862 = vld [vmem:[%s2140 + $0x181] sm:$0xff]
        %v2863 = vld [vmem:[%s2140 + $0x189] sm:$0xff]
        %v2864 = vld [vmem:[%s2140 + $0x191] sm:$0xff]
        %v2865 = vld [vmem:[%s2140 + $0x199] sm:$0xff]
        %v2866 = vld [vmem:[%s2140 + $0x1a1] sm:$0xff]
        %v2867 = vld [vmem:[%s2140 + $0x1b1] sm:$0xff]
        %v2868 = vld [vmem:[%s2140 + $0x1b9] sm:$0xff]
        %v2869 = vld [vmem:[%s2140 + $0x1c1] sm:$0xff]
        %v2870 = vld [vmem:[%s2140 + $0x1c9] sm:$0xff]
        %v2871 = vld [vmem:[%s2140 + $0x1d1] sm:$0xff]
        %v2872 = vld [vmem:[%s2140 + $0x1d9] sm:$0xff]
        %v2873 = vld [vmem:[%s2140 + $0x1e1] sm:$0xff]
        %v2874 = vld [vmem:[%s2140 + $0x1e9] sm:$0xff]
        %v2875 = vld [vmem:[%s2140 + $0x1f9] sm:$0xff]
        %v2876 = vld [vmem:[%s2140 + $0x201] sm:$0xff]
        %v2877 = vld [vmem:[%s2140 + $0x209] sm:$0xff]
        %v2878 = vld [vmem:[%s2140 + $0x211] sm:$0xff]
        %v2879 = vld [vmem:[%s2140 + $0x219] sm:$0xff]
        %v2880 = vld [vmem:[%s2140 + $0x221] sm:$0xff]
        %v2881 = vld [vmem:[%s2140 + $0x229] sm:$0xff]
        %v2882 = vld [vmem:[%s2140 + $0x231] sm:$0xff]
        %s2883 = scalar_lea.vmem %s219, 8
        %v2884 = vld [vmem:[%s2883] sm:$0x3]
        %v2886 = vsel %vm359, %v2819, 0
        %v2889 = vsel %vm359, %v2820, 0
        %v2892 = vsel %vm359, %v2821, 0
        %v2895 = vsel %vm359, %v2822, 0
        %v2898 = vsel %vm359, %v2823, 0
        %v2901 = vsel %vm359, %v2824, 0
        %v2904 = vsel %vm359, %v2825, 0
        %v2907 = vsel %vm359, %v2826, 0
        %v2910 = vsel %vm359, %v2827, 0
        %v2913 = vsel %vm359, %v2828, 0
        %v2916 = vsel %vm359, %v2829, 0
        %v2919 = vsel %vm359, %v2830, 0
        %v2922 = vsel %vm359, %v2831, 0
        %v2925 = vsel %vm359, %v2832, 0
        %v2928 = vsel %vm359, %v2833, 0
        %v2931 = vsel %vm359, %v2834, 0
        %v2934 = vsel %vm359, %v2835, 0
        %v2937 = vsel %vm359, %v2836, 0
        %v2940 = vsel %vm359, %v2837, 0
        %v2943 = vsel %vm359, %v2838, 0
        %v2946 = vsel %vm359, %v2839, 0
        %v2949 = vsel %vm359, %v2840, 0
        %v2952 = vsel %vm359, %v2841, 0
        %v2955 = vsel %vm359, %v2842, 0
        %v2958 = vsel %vm359, %v2843, 0
        %v2961 = vsel %vm359, %v2844, 0
        %v2964 = vsel %vm359, %v2845, 0
        %v2967 = vsel %vm359, %v2846, 0
        %v2970 = vsel %vm359, %v2847, 0
        %v2973 = vsel %vm359, %v2848, 0
        %v2976 = vsel %vm359, %v2849, 0
        %v2979 = vsel %vm359, %v2850, 0
        %v2982 = vsel %vm359, %v2851, 0
        %v2985 = vsel %vm359, %v2852, 0
        %v2988 = vsel %vm359, %v2853, 0
        %v2991 = vsel %vm359, %v2854, 0
        %v2994 = vsel %vm359, %v2855, 0
        %v2997 = vsel %vm359, %v2856, 0
        %v3000 = vsel %vm359, %v2857, 0
        %v3003 = vsel %vm359, %v2858, 0
        %v3006 = vsel %vm359, %v2859, 0
        %v3009 = vsel %vm359, %v2860, 0
        %v3012 = vsel %vm359, %v2861, 0
        %v3015 = vsel %vm359, %v2862, 0
        %v3018 = vsel %vm359, %v2863, 0
        %v3021 = vsel %vm359, %v2864, 0
        %v3024 = vsel %vm359, %v2865, 0
        %v3027 = vsel %vm359, %v2866, 0
        %v3030 = vsel %vm359, %v2867, 0
        %v3033 = vsel %vm359, %v2868, 0
        %v3036 = vsel %vm359, %v2869, 0
        %v3039 = vsel %vm359, %v2870, 0
        %v3042 = vsel %vm359, %v2871, 0
        %v3045 = vsel %vm359, %v2872, 0
        %v3048 = vsel %vm359, %v2873, 0
        %v3051 = vsel %vm359, %v2874, 0
        %v3054 = vsel %vm359, %v2875, 0
        %v3057 = vsel %vm359, %v2876, 0
        %v3060 = vsel %vm359, %v2877, 0
        %v3063 = vsel %vm359, %v2878, 0
        %v3066 = vsel %vm359, %v2879, 0
        %v3069 = vsel %vm359, %v2880, 0
        %v3072 = vsel %vm359, %v2881, 0
        %v3075 = vsel %vm359, %v2882, 0
        %v3078 = vand.u32 %v2884, %v555
        %3080 = vmatprep.subr.bf16.mxu0 0
        %3081 = vmatpush1.bf16.msra.mxu0 %v3078
        %3082 = vmatprep.subr.bf16.mxu0 0
        %3083 = vmatpush1.bf16.msra.mxu0 0
        %3084 = vmatprep.subr.bf16.mxu0 0
        %3085 = vmatpush1.bf16.msra.mxu0 0
        %3086 = vmatprep.subr.bf16.mxu0 0
        %3087 = vmatpush1.bf16.msra.mxu0 0
        %3088 = vmatprep.subr.bf16.mxu0 0
        %3089 = vmatpush1.bf16.msra.mxu0 0
        %3090 = vmatprep.subr.bf16.mxu0 0
        %3091 = vmatpush1.bf16.msra.mxu0 0
        %3092 = vmatprep.subr.bf16.mxu0 0
        %3093 = vmatpush1.bf16.msra.mxu0 0
        %3094 = vmatprep.subr.bf16.mxu0 0
        %3095 = vmatpush1.bf16.msra.mxu0 0
        %3096 = vmatprep.subr.bf16.mxu0 0
        %3097 = vmatpush1.bf16.msra.mxu0 0
        %3098 = vmatprep.subr.bf16.mxu0 0
        %3099 = vmatpush1.bf16.msra.mxu0 0
        %3100 = vmatprep.subr.bf16.mxu0 0
        %3101 = vmatpush1.bf16.msra.mxu0 0
        %3102 = vmatprep.subr.bf16.mxu0 0
        %3103 = vmatpush1.bf16.msra.mxu0 0
        %3104 = vmatprep.subr.bf16.mxu0 0
        %3105 = vmatpush1.bf16.msra.mxu0 0
        %3106 = vmatprep.subr.bf16.mxu0 0
        %3107 = vmatpush1.bf16.msra.mxu0 0
        %3108 = vmatprep.subr.bf16.mxu0 0
        %3109 = vmatpush1.bf16.msra.mxu0 0
        %3110 = vmatprep.subr.bf16.mxu0 0
        %3111 = vmatpush1.bf16.msra.mxu0 0
        %3112 = vmatprep.mubr.f32.mxu0 0.0
        %3113 = vmatmul.mubr.f32.gmra.mrb[0].mxu0 %v2886
        %v3114 = vpop.f32.mrb[0].mxu0
        %v3115 = vadd.f32 0.0, %v3114
        %v3116 = vpop.f32.mrb[0].mxu0
        %3117 = vmatprep.mubr.f32.mxu0 0.0
        %3118 = vmatmul.mubr.f32.gmra.mrb[0].mxu0 %v2889
        %v3119 = vpop.f32.mrb[0].mxu0
        %v3120 = vadd.f32 0.0, %v3119
        %v3121 = vpop.f32.mrb[0].mxu0
        %3122 = vmatprep.mubr.f32.mxu0 0.0
        %3123 = vmatmul.mubr.f32.gmra.mrb[0].mxu0 %v2892
        %v3124 = vpop.f32.mrb[0].mxu0
        %v3125 = vadd.f32 0.0, %v3124
        %v3126 = vpop.f32.mrb[0].mxu0
        %3127 = vmatprep.mubr.f32.mxu0 0.0
        %3128 = vmatmul.mubr.f32.gmra.mrb[0].mxu0 %v2895
        %v3129 = vpop.f32.mrb[0].mxu0
        %v3130 = vadd.f32 0.0, %v3129
        %v3131 = vpop.f32.mrb[0].mxu0
        %3132 = vmatprep.mubr.f32.mxu0 0.0
        %3133 = vmatmul.mubr.f32.gmra.mrb[0].mxu0 %v2898
        %v3134 = vpop.f32.mrb[0].mxu0
        %v3135 = vadd.f32 0.0, %v3134
        %v3136 = vpop.f32.mrb[0].mxu0
        %3137 = vmatprep.mubr.f32.mxu0 0.0
        %3138 = vmatmul.mubr.f32.gmra.mrb[0].mxu0 %v2901
        %v3139 = vpop.f32.mrb[0].mxu0
        %v3140 = vadd.f32 0.0, %v3139
        %v3141 = vpop.f32.mrb[0].mxu0
        %3142 = vmatprep.mubr.f32.mxu0 0.0
        %3143 = vmatmul.mubr.f32.gmra.mrb[0].mxu0 %v2904
        %v3144 = vpop.f32.mrb[0].mxu0
        %v3145 = vadd.f32 0.0, %v3144
        %v3146 = vpop.f32.mrb[0].mxu0
        %3147 = vmatprep.mubr.f32.mxu0 0.0
        %3148 = vmatmul.mubr.f32.gmra.mrb[0].mxu0 %v2907
        %v3149 = vpop.f32.mrb[0].mxu0
        %v3150 = vadd.f32 0.0, %v3149
        %v3151 = vpop.f32.mrb[0].mxu0
        %3152 = vmatprep.mubr.f32.mxu0 0.0
        %3153 = vmatmul.mubr.f32.gmra.mrb[0].mxu0 %v2910
        %v3154 = vpop.f32.mrb[0].mxu0
        %v3155 = vadd.f32 0.0, %v3154
        %v3156 = vpop.f32.mrb[0].mxu0
        %3157 = vmatprep.mubr.f32.mxu0 0.0
        %3158 = vmatmul.mubr.f32.gmra.mrb[0].mxu0 %v2913
        %v3159 = vpop.f32.mrb[0].mxu0
        %v3160 = vadd.f32 0.0, %v3159
        %v3161 = vpop.f32.mrb[0].mxu0
        %3162 = vmatprep.mubr.f32.mxu0 0.0
        %3163 = vmatmul.mubr.f32.gmra.mrb[0].mxu0 %v2916
        %v3164 = vpop.f32.mrb[0].mxu0
        %v3165 = vadd.f32 0.0, %v3164
        %v3166 = vpop.f32.mrb[0].mxu0
        %3167 = vmatprep.mubr.f32.mxu0 0.0
        %3168 = vmatmul.mubr.f32.gmra.mrb[0].mxu0 %v2919
        %v3169 = vpop.f32.mrb[0].mxu0
        %v3170 = vadd.f32 0.0, %v3169
        %v3171 = vpop.f32.mrb[0].mxu0
        %3172 = vmatprep.mubr.f32.mxu0 0.0
        %3173 = vmatmul.mubr.f32.gmra.mrb[0].mxu0 %v2922
        %v3174 = vpop.f32.mrb[0].mxu0
        %v3175 = vadd.f32 0.0, %v3174
        %v3176 = vpop.f32.mrb[0].mxu0
        %3177 = vmatprep.mubr.f32.mxu0 0.0
        %3178 = vmatmul.mubr.f32.gmra.mrb[0].mxu0 %v2925
        %v3179 = vpop.f32.mrb[0].mxu0
        %v3180 = vadd.f32 0.0, %v3179
        %v3181 = vpop.f32.mrb[0].mxu0
        %3182 = vmatprep.mubr.f32.mxu0 0.0
        %3183 = vmatmul.mubr.f32.gmra.mrb[0].mxu0 %v2928
        %v3184 = vpop.f32.mrb[0].mxu0
        %v3185 = vadd.f32 0.0, %v3184
        %v3186 = vpop.f32.mrb[0].mxu0
        %3187 = vmatprep.mubr.f32.mxu0 0.0
        %3188 = vmatmul.mubr.f32.gmra.mrb[0].mxu0 %v2931
        %v3189 = vpop.f32.mrb[0].mxu0
        %v3190 = vadd.f32 0.0, %v3189
        %v3191 = vpop.f32.mrb[0].mxu0
        %3192 = vmatprep.mubr.f32.mxu0 0.0
        %3193 = vmatmul.mubr.f32.gmra.mrb[0].mxu0 %v2934
        %v3194 = vpop.f32.mrb[0].mxu0
        %v3195 = vadd.f32 0.0, %v3194
        %v3196 = vpop.f32.mrb[0].mxu0
        %3197 = vmatprep.mubr.f32.mxu0 0.0
        %3198 = vmatmul.mubr.f32.gmra.mrb[0].mxu0 %v2937
        %v3199 = vpop.f32.mrb[0].mxu0
        %v3200 = vadd.f32 0.0, %v3199
        %v3201 = vpop.f32.mrb[0].mxu0
        %3202 = vmatprep.mubr.f32.mxu0 0.0
        %3203 = vmatmul.mubr.f32.gmra.mrb[0].mxu0 %v2940
        %v3204 = vpop.f32.mrb[0].mxu0
        %v3205 = vadd.f32 0.0, %v3204
        %v3206 = vpop.f32.mrb[0].mxu0
        %3207 = vmatprep.mubr.f32.mxu0 0.0
        %3208 = vmatmul.mubr.f32.gmra.mrb[0].mxu0 %v2943
        %v3209 = vpop.f32.mrb[0].mxu0
        %v3210 = vadd.f32 0.0, %v3209
        %v3211 = vpop.f32.mrb[0].mxu0
        %3212 = vmatprep.mubr.f32.mxu0 0.0
        %3213 = vmatmul.mubr.f32.gmra.mrb[0].mxu0 %v2946
        %v3214 = vpop.f32.mrb[0].mxu0
        %v3215 = vadd.f32 0.0, %v3214
        %v3216 = vpop.f32.mrb[0].mxu0
        %3217 = vmatprep.mubr.f32.mxu0 0.0
        %3218 = vmatmul.mubr.f32.gmra.mrb[0].mxu0 %v2949
        %v3219 = vpop.f32.mrb[0].mxu0
        %v3220 = vadd.f32 0.0, %v3219
        %v3221 = vpop.f32.mrb[0].mxu0
        %3222 = vmatprep.mubr.f32.mxu0 0.0
        %3223 = vmatmul.mubr.f32.gmra.mrb[0].mxu0 %v2952
        %v3224 = vpop.f32.mrb[0].mxu0
        %v3225 = vadd.f32 0.0, %v3224
        %v3226 = vpop.f32.mrb[0].mxu0
        %3227 = vmatprep.mubr.f32.mxu0 0.0
        %3228 = vmatmul.mubr.f32.gmra.mrb[0].mxu0 %v2955
        %v3229 = vpop.f32.mrb[0].mxu0
        %v3230 = vadd.f32 0.0, %v3229
        %v3231 = vpop.f32.mrb[0].mxu0
        %3232 = vmatprep.mubr.f32.mxu0 0.0
        %3233 = vmatmul.mubr.f32.gmra.mrb[0].mxu0 %v2958
        %v3234 = vpop.f32.mrb[0].mxu0
        %v3235 = vadd.f32 0.0, %v3234
        %v3236 = vpop.f32.mrb[0].mxu0
        %3237 = vmatprep.mubr.f32.mxu0 0.0
        %3238 = vmatmul.mubr.f32.gmra.mrb[0].mxu0 %v2961
        %v3239 = vpop.f32.mrb[0].mxu0
        %v3240 = vadd.f32 0.0, %v3239
        %v3241 = vpop.f32.mrb[0].mxu0
        %3242 = vmatprep.mubr.f32.mxu0 0.0
        %3243 = vmatmul.mubr.f32.gmra.mrb[0].mxu0 %v2964
        %v3244 = vpop.f32.mrb[0].mxu0
        %v3245 = vadd.f32 0.0, %v3244
        %v3246 = vpop.f32.mrb[0].mxu0
        %3247 = vmatprep.mubr.f32.mxu0 0.0
        %3248 = vmatmul.mubr.f32.gmra.mrb[0].mxu0 %v2967
        %v3249 = vpop.f32.mrb[0].mxu0
        %v3250 = vadd.f32 0.0, %v3249
        %v3251 = vpop.f32.mrb[0].mxu0
        %3252 = vmatprep.mubr.f32.mxu0 0.0
        %3253 = vmatmul.mubr.f32.gmra.mrb[0].mxu0 %v2970
        %v3254 = vpop.f32.mrb[0].mxu0
        %v3255 = vadd.f32 0.0, %v3254
        %v3256 = vpop.f32.mrb[0].mxu0
        %3257 = vmatprep.mubr.f32.mxu0 0.0
        %3258 = vmatmul.mubr.f32.gmra.mrb[0].mxu0 %v2973
        %v3259 = vpop.f32.mrb[0].mxu0
        %v3260 = vadd.f32 0.0, %v3259
        %v3261 = vpop.f32.mrb[0].mxu0
        %3262 = vmatprep.mubr.f32.mxu0 0.0
        %3263 = vmatmul.mubr.f32.gmra.mrb[0].mxu0 %v2976
        %v3264 = vpop.f32.mrb[0].mxu0
        %v3265 = vadd.f32 0.0, %v3264
        %v3266 = vpop.f32.mrb[0].mxu0
        %3267 = vmatprep.mubr.f32.mxu0 0.0
        %3268 = vmatmul.mubr.f32.gmra.mrb[0].mxu0 %v2979
        %v3269 = vpop.f32.mrb[0].mxu0
        %v3270 = vadd.f32 0.0, %v3269
        %v3271 = vpop.f32.mrb[0].mxu0
        %3272 = vmatprep.mubr.f32.mxu0 0.0
        %3273 = vmatmul.mubr.f32.gmra.mrb[0].mxu0 %v2982
        %v3274 = vpop.f32.mrb[0].mxu0
        %v3275 = vadd.f32 0.0, %v3274
        %v3276 = vpop.f32.mrb[0].mxu0
        %3277 = vmatprep.mubr.f32.mxu0 0.0
        %3278 = vmatmul.mubr.f32.gmra.mrb[0].mxu0 %v2985
        %v3279 = vpop.f32.mrb[0].mxu0
        %v3280 = vadd.f32 0.0, %v3279
        %v3281 = vpop.f32.mrb[0].mxu0
        %3282 = vmatprep.mubr.f32.mxu0 0.0
        %3283 = vmatmul.mubr.f32.gmra.mrb[0].mxu0 %v2988
        %v3284 = vpop.f32.mrb[0].mxu0
        %v3285 = vadd.f32 0.0, %v3284
        %v3286 = vpop.f32.mrb[0].mxu0
        %3287 = vmatprep.mubr.f32.mxu0 0.0
        %3288 = vmatmul.mubr.f32.gmra.mrb[0].mxu0 %v2991
        %v3289 = vpop.f32.mrb[0].mxu0
        %v3290 = vadd.f32 0.0, %v3289
        %v3291 = vpop.f32.mrb[0].mxu0
        %3292 = vmatprep.mubr.f32.mxu0 0.0
        %3293 = vmatmul.mubr.f32.gmra.mrb[0].mxu0 %v2994
        %v3294 = vpop.f32.mrb[0].mxu0
        %v3295 = vadd.f32 0.0, %v3294
        %v3296 = vpop.f32.mrb[0].mxu0
        %3297 = vmatprep.mubr.f32.mxu0 0.0
        %3298 = vmatmul.mubr.f32.gmra.mrb[0].mxu0 %v2997
        %v3299 = vpop.f32.mrb[0].mxu0
        %v3300 = vadd.f32 0.0, %v3299
        %v3301 = vpop.f32.mrb[0].mxu0
        %3302 = vmatprep.mubr.f32.mxu0 0.0
        %3303 = vmatmul.mubr.f32.gmra.mrb[0].mxu0 %v3000
        %v3304 = vpop.f32.mrb[0].mxu0
        %v3305 = vadd.f32 0.0, %v3304
        %v3306 = vpop.f32.mrb[0].mxu0
        %3307 = vmatprep.mubr.f32.mxu0 0.0
        %3308 = vmatmul.mubr.f32.gmra.mrb[0].mxu0 %v3003
        %v3309 = vpop.f32.mrb[0].mxu0
        %v3310 = vadd.f32 0.0, %v3309
        %v3311 = vpop.f32.mrb[0].mxu0
        %3312 = vmatprep.mubr.f32.mxu0 0.0
        %3313 = vmatmul.mubr.f32.gmra.mrb[0].mxu0 %v3006
        %v3314 = vpop.f32.mrb[0].mxu0
        %v3315 = vadd.f32 0.0, %v3314
        %v3316 = vpop.f32.mrb[0].mxu0
        %3317 = vmatprep.mubr.f32.mxu0 0.0
        %3318 = vmatmul.mubr.f32.gmra.mrb[0].mxu0 %v3009
        %v3319 = vpop.f32.mrb[0].mxu0
        %v3320 = vadd.f32 0.0, %v3319
        %v3321 = vpop.f32.mrb[0].mxu0
        %3322 = vmatprep.mubr.f32.mxu0 0.0
        %3323 = vmatmul.mubr.f32.gmra.mrb[0].mxu0 %v3012
        %v3324 = vpop.f32.mrb[0].mxu0
        %v3325 = vadd.f32 0.0, %v3324
        %v3326 = vpop.f32.mrb[0].mxu0
        %3327 = vmatprep.mubr.f32.mxu0 0.0
        %3328 = vmatmul.mubr.f32.gmra.mrb[0].mxu0 %v3015
        %v3329 = vpop.f32.mrb[0].mxu0
        %v3330 = vadd.f32 0.0, %v3329
        %v3331 = vpop.f32.mrb[0].mxu0
        %3332 = vmatprep.mubr.f32.mxu0 0.0
        %3333 = vmatmul.mubr.f32.gmra.mrb[0].mxu0 %v3018
        %v3334 = vpop.f32.mrb[0].mxu0
        %v3335 = vadd.f32 0.0, %v3334
        %v3336 = vpop.f32.mrb[0].mxu0
        %3337 = vmatprep.mubr.f32.mxu0 0.0
        %3338 = vmatmul.mubr.f32.gmra.mrb[0].mxu0 %v3021
        %v3339 = vpop.f32.mrb[0].mxu0
        %v3340 = vadd.f32 0.0, %v3339
        %v3341 = vpop.f32.mrb[0].mxu0
        %3342 = vmatprep.mubr.f32.mxu0 0.0
        %3343 = vmatmul.mubr.f32.gmra.mrb[0].mxu0 %v3024
        %v3344 = vpop.f32.mrb[0].mxu0
        %v3345 = vadd.f32 0.0, %v3344
        %v3346 = vpop.f32.mrb[0].mxu0
        %3347 = vmatprep.mubr.f32.mxu0 0.0
        %3348 = vmatmul.mubr.f32.gmra.mrb[0].mxu0 %v3027
        %v3349 = vpop.f32.mrb[0].mxu0
        %v3350 = vadd.f32 0.0, %v3349
        %v3351 = vpop.f32.mrb[0].mxu0
        %3352 = vmatprep.mubr.f32.mxu0 0.0
        %3353 = vmatmul.mubr.f32.gmra.mrb[0].mxu0 %v3030
        %v3354 = vpop.f32.mrb[0].mxu0
        %v3355 = vadd.f32 0.0, %v3354
        %v3356 = vpop.f32.mrb[0].mxu0
        %3357 = vmatprep.mubr.f32.mxu0 0.0
        %3358 = vmatmul.mubr.f32.gmra.mrb[0].mxu0 %v3033
        %v3359 = vpop.f32.mrb[0].mxu0
        %v3360 = vadd.f32 0.0, %v3359
        %v3361 = vpop.f32.mrb[0].mxu0
        %3362 = vmatprep.mubr.f32.mxu0 0.0
        %3363 = vmatmul.mubr.f32.gmra.mrb[0].mxu0 %v3036
        %v3364 = vpop.f32.mrb[0].mxu0
        %v3365 = vadd.f32 0.0, %v3364
        %v3366 = vpop.f32.mrb[0].mxu0
        %3367 = vmatprep.mubr.f32.mxu0 0.0
        %3368 = vmatmul.mubr.f32.gmra.mrb[0].mxu0 %v3039
        %v3369 = vpop.f32.mrb[0].mxu0
        %v3370 = vadd.f32 0.0, %v3369
        %v3371 = vpop.f32.mrb[0].mxu0
        %3372 = vmatprep.mubr.f32.mxu0 0.0
        %3373 = vmatmul.mubr.f32.gmra.mrb[0].mxu0 %v3042
        %v3374 = vpop.f32.mrb[0].mxu0
        %v3375 = vadd.f32 0.0, %v3374
        %v3376 = vpop.f32.mrb[0].mxu0
        %3377 = vmatprep.mubr.f32.mxu0 0.0
        %3378 = vmatmul.mubr.f32.gmra.mrb[0].mxu0 %v3045
        %v3379 = vpop.f32.mrb[0].mxu0
        %v3380 = vadd.f32 0.0, %v3379
        %v3381 = vpop.f32.mrb[0].mxu0
        %3382 = vmatprep.mubr.f32.mxu0 0.0
        %3383 = vmatmul.mubr.f32.gmra.mrb[0].mxu0 %v3048
        %v3384 = vpop.f32.mrb[0].mxu0
        %v3385 = vadd.f32 0.0, %v3384
        %v3386 = vpop.f32.mrb[0].mxu0
        %3387 = vmatprep.mubr.f32.mxu0 0.0
        %3388 = vmatmul.mubr.f32.gmra.mrb[0].mxu0 %v3051
        %v3389 = vpop.f32.mrb[0].mxu0
        %v3390 = vadd.f32 0.0, %v3389
        %v3391 = vpop.f32.mrb[0].mxu0
        %3392 = vmatprep.mubr.f32.mxu0 0.0
        %3393 = vmatmul.mubr.f32.gmra.mrb[0].mxu0 %v3054
        %v3394 = vpop.f32.mrb[0].mxu0
        %v3395 = vadd.f32 0.0, %v3394
        %v3396 = vpop.f32.mrb[0].mxu0
        %3397 = vmatprep.mubr.f32.mxu0 0.0
        %3398 = vmatmul.mubr.f32.gmra.mrb[0].mxu0 %v3057
        %v3399 = vpop.f32.mrb[0].mxu0
        %v3400 = vadd.f32 0.0, %v3399
        %v3401 = vpop.f32.mrb[0].mxu0
        %3402 = vmatprep.mubr.f32.mxu0 0.0
        %3403 = vmatmul.mubr.f32.gmra.mrb[0].mxu0 %v3060
        %v3404 = vpop.f32.mrb[0].mxu0
        %v3405 = vadd.f32 0.0, %v3404
        %v3406 = vpop.f32.mrb[0].mxu0
        %3407 = vmatprep.mubr.f32.mxu0 0.0
        %3408 = vmatmul.mubr.f32.gmra.mrb[0].mxu0 %v3063
        %v3409 = vpop.f32.mrb[0].mxu0
        %v3410 = vadd.f32 0.0, %v3409
        %v3411 = vpop.f32.mrb[0].mxu0
        %3412 = vmatprep.mubr.f32.mxu0 0.0
        %3413 = vmatmul.mubr.f32.gmra.mrb[0].mxu0 %v3066
        %v3414 = vpop.f32.mrb[0].mxu0
        %v3415 = vadd.f32 0.0, %v3414
        %v3416 = vpop.f32.mrb[0].mxu0
        %3417 = vmatprep.mubr.f32.mxu0 0.0
        %3418 = vmatmul.mubr.f32.gmra.mrb[0].mxu0 %v3069
        %v3419 = vpop.f32.mrb[0].mxu0
        %v3420 = vadd.f32 0.0, %v3419
        %v3421 = vpop.f32.mrb[0].mxu0
        %3422 = vmatprep.mubr.f32.mxu0 0.0
        %3423 = vmatmul.mubr.f32.gmra.mrb[0].mxu0 %v3072
        %v3424 = vpop.f32.mrb[0].mxu0
        %v3425 = vadd.f32 0.0, %v3424
        %v3426 = vpop.f32.mrb[0].mxu0
        %3427 = vmatprep.mubr.f32.mxu0 0.0
        %3428 = vmatmul.mubr.f32.gmra.mrb[0].mxu0 %v3075
        %v3429 = vpop.f32.mrb[0].mxu0
        %v3430 = vadd.f32 0.0, %v3429
        %v3431 = vpop.f32.mrb[0].mxu0
        %3432 = vdwg.mxu0
        %v3433 = vadd.f32 %v2755, %v3115
        %v3434 = vadd.f32 %v2756, %v3120
        %v3435 = vadd.f32 %v2757, %v3125
        %v3436 = vadd.f32 %v2758, %v3130
        %v3437 = vadd.f32 %v2759, %v3135
        %v3438 = vadd.f32 %v2760, %v3140
        %v3439 = vadd.f32 %v2761, %v3145
        %v3440 = vadd.f32 %v2762, %v3150
        %v3441 = vadd.f32 %v2763, %v3155
        %v3442 = vadd.f32 %v2764, %v3160
        %v3443 = vadd.f32 %v2765, %v3165
        %v3444 = vadd.f32 %v2766, %v3170
        %v3445 = vadd.f32 %v2767, %v3175
        %v3446 = vadd.f32 %v2768, %v3180
        %v3447 = vadd.f32 %v2769, %v3185
        %v3448 = vadd.f32 %v2770, %v3190
        %v3449 = vadd.f32 %v2771, %v3195
        %v3450 = vadd.f32 %v2772, %v3200
        %v3451 = vadd.f32 %v2773, %v3205
        %v3452 = vadd.f32 %v2774, %v3210
        %v3453 = vadd.f32 %v2775, %v3215
        %v3454 = vadd.f32 %v2776, %v3220
        %v3455 = vadd.f32 %v2777, %v3225
        %v3456 = vadd.f32 %v2778, %v3230
        %v3457 = vadd.f32 %v2779, %v3235
        %v3458 = vadd.f32 %v2780, %v3240
        %v3459 = vadd.f32 %v2781, %v3245
        %v3460 = vadd.f32 %v2782, %v3250
        %v3461 = vadd.f32 %v2783, %v3255
        %v3462 = vadd.f32 %v2784, %v3260
        %v3463 = vadd.f32 %v2785, %v3265
        %v3464 = vadd.f32 %v2786, %v3270
        %v3465 = vadd.f32 %v2787, %v3275
        %v3466 = vadd.f32 %v2788, %v3280
        %v3467 = vadd.f32 %v2789, %v3285
        %v3468 = vadd.f32 %v2790, %v3290
        %v3469 = vadd.f32 %v2791, %v3295
        %v3470 = vadd.f32 %v2792, %v3300
        %v3471 = vadd.f32 %v2793, %v3305
        %v3472 = vadd.f32 %v2794, %v3310
        %v3473 = vadd.f32 %v2795, %v3315
        %v3474 = vadd.f32 %v2796, %v3320
        %v3475 = vadd.f32 %v2797, %v3325
        %v3476 = vadd.f32 %v2798, %v3330
        %v3477 = vadd.f32 %v2799, %v3335
        %v3478 = vadd.f32 %v2800, %v3340
        %v3479 = vadd.f32 %v2801, %v3345
        %v3480 = vadd.f32 %v2802, %v3350
        %v3481 = vadd.f32 %v2803, %v3355
        %v3482 = vadd.f32 %v2804, %v3360
        %v3483 = vadd.f32 %v2805, %v3365
        %v3484 = vadd.f32 %v2806, %v3370
        %v3485 = vadd.f32 %v2807, %v3375
        %v3486 = vadd.f32 %v2808, %v3380
        %v3487 = vadd.f32 %v2809, %v3385
        %v3488 = vadd.f32 %v2810, %v3390
        %v3489 = vadd.f32 %v2811, %v3395
        %v3490 = vadd.f32 %v2812, %v3400
        %v3491 = vadd.f32 %v2813, %v3405
        %v3492 = vadd.f32 %v2814, %v3410
        %v3493 = vadd.f32 %v2815, %v3415
        %v3494 = vadd.f32 %v2816, %v3420
        %v3495 = vadd.f32 %v2817, %v3425
        %v3496 = vadd.f32 %v2818, %v3430
        %v3497 = vld [vmem:[%s2140 + $0x2] sm:$0xff]
        %v3498 = vld [vmem:[%s2140 + $0xa] sm:$0xff]
        %v3499 = vld [vmem:[%s2140 + $0x12] sm:$0xff]
        %v3500 = vld [vmem:[%s2140 + $0x1a] sm:$0xff]
        %v3501 = vld [vmem:[%s2140 + $0x22] sm:$0xff]
        %v3502 = vld [vmem:[%s2140 + $0x2a] sm:$0xff]
        %v3503 = vld [vmem:[%s2140 + $0x32] sm:$0xff]
        %v3504 = vld [vmem:[%s2140 + $0x3a] sm:$0xff]
        %v3505 = vld [vmem:[%s2140 + $0x4a] sm:$0xff]
        %v3506 = vld [vmem:[%s2140 + $0x52] sm:$0xff]
        %v3507 = vld [vmem:[%s2140 + $0x5a] sm:$0xff]
        %v3508 = vld [vmem:[%s2140 + $0x62] sm:$0xff]
        %v3509 = vld [vmem:[%s2140 + $0x6a] sm:$0xff]
        %v3510 = vld [vmem:[%s2140 + $0x72] sm:$0xff]
        %v3511 = vld [vmem:[%s2140 + $0x7a] sm:$0xff]
        %v3512 = vld [vmem:[%s2140 + $0x82] sm:$0xff]
        %v3513 = vld [vmem:[%s2140 + $0x92] sm:$0xff]
        %v3514 = vld [vmem:[%s2140 + $0x9a] sm:$0xff]
        %v3515 = vld [vmem:[%s2140 + $0xa2] sm:$0xff]
        %v3516 = vld [vmem:[%s2140 + $0xaa] sm:$0xff]
        %v3517 = vld [vmem:[%s2140 + $0xb2] sm:$0xff]
        %v3518 = vld [vmem:[%s2140 + $0xba] sm:$0xff]
        %v3519 = vld [vmem:[%s2140 + $0xc2] sm:$0xff]
        %v3520 = vld [vmem:[%s2140 + $0xca] sm:$0xff]
        %v3521 = vld [vmem:[%s2140 + $0xda] sm:$0xff]
        %v3522 = vld [vmem:[%s2140 + $0xe2] sm:$0xff]
        %v3523 = vld [vmem:[%s2140 + $0xea] sm:$0xff]
        %v3524 = vld [vmem:[%s2140 + $0xf2] sm:$0xff]
        %v3525 = vld [vmem:[%s2140 + $0xfa] sm:$0xff]
        %v3526 = vld [vmem:[%s2140 + $0x102] sm:$0xff]
        %v3527 = vld [vmem:[%s2140 + $0x10a] sm:$0xff]
        %v3528 = vld [vmem:[%s2140 + $0x112] sm:$0xff]
        %v3529 = vld [vmem:[%s2140 + $0x122] sm:$0xff]
        %v3530 = vld [vmem:[%s2140 + $0x12a] sm:$0xff]
        %v3531 = vld [vmem:[%s2140 + $0x132] sm:$0xff]
        %v3532 = vld [vmem:[%s2140 + $0x13a] sm:$0xff]
        %v3533 = vld [vmem:[%s2140 + $0x142] sm:$0xff]
        %v3534 = vld [vmem:[%s2140 + $0x14a] sm:$0xff]
        %v3535 = vld [vmem:[%s2140 + $0x152] sm:$0xff]
        %v3536 = vld [vmem:[%s2140 + $0x15a] sm:$0xff]
        %v3537 = vld [vmem:[%s2140 + $0x16a] sm:$0xff]
        %v3538 = vld [vmem:[%s2140 + $0x172] sm:$0xff]
        %v3539 = vld [vmem:[%s2140 + $0x17a] sm:$0xff]
        %v3540 = vld [vmem:[%s2140 + $0x182] sm:$0xff]
        %v3541 = vld [vmem:[%s2140 + $0x18a] sm:$0xff]
        %v3542 = vld [vmem:[%s2140 + $0x192] sm:$0xff]
        %v3543 = vld [vmem:[%s2140 + $0x19a] sm:$0xff]
        %v3544 = vld [vmem:[%s2140 + $0x1a2] sm:$0xff]
        %v3545 = vld [vmem:[%s2140 + $0x1b2] sm:$0xff]
        %v3546 = vld [vmem:[%s2140 + $0x1ba] sm:$0xff]
        %v3547 = vld [vmem:[%s2140 + $0x1c2] sm:$0xff]
        %v3548 = vld [vmem:[%s2140 + $0x1ca] sm:$0xff]
        %v3549 = vld [vmem:[%s2140 + $0x1d2] sm:$0xff]
        %v3550 = vld [vmem:[%s2140 + $0x1da] sm:$0xff]
        %v3551 = vld [vmem:[%s2140 + $0x1e2] sm:$0xff]
        %v3552 = vld [vmem:[%s2140 + $0x1ea] sm:$0xff]
        %v3553 = vld [vmem:[%s2140 + $0x1fa] sm:$0xff]
        %v3554 = vld [vmem:[%s2140 + $0x202] sm:$0xff]
        %v3555 = vld [vmem:[%s2140 + $0x20a] sm:$0xff]
        %v3556 = vld [vmem:[%s2140 + $0x212] sm:$0xff]
        %v3557 = vld [vmem:[%s2140 + $0x21a] sm:$0xff]
        %v3558 = vld [vmem:[%s2140 + $0x222] sm:$0xff]
        %v3559 = vld [vmem:[%s2140 + $0x22a] sm:$0xff]
        %v3560 = vld [vmem:[%s2140 + $0x232] sm:$0xff]
        %s3561 = scalar_lea.vmem %s219, 10
        %v3562 = vld [vmem:[%s3561] sm:$0x3]
        %v3564 = vsel %vm359, %v3497, 0
        %v3567 = vsel %vm359, %v3498, 0
        %v3570 = vsel %vm359, %v3499, 0
        %v3573 = vsel %vm359, %v3500, 0
        %v3576 = vsel %vm359, %v3501, 0
        %v3579 = vsel %vm359, %v3502, 0
        %v3582 = vsel %vm359, %v3503, 0
        %v3585 = vsel %vm359, %v3504, 0
        %v3588 = vsel %vm359, %v3505, 0
        %v3591 = vsel %vm359, %v3506, 0
        %v3594 = vsel %vm359, %v3507, 0
        %v3597 = vsel %vm359, %v3508, 0
        %v3600 = vsel %vm359, %v3509, 0
        %v3603 = vsel %vm359, %v3510, 0
        %v3606 = vsel %vm359, %v3511, 0
        %v3609 = vsel %vm359, %v3512, 0
        %v3612 = vsel %vm359, %v3513, 0
        %v3615 = vsel %vm359, %v3514, 0
        %v3618 = vsel %vm359, %v3515, 0
        %v3621 = vsel %vm359, %v3516, 0
        %v3624 = vsel %vm359, %v3517, 0
        %v3627 = vsel %vm359, %v3518, 0
        %v3630 = vsel %vm359, %v3519, 0
        %v3633 = vsel %vm359, %v3520, 0
        %v3636 = vsel %vm359, %v3521, 0
        %v3639 = vsel %vm359, %v3522, 0
        %v3642 = vsel %vm359, %v3523, 0
        %v3645 = vsel %vm359, %v3524, 0
        %v3648 = vsel %vm359, %v3525, 0
        %v3651 = vsel %vm359, %v3526, 0
        %v3654 = vsel %vm359, %v3527, 0
        %v3657 = vsel %vm359, %v3528, 0
        %v3660 = vsel %vm359, %v3529, 0
        %v3663 = vsel %vm359, %v3530, 0
        %v3666 = vsel %vm359, %v3531, 0
        %v3669 = vsel %vm359, %v3532, 0
        %v3672 = vsel %vm359, %v3533, 0
        %v3675 = vsel %vm359, %v3534, 0
        %v3678 = vsel %vm359, %v3535, 0
        %v3681 = vsel %vm359, %v3536, 0
        %v3684 = vsel %vm359, %v3537, 0
        %v3687 = vsel %vm359, %v3538, 0
        %v3690 = vsel %vm359, %v3539, 0
        %v3693 = vsel %vm359, %v3540, 0
        %v3696 = vsel %vm359, %v3541, 0
        %v3699 = vsel %vm359, %v3542, 0
        %v3702 = vsel %vm359, %v3543, 0
        %v3705 = vsel %vm359, %v3544, 0
        %v3708 = vsel %vm359, %v3545, 0
        %v3711 = vsel %vm359, %v3546, 0
        %v3714 = vsel %vm359, %v3547, 0
        %v3717 = vsel %vm359, %v3548, 0
        %v3720 = vsel %vm359, %v3549, 0
        %v3723 = vsel %vm359, %v3550, 0
        %v3726 = vsel %vm359, %v3551, 0
        %v3729 = vsel %vm359, %v3552, 0
        %v3732 = vsel %vm359, %v3553, 0
        %v3735 = vsel %vm359, %v3554, 0
        %v3738 = vsel %vm359, %v3555, 0
        %v3741 = vsel %vm359, %v3556, 0
        %v3744 = vsel %vm359, %v3557, 0
        %v3747 = vsel %vm359, %v3558, 0
        %v3750 = vsel %vm359, %v3559, 0
        %v3753 = vsel %vm359, %v3560, 0
        %v3756 = vand.u32 %v3562, %v555
        %3758 = vmatprep.subr.bf16.mxu0 0
        %3759 = vmatpush1.bf16.msra.mxu0 %v3756
        %3760 = vmatprep.subr.bf16.mxu0 0
        %3761 = vmatpush1.bf16.msra.mxu0 0
        %3762 = vmatprep.subr.bf16.mxu0 0
        %3763 = vmatpush1.bf16.msra.mxu0 0
        %3764 = vmatprep.subr.bf16.mxu0 0
        %3765 = vmatpush1.bf16.msra.mxu0 0
        %3766 = vmatprep.subr.bf16.mxu0 0
        %3767 = vmatpush1.bf16.msra.mxu0 0
        %3768 = vmatprep.subr.bf16.mxu0 0
        %3769 = vmatpush1.bf16.msra.mxu0 0
        %3770 = vmatprep.subr.bf16.mxu0 0
        %3771 = vmatpush1.bf16.msra.mxu0 0
        %3772 = vmatprep.subr.bf16.mxu0 0
        %3773 = vmatpush1.bf16.msra.mxu0 0
        %3774 = vmatprep.subr.bf16.mxu0 0
        %3775 = vmatpush1.bf16.msra.mxu0 0
        %3776 = vmatprep.subr.bf16.mxu0 0
        %3777 = vmatpush1.bf16.msra.mxu0 0
        %3778 = vmatprep.subr.bf16.mxu0 0
        %3779 = vmatpush1.bf16.msra.mxu0 0
        %3780 = vmatprep.subr.bf16.mxu0 0
        %3781 = vmatpush1.bf16.msra.mxu0 0
        %3782 = vmatprep.subr.bf16.mxu0 0
        %3783 = vmatpush1.bf16.msra.mxu0 0
        %3784 = vmatprep.subr.bf16.mxu0 0
        %3785 = vmatpush1.bf16.msra.mxu0 0
        %3786 = vmatprep.subr.bf16.mxu0 0
        %3787 = vmatpush1.bf16.msra.mxu0 0
        %3788 = vmatprep.subr.bf16.mxu0 0
        %3789 = vmatpush1.bf16.msra.mxu0 0
        %3790 = vmatprep.mubr.f32.mxu0 0.0
        %3791 = vmatmul.mubr.f32.gmra.mrb[0].mxu0 %v3564
        %v3792 = vpop.f32.mrb[0].mxu0
        %v3793 = vadd.f32 0.0, %v3792
        %v3794 = vpop.f32.mrb[0].mxu0
        %3795 = vmatprep.mubr.f32.mxu0 0.0
        %3796 = vmatmul.mubr.f32.gmra.mrb[0].mxu0 %v3567
        %v3797 = vpop.f32.mrb[0].mxu0
        %v3798 = vadd.f32 0.0, %v3797
        %v3799 = vpop.f32.mrb[0].mxu0
        %3800 = vmatprep.mubr.f32.mxu0 0.0
        %3801 = vmatmul.mubr.f32.gmra.mrb[0].mxu0 %v3570
        %v3802 = vpop.f32.mrb[0].mxu0
        %v3803 = vadd.f32 0.0, %v3802
        %v3804 = vpop.f32.mrb[0].mxu0
        %3805 = vmatprep.mubr.f32.mxu0 0.0
        %3806 = vmatmul.mubr.f32.gmra.mrb[0].mxu0 %v3573
        %v3807 = vpop.f32.mrb[0].mxu0
        %v3808 = vadd.f32 0.0, %v3807
        %v3809 = vpop.f32.mrb[0].mxu0
        %3810 = vmatprep.mubr.f32.mxu0 0.0
        %3811 = vmatmul.mubr.f32.gmra.mrb[0].mxu0 %v3576
        %v3812 = vpop.f32.mrb[0].mxu0
        %v3813 = vadd.f32 0.0, %v3812
        %v3814 = vpop.f32.mrb[0].mxu0
        %3815 = vmatprep.mubr.f32.mxu0 0.0
        %3816 = vmatmul.mubr.f32.gmra.mrb[0].mxu0 %v3579
        %v3817 = vpop.f32.mrb[0].mxu0
        %v3818 = vadd.f32 0.0, %v3817
        %v3819 = vpop.f32.mrb[0].mxu0
        %3820 = vmatprep.mubr.f32.mxu0 0.0
        %3821 = vmatmul.mubr.f32.gmra.mrb[0].mxu0 %v3582
        %v3822 = vpop.f32.mrb[0].mxu0
        %v3823 = vadd.f32 0.0, %v3822
        %v3824 = vpop.f32.mrb[0].mxu0
        %3825 = vmatprep.mubr.f32.mxu0 0.0
        %3826 = vmatmul.mubr.f32.gmra.mrb[0].mxu0 %v3585
        %v3827 = vpop.f32.mrb[0].mxu0
        %v3828 = vadd.f32 0.0, %v3827
        %v3829 = vpop.f32.mrb[0].mxu0
        %3830 = vmatprep.mubr.f32.mxu0 0.0
        %3831 = vmatmul.mubr.f32.gmra.mrb[0].mxu0 %v3588
        %v3832 = vpop.f32.mrb[0].mxu0
        %v3833 = vadd.f32 0.0, %v3832
        %v3834 = vpop.f32.mrb[0].mxu0
        %3835 = vmatprep.mubr.f32.mxu0 0.0
        %3836 = vmatmul.mubr.f32.gmra.mrb[0].mxu0 %v3591
        %v3837 = vpop.f32.mrb[0].mxu0
        %v3838 = vadd.f32 0.0, %v3837
        %v3839 = vpop.f32.mrb[0].mxu0
        %3840 = vmatprep.mubr.f32.mxu0 0.0
        %3841 = vmatmul.mubr.f32.gmra.mrb[0].mxu0 %v3594
        %v3842 = vpop.f32.mrb[0].mxu0
        %v3843 = vadd.f32 0.0, %v3842
        %v3844 = vpop.f32.mrb[0].mxu0
        %3845 = vmatprep.mubr.f32.mxu0 0.0
        %3846 = vmatmul.mubr.f32.gmra.mrb[0].mxu0 %v3597
        %v3847 = vpop.f32.mrb[0].mxu0
        %v3848 = vadd.f32 0.0, %v3847
        %v3849 = vpop.f32.mrb[0].mxu0
        %3850 = vmatprep.mubr.f32.mxu0 0.0
        %3851 = vmatmul.mubr.f32.gmra.mrb[0].mxu0 %v3600
        %v3852 = vpop.f32.mrb[0].mxu0
        %v3853 = vadd.f32 0.0, %v3852
        %v3854 = vpop.f32.mrb[0].mxu0
        %3855 = vmatprep.mubr.f32.mxu0 0.0
        %3856 = vmatmul.mubr.f32.gmra.mrb[0].mxu0 %v3603
        %v3857 = vpop.f32.mrb[0].mxu0
        %v3858 = vadd.f32 0.0, %v3857
        %v3859 = vpop.f32.mrb[0].mxu0
        %3860 = vmatprep.mubr.f32.mxu0 0.0
        %3861 = vmatmul.mubr.f32.gmra.mrb[0].mxu0 %v3606
        %v3862 = vpop.f32.mrb[0].mxu0
        %v3863 = vadd.f32 0.0, %v3862
        %v3864 = vpop.f32.mrb[0].mxu0
        %3865 = vmatprep.mubr.f32.mxu0 0.0
        %3866 = vmatmul.mubr.f32.gmra.mrb[0].mxu0 %v3609
        %v3867 = vpop.f32.mrb[0].mxu0
        %v3868 = vadd.f32 0.0, %v3867
        %v3869 = vpop.f32.mrb[0].mxu0
        %3870 = vmatprep.mubr.f32.mxu0 0.0
        %3871 = vmatmul.mubr.f32.gmra.mrb[0].mxu0 %v3612
        %v3872 = vpop.f32.mrb[0].mxu0
        %v3873 = vadd.f32 0.0, %v3872
        %v3874 = vpop.f32.mrb[0].mxu0
        %3875 = vmatprep.mubr.f32.mxu0 0.0
        %3876 = vmatmul.mubr.f32.gmra.mrb[0].mxu0 %v3615
        %v3877 = vpop.f32.mrb[0].mxu0
        %v3878 = vadd.f32 0.0, %v3877
        %v3879 = vpop.f32.mrb[0].mxu0
        %3880 = vmatprep.mubr.f32.mxu0 0.0
        %3881 = vmatmul.mubr.f32.gmra.mrb[0].mxu0 %v3618
        %v3882 = vpop.f32.mrb[0].mxu0
        %v3883 = vadd.f32 0.0, %v3882
        %v3884 = vpop.f32.mrb[0].mxu0
        %3885 = vmatprep.mubr.f32.mxu0 0.0
        %3886 = vmatmul.mubr.f32.gmra.mrb[0].mxu0 %v3621
        %v3887 = vpop.f32.mrb[0].mxu0
        %v3888 = vadd.f32 0.0, %v3887
        %v3889 = vpop.f32.mrb[0].mxu0
        %3890 = vmatprep.mubr.f32.mxu0 0.0
        %3891 = vmatmul.mubr.f32.gmra.mrb[0].mxu0 %v3624
        %v3892 = vpop.f32.mrb[0].mxu0
        %v3893 = vadd.f32 0.0, %v3892
        %v3894 = vpop.f32.mrb[0].mxu0
        %3895 = vmatprep.mubr.f32.mxu0 0.0
        %3896 = vmatmul.mubr.f32.gmra.mrb[0].mxu0 %v3627
        %v3897 = vpop.f32.mrb[0].mxu0
        %v3898 = vadd.f32 0.0, %v3897
        %v3899 = vpop.f32.mrb[0].mxu0
        %3900 = vmatprep.mubr.f32.mxu0 0.0
        %3901 = vmatmul.mubr.f32.gmra.mrb[0].mxu0 %v3630
        %v3902 = vpop.f32.mrb[0].mxu0
        %v3903 = vadd.f32 0.0, %v3902
        %v3904 = vpop.f32.mrb[0].mxu0
        %3905 = vmatprep.mubr.f32.mxu0 0.0
        %3906 = vmatmul.mubr.f32.gmra.mrb[0].mxu0 %v3633
        %v3907 = vpop.f32.mrb[0].mxu0
        %v3908 = vadd.f32 0.0, %v3907
        %v3909 = vpop.f32.mrb[0].mxu0
        %3910 = vmatprep.mubr.f32.mxu0 0.0
        %3911 = vmatmul.mubr.f32.gmra.mrb[0].mxu0 %v3636
        %v3912 = vpop.f32.mrb[0].mxu0
        %v3913 = vadd.f32 0.0, %v3912
        %v3914 = vpop.f32.mrb[0].mxu0
        %3915 = vmatprep.mubr.f32.mxu0 0.0
        %3916 = vmatmul.mubr.f32.gmra.mrb[0].mxu0 %v3639
        %v3917 = vpop.f32.mrb[0].mxu0
        %v3918 = vadd.f32 0.0, %v3917
        %v3919 = vpop.f32.mrb[0].mxu0
        %3920 = vmatprep.mubr.f32.mxu0 0.0
        %3921 = vmatmul.mubr.f32.gmra.mrb[0].mxu0 %v3642
        %v3922 = vpop.f32.mrb[0].mxu0
        %v3923 = vadd.f32 0.0, %v3922
        %v3924 = vpop.f32.mrb[0].mxu0
        %3925 = vmatprep.mubr.f32.mxu0 0.0
        %3926 = vmatmul.mubr.f32.gmra.mrb[0].mxu0 %v3645
        %v3927 = vpop.f32.mrb[0].mxu0
        %v3928 = vadd.f32 0.0, %v3927
        %v3929 = vpop.f32.mrb[0].mxu0
        %3930 = vmatprep.mubr.f32.mxu0 0.0
        %3931 = vmatmul.mubr.f32.gmra.mrb[0].mxu0 %v3648
        %v3932 = vpop.f32.mrb[0].mxu0
        %v3933 = vadd.f32 0.0, %v3932
        %v3934 = vpop.f32.mrb[0].mxu0
        %3935 = vmatprep.mubr.f32.mxu0 0.0
        %3936 = vmatmul.mubr.f32.gmra.mrb[0].mxu0 %v3651
        %v3937 = vpop.f32.mrb[0].mxu0
        %v3938 = vadd.f32 0.0, %v3937
        %v3939 = vpop.f32.mrb[0].mxu0
        %3940 = vmatprep.mubr.f32.mxu0 0.0
        %3941 = vmatmul.mubr.f32.gmra.mrb[0].mxu0 %v3654
        %v3942 = vpop.f32.mrb[0].mxu0
        %v3943 = vadd.f32 0.0, %v3942
        %v3944 = vpop.f32.mrb[0].mxu0
        %3945 = vmatprep.mubr.f32.mxu0 0.0
        %3946 = vmatmul.mubr.f32.gmra.mrb[0].mxu0 %v3657
        %v3947 = vpop.f32.mrb[0].mxu0
        %v3948 = vadd.f32 0.0, %v3947
        %v3949 = vpop.f32.mrb[0].mxu0
        %3950 = vmatprep.mubr.f32.mxu0 0.0
        %3951 = vmatmul.mubr.f32.gmra.mrb[0].mxu0 %v3660
        %v3952 = vpop.f32.mrb[0].mxu0
        %v3953 = vadd.f32 0.0, %v3952
        %v3954 = vpop.f32.mrb[0].mxu0
        %3955 = vmatprep.mubr.f32.mxu0 0.0
        %3956 = vmatmul.mubr.f32.gmra.mrb[0].mxu0 %v3663
        %v3957 = vpop.f32.mrb[0].mxu0
        %v3958 = vadd.f32 0.0, %v3957
        %v3959 = vpop.f32.mrb[0].mxu0
        %3960 = vmatprep.mubr.f32.mxu0 0.0
        %3961 = vmatmul.mubr.f32.gmra.mrb[0].mxu0 %v3666
        %v3962 = vpop.f32.mrb[0].mxu0
        %v3963 = vadd.f32 0.0, %v3962
        %v3964 = vpop.f32.mrb[0].mxu0
        %3965 = vmatprep.mubr.f32.mxu0 0.0
        %3966 = vmatmul.mubr.f32.gmra.mrb[0].mxu0 %v3669
        %v3967 = vpop.f32.mrb[0].mxu0
        %v3968 = vadd.f32 0.0, %v3967
        %v3969 = vpop.f32.mrb[0].mxu0
        %3970 = vmatprep.mubr.f32.mxu0 0.0
        %3971 = vmatmul.mubr.f32.gmra.mrb[0].mxu0 %v3672
        %v3972 = vpop.f32.mrb[0].mxu0
        %v3973 = vadd.f32 0.0, %v3972
        %v3974 = vpop.f32.mrb[0].mxu0
        %3975 = vmatprep.mubr.f32.mxu0 0.0
        %3976 = vmatmul.mubr.f32.gmra.mrb[0].mxu0 %v3675
        %v3977 = vpop.f32.mrb[0].mxu0
        %v3978 = vadd.f32 0.0, %v3977
        %v3979 = vpop.f32.mrb[0].mxu0
        %3980 = vmatprep.mubr.f32.mxu0 0.0
        %3981 = vmatmul.mubr.f32.gmra.mrb[0].mxu0 %v3678
        %v3982 = vpop.f32.mrb[0].mxu0
        %v3983 = vadd.f32 0.0, %v3982
        %v3984 = vpop.f32.mrb[0].mxu0
        %3985 = vmatprep.mubr.f32.mxu0 0.0
        %3986 = vmatmul.mubr.f32.gmra.mrb[0].mxu0 %v3681
        %v3987 = vpop.f32.mrb[0].mxu0
        %v3988 = vadd.f32 0.0, %v3987
        %v3989 = vpop.f32.mrb[0].mxu0
        %3990 = vmatprep.mubr.f32.mxu0 0.0
        %3991 = vmatmul.mubr.f32.gmra.mrb[0].mxu0 %v3684
        %v3992 = vpop.f32.mrb[0].mxu0
        %v3993 = vadd.f32 0.0, %v3992
        %v3994 = vpop.f32.mrb[0].mxu0
        %3995 = vmatprep.mubr.f32.mxu0 0.0
        %3996 = vmatmul.mubr.f32.gmra.mrb[0].mxu0 %v3687
        %v3997 = vpop.f32.mrb[0].mxu0
        %v3998 = vadd.f32 0.0, %v3997
        %v3999 = vpop.f32.mrb[0].mxu0
        %4000 = vmatprep.mubr.f32.mxu0 0.0
        %4001 = vmatmul.mubr.f32.gmra.mrb[0].mxu0 %v3690
        %v4002 = vpop.f32.mrb[0].mxu0
        %v4003 = vadd.f32 0.0, %v4002
        %v4004 = vpop.f32.mrb[0].mxu0
        %4005 = vmatprep.mubr.f32.mxu0 0.0
        %4006 = vmatmul.mubr.f32.gmra.mrb[0].mxu0 %v3693
        %v4007 = vpop.f32.mrb[0].mxu0
        %v4008 = vadd.f32 0.0, %v4007
        %v4009 = vpop.f32.mrb[0].mxu0
        %4010 = vmatprep.mubr.f32.mxu0 0.0
        %4011 = vmatmul.mubr.f32.gmra.mrb[0].mxu0 %v3696
        %v4012 = vpop.f32.mrb[0].mxu0
        %v4013 = vadd.f32 0.0, %v4012
        %v4014 = vpop.f32.mrb[0].mxu0
        %4015 = vmatprep.mubr.f32.mxu0 0.0
        %4016 = vmatmul.mubr.f32.gmra.mrb[0].mxu0 %v3699
        %v4017 = vpop.f32.mrb[0].mxu0
        %v4018 = vadd.f32 0.0, %v4017
        %v4019 = vpop.f32.mrb[0].mxu0
        %4020 = vmatprep.mubr.f32.mxu0 0.0
        %4021 = vmatmul.mubr.f32.gmra.mrb[0].mxu0 %v3702
        %v4022 = vpop.f32.mrb[0].mxu0
        %v4023 = vadd.f32 0.0, %v4022
        %v4024 = vpop.f32.mrb[0].mxu0
        %4025 = vmatprep.mubr.f32.mxu0 0.0
        %4026 = vmatmul.mubr.f32.gmra.mrb[0].mxu0 %v3705
        %v4027 = vpop.f32.mrb[0].mxu0
        %v4028 = vadd.f32 0.0, %v4027
        %v4029 = vpop.f32.mrb[0].mxu0
        %4030 = vmatprep.mubr.f32.mxu0 0.0
        %4031 = vmatmul.mubr.f32.gmra.mrb[0].mxu0 %v3708
        %v4032 = vpop.f32.mrb[0].mxu0
        %v4033 = vadd.f32 0.0, %v4032
        %v4034 = vpop.f32.mrb[0].mxu0
        %4035 = vmatprep.mubr.f32.mxu0 0.0
        %4036 = vmatmul.mubr.f32.gmra.mrb[0].mxu0 %v3711
        %v4037 = vpop.f32.mrb[0].mxu0
        %v4038 = vadd.f32 0.0, %v4037
        %v4039 = vpop.f32.mrb[0].mxu0
        %4040 = vmatprep.mubr.f32.mxu0 0.0
        %4041 = vmatmul.mubr.f32.gmra.mrb[0].mxu0 %v3714
        %v4042 = vpop.f32.mrb[0].mxu0
        %v4043 = vadd.f32 0.0, %v4042
        %v4044 = vpop.f32.mrb[0].mxu0
        %4045 = vmatprep.mubr.f32.mxu0 0.0
        %4046 = vmatmul.mubr.f32.gmra.mrb[0].mxu0 %v3717
        %v4047 = vpop.f32.mrb[0].mxu0
        %v4048 = vadd.f32 0.0, %v4047
        %v4049 = vpop.f32.mrb[0].mxu0
        %4050 = vmatprep.mubr.f32.mxu0 0.0
        %4051 = vmatmul.mubr.f32.gmra.mrb[0].mxu0 %v3720
        %v4052 = vpop.f32.mrb[0].mxu0
        %v4053 = vadd.f32 0.0, %v4052
        %v4054 = vpop.f32.mrb[0].mxu0
        %4055 = vmatprep.mubr.f32.mxu0 0.0
        %4056 = vmatmul.mubr.f32.gmra.mrb[0].mxu0 %v3723
        %v4057 = vpop.f32.mrb[0].mxu0
        %v4058 = vadd.f32 0.0, %v4057
        %v4059 = vpop.f32.mrb[0].mxu0
        %4060 = vmatprep.mubr.f32.mxu0 0.0
        %4061 = vmatmul.mubr.f32.gmra.mrb[0].mxu0 %v3726
        %v4062 = vpop.f32.mrb[0].mxu0
        %v4063 = vadd.f32 0.0, %v4062
        %v4064 = vpop.f32.mrb[0].mxu0
        %4065 = vmatprep.mubr.f32.mxu0 0.0
        %4066 = vmatmul.mubr.f32.gmra.mrb[0].mxu0 %v3729
        %v4067 = vpop.f32.mrb[0].mxu0
        %v4068 = vadd.f32 0.0, %v4067
        %v4069 = vpop.f32.mrb[0].mxu0
        %4070 = vmatprep.mubr.f32.mxu0 0.0
        %4071 = vmatmul.mubr.f32.gmra.mrb[0].mxu0 %v3732
        %v4072 = vpop.f32.mrb[0].mxu0
        %v4073 = vadd.f32 0.0, %v4072
        %v4074 = vpop.f32.mrb[0].mxu0
        %4075 = vmatprep.mubr.f32.mxu0 0.0
        %4076 = vmatmul.mubr.f32.gmra.mrb[0].mxu0 %v3735
        %v4077 = vpop.f32.mrb[0].mxu0
        %v4078 = vadd.f32 0.0, %v4077
        %v4079 = vpop.f32.mrb[0].mxu0
        %4080 = vmatprep.mubr.f32.mxu0 0.0
        %4081 = vmatmul.mubr.f32.gmra.mrb[0].mxu0 %v3738
        %v4082 = vpop.f32.mrb[0].mxu0
        %v4083 = vadd.f32 0.0, %v4082
        %v4084 = vpop.f32.mrb[0].mxu0
        %4085 = vmatprep.mubr.f32.mxu0 0.0
        %4086 = vmatmul.mubr.f32.gmra.mrb[0].mxu0 %v3741
        %v4087 = vpop.f32.mrb[0].mxu0
        %v4088 = vadd.f32 0.0, %v4087
        %v4089 = vpop.f32.mrb[0].mxu0
        %4090 = vmatprep.mubr.f32.mxu0 0.0
        %4091 = vmatmul.mubr.f32.gmra.mrb[0].mxu0 %v3744
        %v4092 = vpop.f32.mrb[0].mxu0
        %v4093 = vadd.f32 0.0, %v4092
        %v4094 = vpop.f32.mrb[0].mxu0
        %4095 = vmatprep.mubr.f32.mxu0 0.0
        %4096 = vmatmul.mubr.f32.gmra.mrb[0].mxu0 %v3747
        %v4097 = vpop.f32.mrb[0].mxu0
        %v4098 = vadd.f32 0.0, %v4097
        %v4099 = vpop.f32.mrb[0].mxu0
        %4100 = vmatprep.mubr.f32.mxu0 0.0
        %4101 = vmatmul.mubr.f32.gmra.mrb[0].mxu0 %v3750
        %v4102 = vpop.f32.mrb[0].mxu0
        %v4103 = vadd.f32 0.0, %v4102
        %v4104 = vpop.f32.mrb[0].mxu0
        %4105 = vmatprep.mubr.f32.mxu0 0.0
        %4106 = vmatmul.mubr.f32.gmra.mrb[0].mxu0 %v3753
        %v4107 = vpop.f32.mrb[0].mxu0
        %v4108 = vadd.f32 0.0, %v4107
        %v4109 = vpop.f32.mrb[0].mxu0
        %4110 = vdwg.mxu0
        %v4111 = vadd.f32 %v3433, %v3793
        %v4112 = vadd.f32 %v3434, %v3798
        %v4113 = vadd.f32 %v3435, %v3803
        %v4114 = vadd.f32 %v3436, %v3808
        %v4115 = vadd.f32 %v3437, %v3813
        %v4116 = vadd.f32 %v3438, %v3818
        %v4117 = vadd.f32 %v3439, %v3823
        %v4118 = vadd.f32 %v3440, %v3828
        %v4119 = vadd.f32 %v3441, %v3833
        %v4120 = vadd.f32 %v3442, %v3838
        %v4121 = vadd.f32 %v3443, %v3843
        %v4122 = vadd.f32 %v3444, %v3848
        %v4123 = vadd.f32 %v3445, %v3853
        %v4124 = vadd.f32 %v3446, %v3858
        %v4125 = vadd.f32 %v3447, %v3863
        %v4126 = vadd.f32 %v3448, %v3868
        %v4127 = vadd.f32 %v3449, %v3873
        %v4128 = vadd.f32 %v3450, %v3878
        %v4129 = vadd.f32 %v3451, %v3883
        %v4130 = vadd.f32 %v3452, %v3888
        %v4131 = vadd.f32 %v3453, %v3893
        %v4132 = vadd.f32 %v3454, %v3898
        %v4133 = vadd.f32 %v3455, %v3903
        %v4134 = vadd.f32 %v3456, %v3908
        %v4135 = vadd.f32 %v3457, %v3913
        %v4136 = vadd.f32 %v3458, %v3918
        %v4137 = vadd.f32 %v3459, %v3923
        %v4138 = vadd.f32 %v3460, %v3928
        %v4139 = vadd.f32 %v3461, %v3933
        %v4140 = vadd.f32 %v3462, %v3938
        %v4141 = vadd.f32 %v3463, %v3943
        %v4142 = vadd.f32 %v3464, %v3948
        %v4143 = vadd.f32 %v3465, %v3953
        %v4144 = vadd.f32 %v3466, %v3958
        %v4145 = vadd.f32 %v3467, %v3963
        %v4146 = vadd.f32 %v3468, %v3968
        %v4147 = vadd.f32 %v3469, %v3973
        %v4148 = vadd.f32 %v3470, %v3978
        %v4149 = vadd.f32 %v3471, %v3983
        %v4150 = vadd.f32 %v3472, %v3988
        %v4151 = vadd.f32 %v3473, %v3993
        %v4152 = vadd.f32 %v3474, %v3998
        %v4153 = vadd.f32 %v3475, %v4003
        %v4154 = vadd.f32 %v3476, %v4008
        %v4155 = vadd.f32 %v3477, %v4013
        %v4156 = vadd.f32 %v3478, %v4018
        %v4157 = vadd.f32 %v3479, %v4023
        %v4158 = vadd.f32 %v3480, %v4028
        %v4159 = vadd.f32 %v3481, %v4033
        %v4160 = vadd.f32 %v3482, %v4038
        %v4161 = vadd.f32 %v3483, %v4043
        %v4162 = vadd.f32 %v3484, %v4048
        %v4163 = vadd.f32 %v3485, %v4053
        %v4164 = vadd.f32 %v3486, %v4058
        %v4165 = vadd.f32 %v3487, %v4063
        %v4166 = vadd.f32 %v3488, %v4068
        %v4167 = vadd.f32 %v3489, %v4073
        %v4168 = vadd.f32 %v3490, %v4078
        %v4169 = vadd.f32 %v3491, %v4083
        %v4170 = vadd.f32 %v3492, %v4088
        %v4171 = vadd.f32 %v3493, %v4093
        %v4172 = vadd.f32 %v3494, %v4098
        %v4173 = vadd.f32 %v3495, %v4103
        %v4174 = vadd.f32 %v3496, %v4108
        %s4175 = sadd.s32 %s225, 2
        %s4176 = smul.u32 %s4175, 72
        %s4177 = scalar_lea.vmem %s215, %s4176
        %v4178 = vld [vmem:[%s4177] sm:$0xff]
        %v4179 = vld [vmem:[%s4177 + $0x8] sm:$0xff]
        %v4180 = vld [vmem:[%s4177 + $0x10] sm:$0xff]
        %v4181 = vld [vmem:[%s4177 + $0x18] sm:$0xff]
        %v4182 = vld [vmem:[%s4177 + $0x20] sm:$0xff]
        %v4183 = vld [vmem:[%s4177 + $0x28] sm:$0xff]
        %v4184 = vld [vmem:[%s4177 + $0x30] sm:$0xff]
        %v4185 = vld [vmem:[%s4177 + $0x38] sm:$0xff]
        %v4186 = vld [vmem:[%s4177 + $0x48] sm:$0xff]
        %v4187 = vld [vmem:[%s4177 + $0x50] sm:$0xff]
        %v4188 = vld [vmem:[%s4177 + $0x58] sm:$0xff]
        %v4189 = vld [vmem:[%s4177 + $0x60] sm:$0xff]
        %v4190 = vld [vmem:[%s4177 + $0x68] sm:$0xff]
        %v4191 = vld [vmem:[%s4177 + $0x70] sm:$0xff]
        %v4192 = vld [vmem:[%s4177 + $0x78] sm:$0xff]
        %v4193 = vld [vmem:[%s4177 + $0x80] sm:$0xff]
        %v4194 = vld [vmem:[%s4177 + $0x90] sm:$0xff]
        %v4195 = vld [vmem:[%s4177 + $0x98] sm:$0xff]
        %v4196 = vld [vmem:[%s4177 + $0xa0] sm:$0xff]
        %v4197 = vld [vmem:[%s4177 + $0xa8] sm:$0xff]
        %v4198 = vld [vmem:[%s4177 + $0xb0] sm:$0xff]
        %v4199 = vld [vmem:[%s4177 + $0xb8] sm:$0xff]
        %v4200 = vld [vmem:[%s4177 + $0xc0] sm:$0xff]
        %v4201 = vld [vmem:[%s4177 + $0xc8] sm:$0xff]
        %v4202 = vld [vmem:[%s4177 + $0xd8] sm:$0xff]
        %v4203 = vld [vmem:[%s4177 + $0xe0] sm:$0xff]
        %v4204 = vld [vmem:[%s4177 + $0xe8] sm:$0xff]
        %v4205 = vld [vmem:[%s4177 + $0xf0] sm:$0xff]
        %v4206 = vld [vmem:[%s4177 + $0xf8] sm:$0xff]
        %v4207 = vld [vmem:[%s4177 + $0x100] sm:$0xff]
        %v4208 = vld [vmem:[%s4177 + $0x108] sm:$0xff]
        %v4209 = vld [vmem:[%s4177 + $0x110] sm:$0xff]
        %v4210 = vld [vmem:[%s4177 + $0x120] sm:$0xff]
        %v4211 = vld [vmem:[%s4177 + $0x128] sm:$0xff]
        %v4212 = vld [vmem:[%s4177 + $0x130] sm:$0xff]
        %v4213 = vld [vmem:[%s4177 + $0x138] sm:$0xff]
        %v4214 = vld [vmem:[%s4177 + $0x140] sm:$0xff]
        %v4215 = vld [vmem:[%s4177 + $0x148] sm:$0xff]
        %v4216 = vld [vmem:[%s4177 + $0x150] sm:$0xff]
        %v4217 = vld [vmem:[%s4177 + $0x158] sm:$0xff]
        %v4218 = vld [vmem:[%s4177 + $0x168] sm:$0xff]
        %v4219 = vld [vmem:[%s4177 + $0x170] sm:$0xff]
        %v4220 = vld [vmem:[%s4177 + $0x178] sm:$0xff]
        %v4221 = vld [vmem:[%s4177 + $0x180] sm:$0xff]
        %v4222 = vld [vmem:[%s4177 + $0x188] sm:$0xff]
        %v4223 = vld [vmem:[%s4177 + $0x190] sm:$0xff]
        %v4224 = vld [vmem:[%s4177 + $0x198] sm:$0xff]
        %v4225 = vld [vmem:[%s4177 + $0x1a0] sm:$0xff]
        %v4226 = vld [vmem:[%s4177 + $0x1b0] sm:$0xff]
        %v4227 = vld [vmem:[%s4177 + $0x1b8] sm:$0xff]
        %v4228 = vld [vmem:[%s4177 + $0x1c0] sm:$0xff]
        %v4229 = vld [vmem:[%s4177 + $0x1c8] sm:$0xff]
        %v4230 = vld [vmem:[%s4177 + $0x1d0] sm:$0xff]
        %v4231 = vld [vmem:[%s4177 + $0x1d8] sm:$0xff]
        %v4232 = vld [vmem:[%s4177 + $0x1e0] sm:$0xff]
        %v4233 = vld [vmem:[%s4177 + $0x1e8] sm:$0xff]
        %v4234 = vld [vmem:[%s4177 + $0x1f8] sm:$0xff]
        %v4235 = vld [vmem:[%s4177 + $0x200] sm:$0xff]
        %v4236 = vld [vmem:[%s4177 + $0x208] sm:$0xff]
        %v4237 = vld [vmem:[%s4177 + $0x210] sm:$0xff]
        %v4238 = vld [vmem:[%s4177 + $0x218] sm:$0xff]
        %v4239 = vld [vmem:[%s4177 + $0x220] sm:$0xff]
        %v4240 = vld [vmem:[%s4177 + $0x228] sm:$0xff]
        %v4241 = vld [vmem:[%s4177 + $0x230] sm:$0xff]
        %s4242 = scalar_lea.vmem %s219, 12
        %v4243 = vld [vmem:[%s4242] sm:$0x3]
        %v4245 = vsel %vm359, %v4178, 0
        %v4248 = vsel %vm359, %v4179, 0
        %v4251 = vsel %vm359, %v4180, 0
        %v4254 = vsel %vm359, %v4181, 0
        %v4257 = vsel %vm359, %v4182, 0
        %v4260 = vsel %vm359, %v4183, 0
        %v4263 = vsel %vm359, %v4184, 0
        %v4266 = vsel %vm359, %v4185, 0
        %v4269 = vsel %vm359, %v4186, 0
        %v4272 = vsel %vm359, %v4187, 0
        %v4275 = vsel %vm359, %v4188, 0
        %v4278 = vsel %vm359, %v4189, 0
        %v4281 = vsel %vm359, %v4190, 0
        %v4284 = vsel %vm359, %v4191, 0
        %v4287 = vsel %vm359, %v4192, 0
        %v4290 = vsel %vm359, %v4193, 0
        %v4293 = vsel %vm359, %v4194, 0
        %v4296 = vsel %vm359, %v4195, 0
        %v4299 = vsel %vm359, %v4196, 0
        %v4302 = vsel %vm359, %v4197, 0
        %v4305 = vsel %vm359, %v4198, 0
        %v4308 = vsel %vm359, %v4199, 0
        %v4311 = vsel %vm359, %v4200, 0
        %v4314 = vsel %vm359, %v4201, 0
        %v4317 = vsel %vm359, %v4202, 0
        %v4320 = vsel %vm359, %v4203, 0
        %v4323 = vsel %vm359, %v4204, 0
        %v4326 = vsel %vm359, %v4205, 0
        %v4329 = vsel %vm359, %v4206, 0
        %v4332 = vsel %vm359, %v4207, 0
        %v4335 = vsel %vm359, %v4208, 0
        %v4338 = vsel %vm359, %v4209, 0
        %v4341 = vsel %vm359, %v4210, 0
        %v4344 = vsel %vm359, %v4211, 0
        %v4347 = vsel %vm359, %v4212, 0
        %v4350 = vsel %vm359, %v4213, 0
        %v4353 = vsel %vm359, %v4214, 0
        %v4356 = vsel %vm359, %v4215, 0
        %v4359 = vsel %vm359, %v4216, 0
        %v4362 = vsel %vm359, %v4217, 0
        %v4365 = vsel %vm359, %v4218, 0
        %v4368 = vsel %vm359, %v4219, 0
        %v4371 = vsel %vm359, %v4220, 0
        %v4374 = vsel %vm359, %v4221, 0
        %v4377 = vsel %vm359, %v4222, 0
        %v4380 = vsel %vm359, %v4223, 0
        %v4383 = vsel %vm359, %v4224, 0
        %v4386 = vsel %vm359, %v4225, 0
        %v4389 = vsel %vm359, %v4226, 0
        %v4392 = vsel %vm359, %v4227, 0
        %v4395 = vsel %vm359, %v4228, 0
        %v4398 = vsel %vm359, %v4229, 0
        %v4401 = vsel %vm359, %v4230, 0
        %v4404 = vsel %vm359, %v4231, 0
        %v4407 = vsel %vm359, %v4232, 0
        %v4410 = vsel %vm359, %v4233, 0
        %v4413 = vsel %vm359, %v4234, 0
        %v4416 = vsel %vm359, %v4235, 0
        %v4419 = vsel %vm359, %v4236, 0
        %v4422 = vsel %vm359, %v4237, 0
        %v4425 = vsel %vm359, %v4238, 0
        %v4428 = vsel %vm359, %v4239, 0
        %v4431 = vsel %vm359, %v4240, 0
        %v4434 = vsel %vm359, %v4241, 0
        %v4437 = vand.u32 %v4243, %v555
        %4439 = vmatprep.subr.bf16.mxu0 0
        %4440 = vmatpush1.bf16.msra.mxu0 %v4437
        %4441 = vmatprep.subr.bf16.mxu0 0
        %4442 = vmatpush1.bf16.msra.mxu0 0
        %4443 = vmatprep.subr.bf16.mxu0 0
        %4444 = vmatpush1.bf16.msra.mxu0 0
        %4445 = vmatprep.subr.bf16.mxu0 0
        %4446 = vmatpush1.bf16.msra.mxu0 0
        %4447 = vmatprep.subr.bf16.mxu0 0
        %4448 = vmatpush1.bf16.msra.mxu0 0
        %4449 = vmatprep.subr.bf16.mxu0 0
        %4450 = vmatpush1.bf16.msra.mxu0 0
        %4451 = vmatprep.subr.bf16.mxu0 0
        %4452 = vmatpush1.bf16.msra.mxu0 0
        %4453 = vmatprep.subr.bf16.mxu0 0
        %4454 = vmatpush1.bf16.msra.mxu0 0
        %4455 = vmatprep.subr.bf16.mxu0 0
        %4456 = vmatpush1.bf16.msra.mxu0 0
        %4457 = vmatprep.subr.bf16.mxu0 0
        %4458 = vmatpush1.bf16.msra.mxu0 0
        %4459 = vmatprep.subr.bf16.mxu0 0
        %4460 = vmatpush1.bf16.msra.mxu0 0
        %4461 = vmatprep.subr.bf16.mxu0 0
        %4462 = vmatpush1.bf16.msra.mxu0 0
        %4463 = vmatprep.subr.bf16.mxu0 0
        %4464 = vmatpush1.bf16.msra.mxu0 0
        %4465 = vmatprep.subr.bf16.mxu0 0
        %4466 = vmatpush1.bf16.msra.mxu0 0
        %4467 = vmatprep.subr.bf16.mxu0 0
        %4468 = vmatpush1.bf16.msra.mxu0 0
        %4469 = vmatprep.subr.bf16.mxu0 0
        %4470 = vmatpush1.bf16.msra.mxu0 0
        %4471 = vmatprep.mubr.f32.mxu0 0.0
        %4472 = vmatmul.mubr.f32.gmra.mrb[0].mxu0 %v4245
        %v4473 = vpop.f32.mrb[0].mxu0
        %v4474 = vadd.f32 0.0, %v4473
        %v4475 = vpop.f32.mrb[0].mxu0
        %4476 = vmatprep.mubr.f32.mxu0 0.0
        %4477 = vmatmul.mubr.f32.gmra.mrb[0].mxu0 %v4248
        %v4478 = vpop.f32.mrb[0].mxu0
        %v4479 = vadd.f32 0.0, %v4478
        %v4480 = vpop.f32.mrb[0].mxu0
        %4481 = vmatprep.mubr.f32.mxu0 0.0
        %4482 = vmatmul.mubr.f32.gmra.mrb[0].mxu0 %v4251
        %v4483 = vpop.f32.mrb[0].mxu0
        %v4484 = vadd.f32 0.0, %v4483
        %v4485 = vpop.f32.mrb[0].mxu0
        %4486 = vmatprep.mubr.f32.mxu0 0.0
        %4487 = vmatmul.mubr.f32.gmra.mrb[0].mxu0 %v4254
        %v4488 = vpop.f32.mrb[0].mxu0
        %v4489 = vadd.f32 0.0, %v4488
        %v4490 = vpop.f32.mrb[0].mxu0
        %4491 = vmatprep.mubr.f32.mxu0 0.0
        %4492 = vmatmul.mubr.f32.gmra.mrb[0].mxu0 %v4257
        %v4493 = vpop.f32.mrb[0].mxu0
        %v4494 = vadd.f32 0.0, %v4493
        %v4495 = vpop.f32.mrb[0].mxu0
        %4496 = vmatprep.mubr.f32.mxu0 0.0
        %4497 = vmatmul.mubr.f32.gmra.mrb[0].mxu0 %v4260
        %v4498 = vpop.f32.mrb[0].mxu0
        %v4499 = vadd.f32 0.0, %v4498
        %v4500 = vpop.f32.mrb[0].mxu0
        %4501 = vmatprep.mubr.f32.mxu0 0.0
        %4502 = vmatmul.mubr.f32.gmra.mrb[0].mxu0 %v4263
        %v4503 = vpop.f32.mrb[0].mxu0
        %v4504 = vadd.f32 0.0, %v4503
        %v4505 = vpop.f32.mrb[0].mxu0
        %4506 = vmatprep.mubr.f32.mxu0 0.0
        %4507 = vmatmul.mubr.f32.gmra.mrb[0].mxu0 %v4266
        %v4508 = vpop.f32.mrb[0].mxu0
        %v4509 = vadd.f32 0.0, %v4508
        %v4510 = vpop.f32.mrb[0].mxu0
        %4511 = vmatprep.mubr.f32.mxu0 0.0
        %4512 = vmatmul.mubr.f32.gmra.mrb[0].mxu0 %v4269
        %v4513 = vpop.f32.mrb[0].mxu0
        %v4514 = vadd.f32 0.0, %v4513
        %v4515 = vpop.f32.mrb[0].mxu0
        %4516 = vmatprep.mubr.f32.mxu0 0.0
        %4517 = vmatmul.mubr.f32.gmra.mrb[0].mxu0 %v4272
        %v4518 = vpop.f32.mrb[0].mxu0
        %v4519 = vadd.f32 0.0, %v4518
        %v4520 = vpop.f32.mrb[0].mxu0
        %4521 = vmatprep.mubr.f32.mxu0 0.0
        %4522 = vmatmul.mubr.f32.gmra.mrb[0].mxu0 %v4275
        %v4523 = vpop.f32.mrb[0].mxu0
        %v4524 = vadd.f32 0.0, %v4523
        %v4525 = vpop.f32.mrb[0].mxu0
        %4526 = vmatprep.mubr.f32.mxu0 0.0
        %4527 = vmatmul.mubr.f32.gmra.mrb[0].mxu0 %v4278
        %v4528 = vpop.f32.mrb[0].mxu0
        %v4529 = vadd.f32 0.0, %v4528
        %v4530 = vpop.f32.mrb[0].mxu0
        %4531 = vmatprep.mubr.f32.mxu0 0.0
        %4532 = vmatmul.mubr.f32.gmra.mrb[0].mxu0 %v4281
        %v4533 = vpop.f32.mrb[0].mxu0
        %v4534 = vadd.f32 0.0, %v4533
        %v4535 = vpop.f32.mrb[0].mxu0
        %4536 = vmatprep.mubr.f32.mxu0 0.0
        %4537 = vmatmul.mubr.f32.gmra.mrb[0].mxu0 %v4284
        %v4538 = vpop.f32.mrb[0].mxu0
        %v4539 = vadd.f32 0.0, %v4538
        %v4540 = vpop.f32.mrb[0].mxu0
        %4541 = vmatprep.mubr.f32.mxu0 0.0
        %4542 = vmatmul.mubr.f32.gmra.mrb[0].mxu0 %v4287
        %v4543 = vpop.f32.mrb[0].mxu0
        %v4544 = vadd.f32 0.0, %v4543
        %v4545 = vpop.f32.mrb[0].mxu0
        %4546 = vmatprep.mubr.f32.mxu0 0.0
        %4547 = vmatmul.mubr.f32.gmra.mrb[0].mxu0 %v4290
        %v4548 = vpop.f32.mrb[0].mxu0
        %v4549 = vadd.f32 0.0, %v4548
        %v4550 = vpop.f32.mrb[0].mxu0
        %4551 = vmatprep.mubr.f32.mxu0 0.0
        %4552 = vmatmul.mubr.f32.gmra.mrb[0].mxu0 %v4293
        %v4553 = vpop.f32.mrb[0].mxu0
        %v4554 = vadd.f32 0.0, %v4553
        %v4555 = vpop.f32.mrb[0].mxu0
        %4556 = vmatprep.mubr.f32.mxu0 0.0
        %4557 = vmatmul.mubr.f32.gmra.mrb[0].mxu0 %v4296
        %v4558 = vpop.f32.mrb[0].mxu0
        %v4559 = vadd.f32 0.0, %v4558
        %v4560 = vpop.f32.mrb[0].mxu0
        %4561 = vmatprep.mubr.f32.mxu0 0.0
        %4562 = vmatmul.mubr.f32.gmra.mrb[0].mxu0 %v4299
        %v4563 = vpop.f32.mrb[0].mxu0
        %v4564 = vadd.f32 0.0, %v4563
        %v4565 = vpop.f32.mrb[0].mxu0
        %4566 = vmatprep.mubr.f32.mxu0 0.0
        %4567 = vmatmul.mubr.f32.gmra.mrb[0].mxu0 %v4302
        %v4568 = vpop.f32.mrb[0].mxu0
        %v4569 = vadd.f32 0.0, %v4568
        %v4570 = vpop.f32.mrb[0].mxu0
        %4571 = vmatprep.mubr.f32.mxu0 0.0
        %4572 = vmatmul.mubr.f32.gmra.mrb[0].mxu0 %v4305
        %v4573 = vpop.f32.mrb[0].mxu0
        %v4574 = vadd.f32 0.0, %v4573
        %v4575 = vpop.f32.mrb[0].mxu0
        %4576 = vmatprep.mubr.f32.mxu0 0.0
        %4577 = vmatmul.mubr.f32.gmra.mrb[0].mxu0 %v4308
        %v4578 = vpop.f32.mrb[0].mxu0
        %v4579 = vadd.f32 0.0, %v4578
        %v4580 = vpop.f32.mrb[0].mxu0
        %4581 = vmatprep.mubr.f32.mxu0 0.0
        %4582 = vmatmul.mubr.f32.gmra.mrb[0].mxu0 %v4311
        %v4583 = vpop.f32.mrb[0].mxu0
        %v4584 = vadd.f32 0.0, %v4583
        %v4585 = vpop.f32.mrb[0].mxu0
        %4586 = vmatprep.mubr.f32.mxu0 0.0
        %4587 = vmatmul.mubr.f32.gmra.mrb[0].mxu0 %v4314
        %v4588 = vpop.f32.mrb[0].mxu0
        %v4589 = vadd.f32 0.0, %v4588
        %v4590 = vpop.f32.mrb[0].mxu0
        %4591 = vmatprep.mubr.f32.mxu0 0.0
        %4592 = vmatmul.mubr.f32.gmra.mrb[0].mxu0 %v4317
        %v4593 = vpop.f32.mrb[0].mxu0
        %v4594 = vadd.f32 0.0, %v4593
        %v4595 = vpop.f32.mrb[0].mxu0
        %4596 = vmatprep.mubr.f32.mxu0 0.0
        %4597 = vmatmul.mubr.f32.gmra.mrb[0].mxu0 %v4320
        %v4598 = vpop.f32.mrb[0].mxu0
        %v4599 = vadd.f32 0.0, %v4598
        %v4600 = vpop.f32.mrb[0].mxu0
        %4601 = vmatprep.mubr.f32.mxu0 0.0
        %4602 = vmatmul.mubr.f32.gmra.mrb[0].mxu0 %v4323
        %v4603 = vpop.f32.mrb[0].mxu0
        %v4604 = vadd.f32 0.0, %v4603
        %v4605 = vpop.f32.mrb[0].mxu0
        %4606 = vmatprep.mubr.f32.mxu0 0.0
        %4607 = vmatmul.mubr.f32.gmra.mrb[0].mxu0 %v4326
        %v4608 = vpop.f32.mrb[0].mxu0
        %v4609 = vadd.f32 0.0, %v4608
        %v4610 = vpop.f32.mrb[0].mxu0
        %4611 = vmatprep.mubr.f32.mxu0 0.0
        %4612 = vmatmul.mubr.f32.gmra.mrb[0].mxu0 %v4329
        %v4613 = vpop.f32.mrb[0].mxu0
        %v4614 = vadd.f32 0.0, %v4613
        %v4615 = vpop.f32.mrb[0].mxu0
        %4616 = vmatprep.mubr.f32.mxu0 0.0
        %4617 = vmatmul.mubr.f32.gmra.mrb[0].mxu0 %v4332
        %v4618 = vpop.f32.mrb[0].mxu0
        %v4619 = vadd.f32 0.0, %v4618
        %v4620 = vpop.f32.mrb[0].mxu0
        %4621 = vmatprep.mubr.f32.mxu0 0.0
        %4622 = vmatmul.mubr.f32.gmra.mrb[0].mxu0 %v4335
        %v4623 = vpop.f32.mrb[0].mxu0
        %v4624 = vadd.f32 0.0, %v4623
        %v4625 = vpop.f32.mrb[0].mxu0
        %4626 = vmatprep.mubr.f32.mxu0 0.0
        %4627 = vmatmul.mubr.f32.gmra.mrb[0].mxu0 %v4338
        %v4628 = vpop.f32.mrb[0].mxu0
        %v4629 = vadd.f32 0.0, %v4628
        %v4630 = vpop.f32.mrb[0].mxu0
        %4631 = vmatprep.mubr.f32.mxu0 0.0
        %4632 = vmatmul.mubr.f32.gmra.mrb[0].mxu0 %v4341
        %v4633 = vpop.f32.mrb[0].mxu0
        %v4634 = vadd.f32 0.0, %v4633
        %v4635 = vpop.f32.mrb[0].mxu0
        %4636 = vmatprep.mubr.f32.mxu0 0.0
        %4637 = vmatmul.mubr.f32.gmra.mrb[0].mxu0 %v4344
        %v4638 = vpop.f32.mrb[0].mxu0
        %v4639 = vadd.f32 0.0, %v4638
        %v4640 = vpop.f32.mrb[0].mxu0
        %4641 = vmatprep.mubr.f32.mxu0 0.0
        %4642 = vmatmul.mubr.f32.gmra.mrb[0].mxu0 %v4347
        %v4643 = vpop.f32.mrb[0].mxu0
        %v4644 = vadd.f32 0.0, %v4643
        %v4645 = vpop.f32.mrb[0].mxu0
        %4646 = vmatprep.mubr.f32.mxu0 0.0
        %4647 = vmatmul.mubr.f32.gmra.mrb[0].mxu0 %v4350
        %v4648 = vpop.f32.mrb[0].mxu0
        %v4649 = vadd.f32 0.0, %v4648
        %v4650 = vpop.f32.mrb[0].mxu0
        %4651 = vmatprep.mubr.f32.mxu0 0.0
        %4652 = vmatmul.mubr.f32.gmra.mrb[0].mxu0 %v4353
        %v4653 = vpop.f32.mrb[0].mxu0
        %v4654 = vadd.f32 0.0, %v4653
        %v4655 = vpop.f32.mrb[0].mxu0
        %4656 = vmatprep.mubr.f32.mxu0 0.0
        %4657 = vmatmul.mubr.f32.gmra.mrb[0].mxu0 %v4356
        %v4658 = vpop.f32.mrb[0].mxu0
        %v4659 = vadd.f32 0.0, %v4658
        %v4660 = vpop.f32.mrb[0].mxu0
        %4661 = vmatprep.mubr.f32.mxu0 0.0
        %4662 = vmatmul.mubr.f32.gmra.mrb[0].mxu0 %v4359
        %v4663 = vpop.f32.mrb[0].mxu0
        %v4664 = vadd.f32 0.0, %v4663
        %v4665 = vpop.f32.mrb[0].mxu0
        %4666 = vmatprep.mubr.f32.mxu0 0.0
        %4667 = vmatmul.mubr.f32.gmra.mrb[0].mxu0 %v4362
        %v4668 = vpop.f32.mrb[0].mxu0
        %v4669 = vadd.f32 0.0, %v4668
        %v4670 = vpop.f32.mrb[0].mxu0
        %4671 = vmatprep.mubr.f32.mxu0 0.0
        %4672 = vmatmul.mubr.f32.gmra.mrb[0].mxu0 %v4365
        %v4673 = vpop.f32.mrb[0].mxu0
        %v4674 = vadd.f32 0.0, %v4673
        %v4675 = vpop.f32.mrb[0].mxu0
        %4676 = vmatprep.mubr.f32.mxu0 0.0
        %4677 = vmatmul.mubr.f32.gmra.mrb[0].mxu0 %v4368
        %v4678 = vpop.f32.mrb[0].mxu0
        %v4679 = vadd.f32 0.0, %v4678
        %v4680 = vpop.f32.mrb[0].mxu0
        %4681 = vmatprep.mubr.f32.mxu0 0.0
        %4682 = vmatmul.mubr.f32.gmra.mrb[0].mxu0 %v4371
        %v4683 = vpop.f32.mrb[0].mxu0
        %v4684 = vadd.f32 0.0, %v4683
        %v4685 = vpop.f32.mrb[0].mxu0
        %4686 = vmatprep.mubr.f32.mxu0 0.0
        %4687 = vmatmul.mubr.f32.gmra.mrb[0].mxu0 %v4374
        %v4688 = vpop.f32.mrb[0].mxu0
        %v4689 = vadd.f32 0.0, %v4688
        %v4690 = vpop.f32.mrb[0].mxu0
        %4691 = vmatprep.mubr.f32.mxu0 0.0
        %4692 = vmatmul.mubr.f32.gmra.mrb[0].mxu0 %v4377
        %v4693 = vpop.f32.mrb[0].mxu0
        %v4694 = vadd.f32 0.0, %v4693
        %v4695 = vpop.f32.mrb[0].mxu0
        %4696 = vmatprep.mubr.f32.mxu0 0.0
        %4697 = vmatmul.mubr.f32.gmra.mrb[0].mxu0 %v4380
        %v4698 = vpop.f32.mrb[0].mxu0
        %v4699 = vadd.f32 0.0, %v4698
        %v4700 = vpop.f32.mrb[0].mxu0
        %4701 = vmatprep.mubr.f32.mxu0 0.0
        %4702 = vmatmul.mubr.f32.gmra.mrb[0].mxu0 %v4383
        %v4703 = vpop.f32.mrb[0].mxu0
        %v4704 = vadd.f32 0.0, %v4703
        %v4705 = vpop.f32.mrb[0].mxu0
        %4706 = vmatprep.mubr.f32.mxu0 0.0
        %4707 = vmatmul.mubr.f32.gmra.mrb[0].mxu0 %v4386
        %v4708 = vpop.f32.mrb[0].mxu0
        %v4709 = vadd.f32 0.0, %v4708
        %v4710 = vpop.f32.mrb[0].mxu0
        %4711 = vmatprep.mubr.f32.mxu0 0.0
        %4712 = vmatmul.mubr.f32.gmra.mrb[0].mxu0 %v4389
        %v4713 = vpop.f32.mrb[0].mxu0
        %v4714 = vadd.f32 0.0, %v4713
        %v4715 = vpop.f32.mrb[0].mxu0
        %4716 = vmatprep.mubr.f32.mxu0 0.0
        %4717 = vmatmul.mubr.f32.gmra.mrb[0].mxu0 %v4392
        %v4718 = vpop.f32.mrb[0].mxu0
        %v4719 = vadd.f32 0.0, %v4718
        %v4720 = vpop.f32.mrb[0].mxu0
        %4721 = vmatprep.mubr.f32.mxu0 0.0
        %4722 = vmatmul.mubr.f32.gmra.mrb[0].mxu0 %v4395
        %v4723 = vpop.f32.mrb[0].mxu0
        %v4724 = vadd.f32 0.0, %v4723
        %v4725 = vpop.f32.mrb[0].mxu0
        %4726 = vmatprep.mubr.f32.mxu0 0.0
        %4727 = vmatmul.mubr.f32.gmra.mrb[0].mxu0 %v4398
        %v4728 = vpop.f32.mrb[0].mxu0
        %v4729 = vadd.f32 0.0, %v4728
        %v4730 = vpop.f32.mrb[0].mxu0
        %4731 = vmatprep.mubr.f32.mxu0 0.0
        %4732 = vmatmul.mubr.f32.gmra.mrb[0].mxu0 %v4401
        %v4733 = vpop.f32.mrb[0].mxu0
        %v4734 = vadd.f32 0.0, %v4733
        %v4735 = vpop.f32.mrb[0].mxu0
        %4736 = vmatprep.mubr.f32.mxu0 0.0
        %4737 = vmatmul.mubr.f32.gmra.mrb[0].mxu0 %v4404
        %v4738 = vpop.f32.mrb[0].mxu0
        %v4739 = vadd.f32 0.0, %v4738
        %v4740 = vpop.f32.mrb[0].mxu0
        %4741 = vmatprep.mubr.f32.mxu0 0.0
        %4742 = vmatmul.mubr.f32.gmra.mrb[0].mxu0 %v4407
        %v4743 = vpop.f32.mrb[0].mxu0
        %v4744 = vadd.f32 0.0, %v4743
        %v4745 = vpop.f32.mrb[0].mxu0
        %4746 = vmatprep.mubr.f32.mxu0 0.0
        %4747 = vmatmul.mubr.f32.gmra.mrb[0].mxu0 %v4410
        %v4748 = vpop.f32.mrb[0].mxu0
        %v4749 = vadd.f32 0.0, %v4748
        %v4750 = vpop.f32.mrb[0].mxu0
        %4751 = vmatprep.mubr.f32.mxu0 0.0
        %4752 = vmatmul.mubr.f32.gmra.mrb[0].mxu0 %v4413
        %v4753 = vpop.f32.mrb[0].mxu0
        %v4754 = vadd.f32 0.0, %v4753
        %v4755 = vpop.f32.mrb[0].mxu0
        %4756 = vmatprep.mubr.f32.mxu0 0.0
        %4757 = vmatmul.mubr.f32.gmra.mrb[0].mxu0 %v4416
        %v4758 = vpop.f32.mrb[0].mxu0
        %v4759 = vadd.f32 0.0, %v4758
        %v4760 = vpop.f32.mrb[0].mxu0
        %4761 = vmatprep.mubr.f32.mxu0 0.0
        %4762 = vmatmul.mubr.f32.gmra.mrb[0].mxu0 %v4419
        %v4763 = vpop.f32.mrb[0].mxu0
        %v4764 = vadd.f32 0.0, %v4763
        %v4765 = vpop.f32.mrb[0].mxu0
        %4766 = vmatprep.mubr.f32.mxu0 0.0
        %4767 = vmatmul.mubr.f32.gmra.mrb[0].mxu0 %v4422
        %v4768 = vpop.f32.mrb[0].mxu0
        %v4769 = vadd.f32 0.0, %v4768
        %v4770 = vpop.f32.mrb[0].mxu0
        %4771 = vmatprep.mubr.f32.mxu0 0.0
        %4772 = vmatmul.mubr.f32.gmra.mrb[0].mxu0 %v4425
        %v4773 = vpop.f32.mrb[0].mxu0
        %v4774 = vadd.f32 0.0, %v4773
        %v4775 = vpop.f32.mrb[0].mxu0
        %4776 = vmatprep.mubr.f32.mxu0 0.0
        %4777 = vmatmul.mubr.f32.gmra.mrb[0].mxu0 %v4428
        %v4778 = vpop.f32.mrb[0].mxu0
        %v4779 = vadd.f32 0.0, %v4778
        %v4780 = vpop.f32.mrb[0].mxu0
        %4781 = vmatprep.mubr.f32.mxu0 0.0
        %4782 = vmatmul.mubr.f32.gmra.mrb[0].mxu0 %v4431
        %v4783 = vpop.f32.mrb[0].mxu0
        %v4784 = vadd.f32 0.0, %v4783
        %v4785 = vpop.f32.mrb[0].mxu0
        %4786 = vmatprep.mubr.f32.mxu0 0.0
        %4787 = vmatmul.mubr.f32.gmra.mrb[0].mxu0 %v4434
        %v4788 = vpop.f32.mrb[0].mxu0
        %v4789 = vadd.f32 0.0, %v4788
        %v4790 = vpop.f32.mrb[0].mxu0
        %4791 = vdwg.mxu0
        %v4792 = vadd.f32 %v4111, %v4474
        %v4793 = vadd.f32 %v4112, %v4479
        %v4794 = vadd.f32 %v4113, %v4484
        %v4795 = vadd.f32 %v4114, %v4489
        %v4796 = vadd.f32 %v4115, %v4494
        %v4797 = vadd.f32 %v4116, %v4499
        %v4798 = vadd.f32 %v4117, %v4504
        %v4799 = vadd.f32 %v4118, %v4509
        %v4800 = vadd.f32 %v4119, %v4514
        %v4801 = vadd.f32 %v4120, %v4519
        %v4802 = vadd.f32 %v4121, %v4524
        %v4803 = vadd.f32 %v4122, %v4529
        %v4804 = vadd.f32 %v4123, %v4534
        %v4805 = vadd.f32 %v4124, %v4539
        %v4806 = vadd.f32 %v4125, %v4544
        %v4807 = vadd.f32 %v4126, %v4549
        %v4808 = vadd.f32 %v4127, %v4554
        %v4809 = vadd.f32 %v4128, %v4559
        %v4810 = vadd.f32 %v4129, %v4564
        %v4811 = vadd.f32 %v4130, %v4569
        %v4812 = vadd.f32 %v4131, %v4574
        %v4813 = vadd.f32 %v4132, %v4579
        %v4814 = vadd.f32 %v4133, %v4584
        %v4815 = vadd.f32 %v4134, %v4589
        %v4816 = vadd.f32 %v4135, %v4594
        %v4817 = vadd.f32 %v4136, %v4599
        %v4818 = vadd.f32 %v4137, %v4604
        %v4819 = vadd.f32 %v4138, %v4609
        %v4820 = vadd.f32 %v4139, %v4614
        %v4821 = vadd.f32 %v4140, %v4619
        %v4822 = vadd.f32 %v4141, %v4624
        %v4823 = vadd.f32 %v4142, %v4629
        %v4824 = vadd.f32 %v4143, %v4634
        %v4825 = vadd.f32 %v4144, %v4639
        %v4826 = vadd.f32 %v4145, %v4644
        %v4827 = vadd.f32 %v4146, %v4649
        %v4828 = vadd.f32 %v4147, %v4654
        %v4829 = vadd.f32 %v4148, %v4659
        %v4830 = vadd.f32 %v4149, %v4664
        %v4831 = vadd.f32 %v4150, %v4669
        %v4832 = vadd.f32 %v4151, %v4674
        %v4833 = vadd.f32 %v4152, %v4679
        %v4834 = vadd.f32 %v4153, %v4684
        %v4835 = vadd.f32 %v4154, %v4689
        %v4836 = vadd.f32 %v4155, %v4694
        %v4837 = vadd.f32 %v4156, %v4699
        %v4838 = vadd.f32 %v4157, %v4704
        %v4839 = vadd.f32 %v4158, %v4709
        %v4840 = vadd.f32 %v4159, %v4714
        %v4841 = vadd.f32 %v4160, %v4719
        %v4842 = vadd.f32 %v4161, %v4724
        %v4843 = vadd.f32 %v4162, %v4729
        %v4844 = vadd.f32 %v4163, %v4734
        %v4845 = vadd.f32 %v4164, %v4739
        %v4846 = vadd.f32 %v4165, %v4744
        %v4847 = vadd.f32 %v4166, %v4749
        %v4848 = vadd.f32 %v4167, %v4754
        %v4849 = vadd.f32 %v4168, %v4759
        %v4850 = vadd.f32 %v4169, %v4764
        %v4851 = vadd.f32 %v4170, %v4769
        %v4852 = vadd.f32 %v4171, %v4774
        %v4853 = vadd.f32 %v4172, %v4779
        %v4854 = vadd.f32 %v4173, %v4784
        %v4855 = vadd.f32 %v4174, %v4789
        %v4856 = vld [vmem:[%s4177 + $0x1] sm:$0xff]
        %v4857 = vld [vmem:[%s4177 + $0x9] sm:$0xff]
        %v4858 = vld [vmem:[%s4177 + $0x11] sm:$0xff]
        %v4859 = vld [vmem:[%s4177 + $0x19] sm:$0xff]
        %v4860 = vld [vmem:[%s4177 + $0x21] sm:$0xff]
        %v4861 = vld [vmem:[%s4177 + $0x29] sm:$0xff]
        %v4862 = vld [vmem:[%s4177 + $0x31] sm:$0xff]
        %v4863 = vld [vmem:[%s4177 + $0x39] sm:$0xff]
        %v4864 = vld [vmem:[%s4177 + $0x49] sm:$0xff]
        %v4865 = vld [vmem:[%s4177 + $0x51] sm:$0xff]
        %v4866 = vld [vmem:[%s4177 + $0x59] sm:$0xff]
        %v4867 = vld [vmem:[%s4177 + $0x61] sm:$0xff]
        %v4868 = vld [vmem:[%s4177 + $0x69] sm:$0xff]
        %v4869 = vld [vmem:[%s4177 + $0x71] sm:$0xff]
        %v4870 = vld [vmem:[%s4177 + $0x79] sm:$0xff]
        %v4871 = vld [vmem:[%s4177 + $0x81] sm:$0xff]
        %v4872 = vld [vmem:[%s4177 + $0x91] sm:$0xff]
        %v4873 = vld [vmem:[%s4177 + $0x99] sm:$0xff]
        %v4874 = vld [vmem:[%s4177 + $0xa1] sm:$0xff]
        %v4875 = vld [vmem:[%s4177 + $0xa9] sm:$0xff]
        %v4876 = vld [vmem:[%s4177 + $0xb1] sm:$0xff]
        %v4877 = vld [vmem:[%s4177 + $0xb9] sm:$0xff]
        %v4878 = vld [vmem:[%s4177 + $0xc1] sm:$0xff]
        %v4879 = vld [vmem:[%s4177 + $0xc9] sm:$0xff]
        %v4880 = vld [vmem:[%s4177 + $0xd9] sm:$0xff]
        %v4881 = vld [vmem:[%s4177 + $0xe1] sm:$0xff]
        %v4882 = vld [vmem:[%s4177 + $0xe9] sm:$0xff]
        %v4883 = vld [vmem:[%s4177 + $0xf1] sm:$0xff]
        %v4884 = vld [vmem:[%s4177 + $0xf9] sm:$0xff]
        %v4885 = vld [vmem:[%s4177 + $0x101] sm:$0xff]
        %v4886 = vld [vmem:[%s4177 + $0x109] sm:$0xff]
        %v4887 = vld [vmem:[%s4177 + $0x111] sm:$0xff]
        %v4888 = vld [vmem:[%s4177 + $0x121] sm:$0xff]
        %v4889 = vld [vmem:[%s4177 + $0x129] sm:$0xff]
        %v4890 = vld [vmem:[%s4177 + $0x131] sm:$0xff]
        %v4891 = vld [vmem:[%s4177 + $0x139] sm:$0xff]
        %v4892 = vld [vmem:[%s4177 + $0x141] sm:$0xff]
        %v4893 = vld [vmem:[%s4177 + $0x149] sm:$0xff]
        %v4894 = vld [vmem:[%s4177 + $0x151] sm:$0xff]
        %v4895 = vld [vmem:[%s4177 + $0x159] sm:$0xff]
        %v4896 = vld [vmem:[%s4177 + $0x169] sm:$0xff]
        %v4897 = vld [vmem:[%s4177 + $0x171] sm:$0xff]
        %v4898 = vld [vmem:[%s4177 + $0x179] sm:$0xff]
        %v4899 = vld [vmem:[%s4177 + $0x181] sm:$0xff]
        %v4900 = vld [vmem:[%s4177 + $0x189] sm:$0xff]
        %v4901 = vld [vmem:[%s4177 + $0x191] sm:$0xff]
        %v4902 = vld [vmem:[%s4177 + $0x199] sm:$0xff]
        %v4903 = vld [vmem:[%s4177 + $0x1a1] sm:$0xff]
        %v4904 = vld [vmem:[%s4177 + $0x1b1] sm:$0xff]
        %v4905 = vld [vmem:[%s4177 + $0x1b9] sm:$0xff]
        %v4906 = vld [vmem:[%s4177 + $0x1c1] sm:$0xff]
        %v4907 = vld [vmem:[%s4177 + $0x1c9] sm:$0xff]
        %v4908 = vld [vmem:[%s4177 + $0x1d1] sm:$0xff]
        %v4909 = vld [vmem:[%s4177 + $0x1d9] sm:$0xff]
        %v4910 = vld [vmem:[%s4177 + $0x1e1] sm:$0xff]
        %v4911 = vld [vmem:[%s4177 + $0x1e9] sm:$0xff]
        %v4912 = vld [vmem:[%s4177 + $0x1f9] sm:$0xff]
        %v4913 = vld [vmem:[%s4177 + $0x201] sm:$0xff]
        %v4914 = vld [vmem:[%s4177 + $0x209] sm:$0xff]
        %v4915 = vld [vmem:[%s4177 + $0x211] sm:$0xff]
        %v4916 = vld [vmem:[%s4177 + $0x219] sm:$0xff]
        %v4917 = vld [vmem:[%s4177 + $0x221] sm:$0xff]
        %v4918 = vld [vmem:[%s4177 + $0x229] sm:$0xff]
        %v4919 = vld [vmem:[%s4177 + $0x231] sm:$0xff]
        %s4920 = scalar_lea.vmem %s219, 14
        %v4921 = vld [vmem:[%s4920] sm:$0x3]
        %v4923 = vsel %vm359, %v4856, 0
        %v4926 = vsel %vm359, %v4857, 0
        %v4929 = vsel %vm359, %v4858, 0
        %v4932 = vsel %vm359, %v4859, 0
        %v4935 = vsel %vm359, %v4860, 0
        %v4938 = vsel %vm359, %v4861, 0
        %v4941 = vsel %vm359, %v4862, 0
        %v4944 = vsel %vm359, %v4863, 0
        %v4947 = vsel %vm359, %v4864, 0
        %v4950 = vsel %vm359, %v4865, 0
        %v4953 = vsel %vm359, %v4866, 0
        %v4956 = vsel %vm359, %v4867, 0
        %v4959 = vsel %vm359, %v4868, 0
        %v4962 = vsel %vm359, %v4869, 0
        %v4965 = vsel %vm359, %v4870, 0
        %v4968 = vsel %vm359, %v4871, 0
        %v4971 = vsel %vm359, %v4872, 0
        %v4974 = vsel %vm359, %v4873, 0
        %v4977 = vsel %vm359, %v4874, 0
        %v4980 = vsel %vm359, %v4875, 0
        %v4983 = vsel %vm359, %v4876, 0
        %v4986 = vsel %vm359, %v4877, 0
        %v4989 = vsel %vm359, %v4878, 0
        %v4992 = vsel %vm359, %v4879, 0
        %v4995 = vsel %vm359, %v4880, 0
        %v4998 = vsel %vm359, %v4881, 0
        %v5001 = vsel %vm359, %v4882, 0
        %v5004 = vsel %vm359, %v4883, 0
        %v5007 = vsel %vm359, %v4884, 0
        %v5010 = vsel %vm359, %v4885, 0
        %v5013 = vsel %vm359, %v4886, 0
        %v5016 = vsel %vm359, %v4887, 0
        %v5019 = vsel %vm359, %v4888, 0
        %v5022 = vsel %vm359, %v4889, 0
        %v5025 = vsel %vm359, %v4890, 0
        %v5028 = vsel %vm359, %v4891, 0
        %v5031 = vsel %vm359, %v4892, 0
        %v5034 = vsel %vm359, %v4893, 0
        %v5037 = vsel %vm359, %v4894, 0
        %v5040 = vsel %vm359, %v4895, 0
        %v5043 = vsel %vm359, %v4896, 0
        %v5046 = vsel %vm359, %v4897, 0
        %v5049 = vsel %vm359, %v4898, 0
        %v5052 = vsel %vm359, %v4899, 0
        %v5055 = vsel %vm359, %v4900, 0
        %v5058 = vsel %vm359, %v4901, 0
        %v5061 = vsel %vm359, %v4902, 0
        %v5064 = vsel %vm359, %v4903, 0
        %v5067 = vsel %vm359, %v4904, 0
        %v5070 = vsel %vm359, %v4905, 0
        %v5073 = vsel %vm359, %v4906, 0
        %v5076 = vsel %vm359, %v4907, 0
        %v5079 = vsel %vm359, %v4908, 0
        %v5082 = vsel %vm359, %v4909, 0
        %v5085 = vsel %vm359, %v4910, 0
        %v5088 = vsel %vm359, %v4911, 0
        %v5091 = vsel %vm359, %v4912, 0
        %v5094 = vsel %vm359, %v4913, 0
        %v5097 = vsel %vm359, %v4914, 0
        %v5100 = vsel %vm359, %v4915, 0
        %v5103 = vsel %vm359, %v4916, 0
        %v5106 = vsel %vm359, %v4917, 0
        %v5109 = vsel %vm359, %v4918, 0
        %v5112 = vsel %vm359, %v4919, 0
        %v5115 = vand.u32 %v4921, %v555
        %5117 = vmatprep.subr.bf16.mxu0 0
        %5118 = vmatpush1.bf16.msra.mxu0 %v5115
        %5119 = vmatprep.subr.bf16.mxu0 0
        %5120 = vmatpush1.bf16.msra.mxu0 0
        %5121 = vmatprep.subr.bf16.mxu0 0
        %5122 = vmatpush1.bf16.msra.mxu0 0
        %5123 = vmatprep.subr.bf16.mxu0 0
        %5124 = vmatpush1.bf16.msra.mxu0 0
        %5125 = vmatprep.subr.bf16.mxu0 0
        %5126 = vmatpush1.bf16.msra.mxu0 0
        %5127 = vmatprep.subr.bf16.mxu0 0
        %5128 = vmatpush1.bf16.msra.mxu0 0
        %5129 = vmatprep.subr.bf16.mxu0 0
        %5130 = vmatpush1.bf16.msra.mxu0 0
        %5131 = vmatprep.subr.bf16.mxu0 0
        %5132 = vmatpush1.bf16.msra.mxu0 0
        %5133 = vmatprep.subr.bf16.mxu0 0
        %5134 = vmatpush1.bf16.msra.mxu0 0
        %5135 = vmatprep.subr.bf16.mxu0 0
        %5136 = vmatpush1.bf16.msra.mxu0 0
        %5137 = vmatprep.subr.bf16.mxu0 0
        %5138 = vmatpush1.bf16.msra.mxu0 0
        %5139 = vmatprep.subr.bf16.mxu0 0
        %5140 = vmatpush1.bf16.msra.mxu0 0
        %5141 = vmatprep.subr.bf16.mxu0 0
        %5142 = vmatpush1.bf16.msra.mxu0 0
        %5143 = vmatprep.subr.bf16.mxu0 0
        %5144 = vmatpush1.bf16.msra.mxu0 0
        %5145 = vmatprep.subr.bf16.mxu0 0
        %5146 = vmatpush1.bf16.msra.mxu0 0
        %5147 = vmatprep.subr.bf16.mxu0 0
        %5148 = vmatpush1.bf16.msra.mxu0 0
        %5149 = vmatprep.mubr.f32.mxu0 0.0
        %5150 = vmatmul.mubr.f32.gmra.mrb[0].mxu0 %v4923
        %v5151 = vpop.f32.mrb[0].mxu0
        %v5152 = vadd.f32 0.0, %v5151
        %v5153 = vpop.f32.mrb[0].mxu0
        %5154 = vmatprep.mubr.f32.mxu0 0.0
        %5155 = vmatmul.mubr.f32.gmra.mrb[0].mxu0 %v4926
        %v5156 = vpop.f32.mrb[0].mxu0
        %v5157 = vadd.f32 0.0, %v5156
        %v5158 = vpop.f32.mrb[0].mxu0
        %5159 = vmatprep.mubr.f32.mxu0 0.0
        %5160 = vmatmul.mubr.f32.gmra.mrb[0].mxu0 %v4929
        %v5161 = vpop.f32.mrb[0].mxu0
        %v5162 = vadd.f32 0.0, %v5161
        %v5163 = vpop.f32.mrb[0].mxu0
        %5164 = vmatprep.mubr.f32.mxu0 0.0
        %5165 = vmatmul.mubr.f32.gmra.mrb[0].mxu0 %v4932
        %v5166 = vpop.f32.mrb[0].mxu0
        %v5167 = vadd.f32 0.0, %v5166
        %v5168 = vpop.f32.mrb[0].mxu0
        %5169 = vmatprep.mubr.f32.mxu0 0.0
        %5170 = vmatmul.mubr.f32.gmra.mrb[0].mxu0 %v4935
        %v5171 = vpop.f32.mrb[0].mxu0
        %v5172 = vadd.f32 0.0, %v5171
        %v5173 = vpop.f32.mrb[0].mxu0
        %5174 = vmatprep.mubr.f32.mxu0 0.0
        %5175 = vmatmul.mubr.f32.gmra.mrb[0].mxu0 %v4938
        %v5176 = vpop.f32.mrb[0].mxu0
        %v5177 = vadd.f32 0.0, %v5176
        %v5178 = vpop.f32.mrb[0].mxu0
        %5179 = vmatprep.mubr.f32.mxu0 0.0
        %5180 = vmatmul.mubr.f32.gmra.mrb[0].mxu0 %v4941
        %v5181 = vpop.f32.mrb[0].mxu0
        %v5182 = vadd.f32 0.0, %v5181
        %v5183 = vpop.f32.mrb[0].mxu0
        %5184 = vmatprep.mubr.f32.mxu0 0.0
        %5185 = vmatmul.mubr.f32.gmra.mrb[0].mxu0 %v4944
        %v5186 = vpop.f32.mrb[0].mxu0
        %v5187 = vadd.f32 0.0, %v5186
        %v5188 = vpop.f32.mrb[0].mxu0
        %5189 = vmatprep.mubr.f32.mxu0 0.0
        %5190 = vmatmul.mubr.f32.gmra.mrb[0].mxu0 %v4947
        %v5191 = vpop.f32.mrb[0].mxu0
        %v5192 = vadd.f32 0.0, %v5191
        %v5193 = vpop.f32.mrb[0].mxu0
        %5194 = vmatprep.mubr.f32.mxu0 0.0
        %5195 = vmatmul.mubr.f32.gmra.mrb[0].mxu0 %v4950
        %v5196 = vpop.f32.mrb[0].mxu0
        %v5197 = vadd.f32 0.0, %v5196
        %v5198 = vpop.f32.mrb[0].mxu0
        %5199 = vmatprep.mubr.f32.mxu0 0.0
        %5200 = vmatmul.mubr.f32.gmra.mrb[0].mxu0 %v4953
        %v5201 = vpop.f32.mrb[0].mxu0
        %v5202 = vadd.f32 0.0, %v5201
        %v5203 = vpop.f32.mrb[0].mxu0
        %5204 = vmatprep.mubr.f32.mxu0 0.0
        %5205 = vmatmul.mubr.f32.gmra.mrb[0].mxu0 %v4956
        %v5206 = vpop.f32.mrb[0].mxu0
        %v5207 = vadd.f32 0.0, %v5206
        %v5208 = vpop.f32.mrb[0].mxu0
        %5209 = vmatprep.mubr.f32.mxu0 0.0
        %5210 = vmatmul.mubr.f32.gmra.mrb[0].mxu0 %v4959
        %v5211 = vpop.f32.mrb[0].mxu0
        %v5212 = vadd.f32 0.0, %v5211
        %v5213 = vpop.f32.mrb[0].mxu0
        %5214 = vmatprep.mubr.f32.mxu0 0.0
        %5215 = vmatmul.mubr.f32.gmra.mrb[0].mxu0 %v4962
        %v5216 = vpop.f32.mrb[0].mxu0
        %v5217 = vadd.f32 0.0, %v5216
        %v5218 = vpop.f32.mrb[0].mxu0
        %5219 = vmatprep.mubr.f32.mxu0 0.0
        %5220 = vmatmul.mubr.f32.gmra.mrb[0].mxu0 %v4965
        %v5221 = vpop.f32.mrb[0].mxu0
        %v5222 = vadd.f32 0.0, %v5221
        %v5223 = vpop.f32.mrb[0].mxu0
        %5224 = vmatprep.mubr.f32.mxu0 0.0
        %5225 = vmatmul.mubr.f32.gmra.mrb[0].mxu0 %v4968
        %v5226 = vpop.f32.mrb[0].mxu0
        %v5227 = vadd.f32 0.0, %v5226
        %v5228 = vpop.f32.mrb[0].mxu0
        %5229 = vmatprep.mubr.f32.mxu0 0.0
        %5230 = vmatmul.mubr.f32.gmra.mrb[0].mxu0 %v4971
        %v5231 = vpop.f32.mrb[0].mxu0
        %v5232 = vadd.f32 0.0, %v5231
        %v5233 = vpop.f32.mrb[0].mxu0
        %5234 = vmatprep.mubr.f32.mxu0 0.0
        %5235 = vmatmul.mubr.f32.gmra.mrb[0].mxu0 %v4974
        %v5236 = vpop.f32.mrb[0].mxu0
        %v5237 = vadd.f32 0.0, %v5236
        %v5238 = vpop.f32.mrb[0].mxu0
        %5239 = vmatprep.mubr.f32.mxu0 0.0
        %5240 = vmatmul.mubr.f32.gmra.mrb[0].mxu0 %v4977
        %v5241 = vpop.f32.mrb[0].mxu0
        %v5242 = vadd.f32 0.0, %v5241
        %v5243 = vpop.f32.mrb[0].mxu0
        %5244 = vmatprep.mubr.f32.mxu0 0.0
        %5245 = vmatmul.mubr.f32.gmra.mrb[0].mxu0 %v4980
        %v5246 = vpop.f32.mrb[0].mxu0
        %v5247 = vadd.f32 0.0, %v5246
        %v5248 = vpop.f32.mrb[0].mxu0
        %5249 = vmatprep.mubr.f32.mxu0 0.0
        %5250 = vmatmul.mubr.f32.gmra.mrb[0].mxu0 %v4983
        %v5251 = vpop.f32.mrb[0].mxu0
        %v5252 = vadd.f32 0.0, %v5251
        %v5253 = vpop.f32.mrb[0].mxu0
        %5254 = vmatprep.mubr.f32.mxu0 0.0
        %5255 = vmatmul.mubr.f32.gmra.mrb[0].mxu0 %v4986
        %v5256 = vpop.f32.mrb[0].mxu0
        %v5257 = vadd.f32 0.0, %v5256
        %v5258 = vpop.f32.mrb[0].mxu0
        %5259 = vmatprep.mubr.f32.mxu0 0.0
        %5260 = vmatmul.mubr.f32.gmra.mrb[0].mxu0 %v4989
        %v5261 = vpop.f32.mrb[0].mxu0
        %v5262 = vadd.f32 0.0, %v5261
        %v5263 = vpop.f32.mrb[0].mxu0
        %5264 = vmatprep.mubr.f32.mxu0 0.0
        %5265 = vmatmul.mubr.f32.gmra.mrb[0].mxu0 %v4992
        %v5266 = vpop.f32.mrb[0].mxu0
        %v5267 = vadd.f32 0.0, %v5266
        %v5268 = vpop.f32.mrb[0].mxu0
        %5269 = vmatprep.mubr.f32.mxu0 0.0
        %5270 = vmatmul.mubr.f32.gmra.mrb[0].mxu0 %v4995
        %v5271 = vpop.f32.mrb[0].mxu0
        %v5272 = vadd.f32 0.0, %v5271
        %v5273 = vpop.f32.mrb[0].mxu0
        %5274 = vmatprep.mubr.f32.mxu0 0.0
        %5275 = vmatmul.mubr.f32.gmra.mrb[0].mxu0 %v4998
        %v5276 = vpop.f32.mrb[0].mxu0
        %v5277 = vadd.f32 0.0, %v5276
        %v5278 = vpop.f32.mrb[0].mxu0
        %5279 = vmatprep.mubr.f32.mxu0 0.0
        %5280 = vmatmul.mubr.f32.gmra.mrb[0].mxu0 %v5001
        %v5281 = vpop.f32.mrb[0].mxu0
        %v5282 = vadd.f32 0.0, %v5281
        %v5283 = vpop.f32.mrb[0].mxu0
        %5284 = vmatprep.mubr.f32.mxu0 0.0
        %5285 = vmatmul.mubr.f32.gmra.mrb[0].mxu0 %v5004
        %v5286 = vpop.f32.mrb[0].mxu0
        %v5287 = vadd.f32 0.0, %v5286
        %v5288 = vpop.f32.mrb[0].mxu0
        %5289 = vmatprep.mubr.f32.mxu0 0.0
        %5290 = vmatmul.mubr.f32.gmra.mrb[0].mxu0 %v5007
        %v5291 = vpop.f32.mrb[0].mxu0
        %v5292 = vadd.f32 0.0, %v5291
        %v5293 = vpop.f32.mrb[0].mxu0
        %5294 = vmatprep.mubr.f32.mxu0 0.0
        %5295 = vmatmul.mubr.f32.gmra.mrb[0].mxu0 %v5010
        %v5296 = vpop.f32.mrb[0].mxu0
        %v5297 = vadd.f32 0.0, %v5296
        %v5298 = vpop.f32.mrb[0].mxu0
        %5299 = vmatprep.mubr.f32.mxu0 0.0
        %5300 = vmatmul.mubr.f32.gmra.mrb[0].mxu0 %v5013
        %v5301 = vpop.f32.mrb[0].mxu0
        %v5302 = vadd.f32 0.0, %v5301
        %v5303 = vpop.f32.mrb[0].mxu0
        %5304 = vmatprep.mubr.f32.mxu0 0.0
        %5305 = vmatmul.mubr.f32.gmra.mrb[0].mxu0 %v5016
        %v5306 = vpop.f32.mrb[0].mxu0
        %v5307 = vadd.f32 0.0, %v5306
        %v5308 = vpop.f32.mrb[0].mxu0
        %5309 = vmatprep.mubr.f32.mxu0 0.0
        %5310 = vmatmul.mubr.f32.gmra.mrb[0].mxu0 %v5019
        %v5311 = vpop.f32.mrb[0].mxu0
        %v5312 = vadd.f32 0.0, %v5311
        %v5313 = vpop.f32.mrb[0].mxu0
        %5314 = vmatprep.mubr.f32.mxu0 0.0
        %5315 = vmatmul.mubr.f32.gmra.mrb[0].mxu0 %v5022
        %v5316 = vpop.f32.mrb[0].mxu0
        %v5317 = vadd.f32 0.0, %v5316
        %v5318 = vpop.f32.mrb[0].mxu0
        %5319 = vmatprep.mubr.f32.mxu0 0.0
        %5320 = vmatmul.mubr.f32.gmra.mrb[0].mxu0 %v5025
        %v5321 = vpop.f32.mrb[0].mxu0
        %v5322 = vadd.f32 0.0, %v5321
        %v5323 = vpop.f32.mrb[0].mxu0
        %5324 = vmatprep.mubr.f32.mxu0 0.0
        %5325 = vmatmul.mubr.f32.gmra.mrb[0].mxu0 %v5028
        %v5326 = vpop.f32.mrb[0].mxu0
        %v5327 = vadd.f32 0.0, %v5326
        %v5328 = vpop.f32.mrb[0].mxu0
        %5329 = vmatprep.mubr.f32.mxu0 0.0
        %5330 = vmatmul.mubr.f32.gmra.mrb[0].mxu0 %v5031
        %v5331 = vpop.f32.mrb[0].mxu0
        %v5332 = vadd.f32 0.0, %v5331
        %v5333 = vpop.f32.mrb[0].mxu0
        %5334 = vmatprep.mubr.f32.mxu0 0.0
        %5335 = vmatmul.mubr.f32.gmra.mrb[0].mxu0 %v5034
        %v5336 = vpop.f32.mrb[0].mxu0
        %v5337 = vadd.f32 0.0, %v5336
        %v5338 = vpop.f32.mrb[0].mxu0
        %5339 = vmatprep.mubr.f32.mxu0 0.0
        %5340 = vmatmul.mubr.f32.gmra.mrb[0].mxu0 %v5037
        %v5341 = vpop.f32.mrb[0].mxu0
        %v5342 = vadd.f32 0.0, %v5341
        %v5343 = vpop.f32.mrb[0].mxu0
        %5344 = vmatprep.mubr.f32.mxu0 0.0
        %5345 = vmatmul.mubr.f32.gmra.mrb[0].mxu0 %v5040
        %v5346 = vpop.f32.mrb[0].mxu0
        %v5347 = vadd.f32 0.0, %v5346
        %v5348 = vpop.f32.mrb[0].mxu0
        %5349 = vmatprep.mubr.f32.mxu0 0.0
        %5350 = vmatmul.mubr.f32.gmra.mrb[0].mxu0 %v5043
        %v5351 = vpop.f32.mrb[0].mxu0
        %v5352 = vadd.f32 0.0, %v5351
        %v5353 = vpop.f32.mrb[0].mxu0
        %5354 = vmatprep.mubr.f32.mxu0 0.0
        %5355 = vmatmul.mubr.f32.gmra.mrb[0].mxu0 %v5046
        %v5356 = vpop.f32.mrb[0].mxu0
        %v5357 = vadd.f32 0.0, %v5356
        %v5358 = vpop.f32.mrb[0].mxu0
        %5359 = vmatprep.mubr.f32.mxu0 0.0
        %5360 = vmatmul.mubr.f32.gmra.mrb[0].mxu0 %v5049
        %v5361 = vpop.f32.mrb[0].mxu0
        %v5362 = vadd.f32 0.0, %v5361
        %v5363 = vpop.f32.mrb[0].mxu0
        %5364 = vmatprep.mubr.f32.mxu0 0.0
        %5365 = vmatmul.mubr.f32.gmra.mrb[0].mxu0 %v5052
        %v5366 = vpop.f32.mrb[0].mxu0
        %v5367 = vadd.f32 0.0, %v5366
        %v5368 = vpop.f32.mrb[0].mxu0
        %5369 = vmatprep.mubr.f32.mxu0 0.0
        %5370 = vmatmul.mubr.f32.gmra.mrb[0].mxu0 %v5055
        %v5371 = vpop.f32.mrb[0].mxu0
        %v5372 = vadd.f32 0.0, %v5371
        %v5373 = vpop.f32.mrb[0].mxu0
        %5374 = vmatprep.mubr.f32.mxu0 0.0
        %5375 = vmatmul.mubr.f32.gmra.mrb[0].mxu0 %v5058
        %v5376 = vpop.f32.mrb[0].mxu0
        %v5377 = vadd.f32 0.0, %v5376
        %v5378 = vpop.f32.mrb[0].mxu0
        %5379 = vmatprep.mubr.f32.mxu0 0.0
        %5380 = vmatmul.mubr.f32.gmra.mrb[0].mxu0 %v5061
        %v5381 = vpop.f32.mrb[0].mxu0
        %v5382 = vadd.f32 0.0, %v5381
        %v5383 = vpop.f32.mrb[0].mxu0
        %5384 = vmatprep.mubr.f32.mxu0 0.0
        %5385 = vmatmul.mubr.f32.gmra.mrb[0].mxu0 %v5064
        %v5386 = vpop.f32.mrb[0].mxu0
        %v5387 = vadd.f32 0.0, %v5386
        %v5388 = vpop.f32.mrb[0].mxu0
        %5389 = vmatprep.mubr.f32.mxu0 0.0
        %5390 = vmatmul.mubr.f32.gmra.mrb[0].mxu0 %v5067
        %v5391 = vpop.f32.mrb[0].mxu0
        %v5392 = vadd.f32 0.0, %v5391
        %v5393 = vpop.f32.mrb[0].mxu0
        %5394 = vmatprep.mubr.f32.mxu0 0.0
        %5395 = vmatmul.mubr.f32.gmra.mrb[0].mxu0 %v5070
        %v5396 = vpop.f32.mrb[0].mxu0
        %v5397 = vadd.f32 0.0, %v5396
        %v5398 = vpop.f32.mrb[0].mxu0
        %5399 = vmatprep.mubr.f32.mxu0 0.0
        %5400 = vmatmul.mubr.f32.gmra.mrb[0].mxu0 %v5073
        %v5401 = vpop.f32.mrb[0].mxu0
        %v5402 = vadd.f32 0.0, %v5401
        %v5403 = vpop.f32.mrb[0].mxu0
        %5404 = vmatprep.mubr.f32.mxu0 0.0
        %5405 = vmatmul.mubr.f32.gmra.mrb[0].mxu0 %v5076
        %v5406 = vpop.f32.mrb[0].mxu0
        %v5407 = vadd.f32 0.0, %v5406
        %v5408 = vpop.f32.mrb[0].mxu0
        %5409 = vmatprep.mubr.f32.mxu0 0.0
        %5410 = vmatmul.mubr.f32.gmra.mrb[0].mxu0 %v5079
        %v5411 = vpop.f32.mrb[0].mxu0
        %v5412 = vadd.f32 0.0, %v5411
        %v5413 = vpop.f32.mrb[0].mxu0
        %5414 = vmatprep.mubr.f32.mxu0 0.0
        %5415 = vmatmul.mubr.f32.gmra.mrb[0].mxu0 %v5082
        %v5416 = vpop.f32.mrb[0].mxu0
        %v5417 = vadd.f32 0.0, %v5416
        %v5418 = vpop.f32.mrb[0].mxu0
        %5419 = vmatprep.mubr.f32.mxu0 0.0
        %5420 = vmatmul.mubr.f32.gmra.mrb[0].mxu0 %v5085
        %v5421 = vpop.f32.mrb[0].mxu0
        %v5422 = vadd.f32 0.0, %v5421
        %v5423 = vpop.f32.mrb[0].mxu0
        %5424 = vmatprep.mubr.f32.mxu0 0.0
        %5425 = vmatmul.mubr.f32.gmra.mrb[0].mxu0 %v5088
        %v5426 = vpop.f32.mrb[0].mxu0
        %v5427 = vadd.f32 0.0, %v5426
        %v5428 = vpop.f32.mrb[0].mxu0
        %5429 = vmatprep.mubr.f32.mxu0 0.0
        %5430 = vmatmul.mubr.f32.gmra.mrb[0].mxu0 %v5091
        %v5431 = vpop.f32.mrb[0].mxu0
        %v5432 = vadd.f32 0.0, %v5431
        %v5433 = vpop.f32.mrb[0].mxu0
        %5434 = vmatprep.mubr.f32.mxu0 0.0
        %5435 = vmatmul.mubr.f32.gmra.mrb[0].mxu0 %v5094
        %v5436 = vpop.f32.mrb[0].mxu0
        %v5437 = vadd.f32 0.0, %v5436
        %v5438 = vpop.f32.mrb[0].mxu0
        %5439 = vmatprep.mubr.f32.mxu0 0.0
        %5440 = vmatmul.mubr.f32.gmra.mrb[0].mxu0 %v5097
        %v5441 = vpop.f32.mrb[0].mxu0
        %v5442 = vadd.f32 0.0, %v5441
        %v5443 = vpop.f32.mrb[0].mxu0
        %5444 = vmatprep.mubr.f32.mxu0 0.0
        %5445 = vmatmul.mubr.f32.gmra.mrb[0].mxu0 %v5100
        %v5446 = vpop.f32.mrb[0].mxu0
        %v5447 = vadd.f32 0.0, %v5446
        %v5448 = vpop.f32.mrb[0].mxu0
        %5449 = vmatprep.mubr.f32.mxu0 0.0
        %5450 = vmatmul.mubr.f32.gmra.mrb[0].mxu0 %v5103
        %v5451 = vpop.f32.mrb[0].mxu0
        %v5452 = vadd.f32 0.0, %v5451
        %v5453 = vpop.f32.mrb[0].mxu0
        %5454 = vmatprep.mubr.f32.mxu0 0.0
        %5455 = vmatmul.mubr.f32.gmra.mrb[0].mxu0 %v5106
        %v5456 = vpop.f32.mrb[0].mxu0
        %v5457 = vadd.f32 0.0, %v5456
        %v5458 = vpop.f32.mrb[0].mxu0
        %5459 = vmatprep.mubr.f32.mxu0 0.0
        %5460 = vmatmul.mubr.f32.gmra.mrb[0].mxu0 %v5109
        %v5461 = vpop.f32.mrb[0].mxu0
        %v5462 = vadd.f32 0.0, %v5461
        %v5463 = vpop.f32.mrb[0].mxu0
        %5464 = vmatprep.mubr.f32.mxu0 0.0
        %5465 = vmatmul.mubr.f32.gmra.mrb[0].mxu0 %v5112
        %v5466 = vpop.f32.mrb[0].mxu0
        %v5467 = vadd.f32 0.0, %v5466
        %v5468 = vpop.f32.mrb[0].mxu0
        %5469 = vdwg.mxu0
        %v5470 = vadd.f32 %v4792, %v5152
        %v5471 = vadd.f32 %v4793, %v5157
        %v5472 = vadd.f32 %v4794, %v5162
        %v5473 = vadd.f32 %v4795, %v5167
        %v5474 = vadd.f32 %v4796, %v5172
        %v5475 = vadd.f32 %v4797, %v5177
        %v5476 = vadd.f32 %v4798, %v5182
        %v5477 = vadd.f32 %v4799, %v5187
        %v5478 = vadd.f32 %v4800, %v5192
        %v5479 = vadd.f32 %v4801, %v5197
        %v5480 = vadd.f32 %v4802, %v5202
        %v5481 = vadd.f32 %v4803, %v5207
        %v5482 = vadd.f32 %v4804, %v5212
        %v5483 = vadd.f32 %v4805, %v5217
        %v5484 = vadd.f32 %v4806, %v5222
        %v5485 = vadd.f32 %v4807, %v5227
        %v5486 = vadd.f32 %v4808, %v5232
        %v5487 = vadd.f32 %v4809, %v5237
        %v5488 = vadd.f32 %v4810, %v5242
        %v5489 = vadd.f32 %v4811, %v5247
        %v5490 = vadd.f32 %v4812, %v5252
        %v5491 = vadd.f32 %v4813, %v5257
        %v5492 = vadd.f32 %v4814, %v5262
        %v5493 = vadd.f32 %v4815, %v5267
        %v5494 = vadd.f32 %v4816, %v5272
        %v5495 = vadd.f32 %v4817, %v5277
        %v5496 = vadd.f32 %v4818, %v5282
        %v5497 = vadd.f32 %v4819, %v5287
        %v5498 = vadd.f32 %v4820, %v5292
        %v5499 = vadd.f32 %v4821, %v5297
        %v5500 = vadd.f32 %v4822, %v5302
        %v5501 = vadd.f32 %v4823, %v5307
        %v5502 = vadd.f32 %v4824, %v5312
        %v5503 = vadd.f32 %v4825, %v5317
        %v5504 = vadd.f32 %v4826, %v5322
        %v5505 = vadd.f32 %v4827, %v5327
        %v5506 = vadd.f32 %v4828, %v5332
        %v5507 = vadd.f32 %v4829, %v5337
        %v5508 = vadd.f32 %v4830, %v5342
        %v5509 = vadd.f32 %v4831, %v5347
        %v5510 = vadd.f32 %v4832, %v5352
        %v5511 = vadd.f32 %v4833, %v5357
        %v5512 = vadd.f32 %v4834, %v5362
        %v5513 = vadd.f32 %v4835, %v5367
        %v5514 = vadd.f32 %v4836, %v5372
        %v5515 = vadd.f32 %v4837, %v5377
        %v5516 = vadd.f32 %v4838, %v5382
        %v5517 = vadd.f32 %v4839, %v5387
        %v5518 = vadd.f32 %v4840, %v5392
        %v5519 = vadd.f32 %v4841, %v5397
        %v5520 = vadd.f32 %v4842, %v5402
        %v5521 = vadd.f32 %v4843, %v5407
        %v5522 = vadd.f32 %v4844, %v5412
        %v5523 = vadd.f32 %v4845, %v5417
        %v5524 = vadd.f32 %v4846, %v5422
        %v5525 = vadd.f32 %v4847, %v5427
        %v5526 = vadd.f32 %v4848, %v5432
        %v5527 = vadd.f32 %v4849, %v5437
        %v5528 = vadd.f32 %v4850, %v5442
        %v5529 = vadd.f32 %v4851, %v5447
        %v5530 = vadd.f32 %v4852, %v5452
        %v5531 = vadd.f32 %v4853, %v5457
        %v5532 = vadd.f32 %v4854, %v5462
        %v5533 = vadd.f32 %v4855, %v5467
        %v5534 = vld [vmem:[%s4177 + $0x2] sm:$0xff]
        %v5535 = vld [vmem:[%s4177 + $0xa] sm:$0xff]
        %v5536 = vld [vmem:[%s4177 + $0x12] sm:$0xff]
        %v5537 = vld [vmem:[%s4177 + $0x1a] sm:$0xff]
        %v5538 = vld [vmem:[%s4177 + $0x22] sm:$0xff]
        %v5539 = vld [vmem:[%s4177 + $0x2a] sm:$0xff]
        %v5540 = vld [vmem:[%s4177 + $0x32] sm:$0xff]
        %v5541 = vld [vmem:[%s4177 + $0x3a] sm:$0xff]
        %v5542 = vld [vmem:[%s4177 + $0x4a] sm:$0xff]
        %v5543 = vld [vmem:[%s4177 + $0x52] sm:$0xff]
        %v5544 = vld [vmem:[%s4177 + $0x5a] sm:$0xff]
        %v5545 = vld [vmem:[%s4177 + $0x62] sm:$0xff]
        %v5546 = vld [vmem:[%s4177 + $0x6a] sm:$0xff]
        %v5547 = vld [vmem:[%s4177 + $0x72] sm:$0xff]
        %v5548 = vld [vmem:[%s4177 + $0x7a] sm:$0xff]
        %v5549 = vld [vmem:[%s4177 + $0x82] sm:$0xff]
        %v5550 = vld [vmem:[%s4177 + $0x92] sm:$0xff]
        %v5551 = vld [vmem:[%s4177 + $0x9a] sm:$0xff]
        %v5552 = vld [vmem:[%s4177 + $0xa2] sm:$0xff]
        %v5553 = vld [vmem:[%s4177 + $0xaa] sm:$0xff]
        %v5554 = vld [vmem:[%s4177 + $0xb2] sm:$0xff]
        %v5555 = vld [vmem:[%s4177 + $0xba] sm:$0xff]
        %v5556 = vld [vmem:[%s4177 + $0xc2] sm:$0xff]
        %v5557 = vld [vmem:[%s4177 + $0xca] sm:$0xff]
        %v5558 = vld [vmem:[%s4177 + $0xda] sm:$0xff]
        %v5559 = vld [vmem:[%s4177 + $0xe2] sm:$0xff]
        %v5560 = vld [vmem:[%s4177 + $0xea] sm:$0xff]
        %v5561 = vld [vmem:[%s4177 + $0xf2] sm:$0xff]
        %v5562 = vld [vmem:[%s4177 + $0xfa] sm:$0xff]
        %v5563 = vld [vmem:[%s4177 + $0x102] sm:$0xff]
        %v5564 = vld [vmem:[%s4177 + $0x10a] sm:$0xff]
        %v5565 = vld [vmem:[%s4177 + $0x112] sm:$0xff]
        %v5566 = vld [vmem:[%s4177 + $0x122] sm:$0xff]
        %v5567 = vld [vmem:[%s4177 + $0x12a] sm:$0xff]
        %v5568 = vld [vmem:[%s4177 + $0x132] sm:$0xff]
        %v5569 = vld [vmem:[%s4177 + $0x13a] sm:$0xff]
        %v5570 = vld [vmem:[%s4177 + $0x142] sm:$0xff]
        %v5571 = vld [vmem:[%s4177 + $0x14a] sm:$0xff]
        %v5572 = vld [vmem:[%s4177 + $0x152] sm:$0xff]
        %v5573 = vld [vmem:[%s4177 + $0x15a] sm:$0xff]
        %v5574 = vld [vmem:[%s4177 + $0x16a] sm:$0xff]
        %v5575 = vld [vmem:[%s4177 + $0x172] sm:$0xff]
        %v5576 = vld [vmem:[%s4177 + $0x17a] sm:$0xff]
        %v5577 = vld [vmem:[%s4177 + $0x182] sm:$0xff]
        %v5578 = vld [vmem:[%s4177 + $0x18a] sm:$0xff]
        %v5579 = vld [vmem:[%s4177 + $0x192] sm:$0xff]
        %v5580 = vld [vmem:[%s4177 + $0x19a] sm:$0xff]
        %v5581 = vld [vmem:[%s4177 + $0x1a2] sm:$0xff]
        %v5582 = vld [vmem:[%s4177 + $0x1b2] sm:$0xff]
        %v5583 = vld [vmem:[%s4177 + $0x1ba] sm:$0xff]
        %v5584 = vld [vmem:[%s4177 + $0x1c2] sm:$0xff]
        %v5585 = vld [vmem:[%s4177 + $0x1ca] sm:$0xff]
        %v5586 = vld [vmem:[%s4177 + $0x1d2] sm:$0xff]
        %v5587 = vld [vmem:[%s4177 + $0x1da] sm:$0xff]
        %v5588 = vld [vmem:[%s4177 + $0x1e2] sm:$0xff]
        %v5589 = vld [vmem:[%s4177 + $0x1ea] sm:$0xff]
        %v5590 = vld [vmem:[%s4177 + $0x1fa] sm:$0xff]
        %v5591 = vld [vmem:[%s4177 + $0x202] sm:$0xff]
        %v5592 = vld [vmem:[%s4177 + $0x20a] sm:$0xff]
        %v5593 = vld [vmem:[%s4177 + $0x212] sm:$0xff]
        %v5594 = vld [vmem:[%s4177 + $0x21a] sm:$0xff]
        %v5595 = vld [vmem:[%s4177 + $0x222] sm:$0xff]
        %v5596 = vld [vmem:[%s4177 + $0x22a] sm:$0xff]
        %v5597 = vld [vmem:[%s4177 + $0x232] sm:$0xff]
        %s5598 = scalar_lea.vmem %s219, 16
        %v5599 = vld [vmem:[%s5598] sm:$0x3]
        %v5601 = vsel %vm359, %v5534, 0
        %v5604 = vsel %vm359, %v5535, 0
        %v5607 = vsel %vm359, %v5536, 0
        %v5610 = vsel %vm359, %v5537, 0
        %v5613 = vsel %vm359, %v5538, 0
        %v5616 = vsel %vm359, %v5539, 0
        %v5619 = vsel %vm359, %v5540, 0
        %v5622 = vsel %vm359, %v5541, 0
        %v5625 = vsel %vm359, %v5542, 0
        %v5628 = vsel %vm359, %v5543, 0
        %v5631 = vsel %vm359, %v5544, 0
        %v5634 = vsel %vm359, %v5545, 0
        %v5637 = vsel %vm359, %v5546, 0
        %v5640 = vsel %vm359, %v5547, 0
        %v5643 = vsel %vm359, %v5548, 0
        %v5646 = vsel %vm359, %v5549, 0
        %v5649 = vsel %vm359, %v5550, 0
        %v5652 = vsel %vm359, %v5551, 0
        %v5655 = vsel %vm359, %v5552, 0
        %v5658 = vsel %vm359, %v5553, 0
        %v5661 = vsel %vm359, %v5554, 0
        %v5664 = vsel %vm359, %v5555, 0
        %v5667 = vsel %vm359, %v5556, 0
        %v5670 = vsel %vm359, %v5557, 0
        %v5673 = vsel %vm359, %v5558, 0
        %v5676 = vsel %vm359, %v5559, 0
        %v5679 = vsel %vm359, %v5560, 0
        %v5682 = vsel %vm359, %v5561, 0
        %v5685 = vsel %vm359, %v5562, 0
        %v5688 = vsel %vm359, %v5563, 0
        %v5691 = vsel %vm359, %v5564, 0
        %v5694 = vsel %vm359, %v5565, 0
        %v5697 = vsel %vm359, %v5566, 0
        %v5700 = vsel %vm359, %v5567, 0
        %v5703 = vsel %vm359, %v5568, 0
        %v5706 = vsel %vm359, %v5569, 0
        %v5709 = vsel %vm359, %v5570, 0
        %v5712 = vsel %vm359, %v5571, 0
        %v5715 = vsel %vm359, %v5572, 0
        %v5718 = vsel %vm359, %v5573, 0
        %v5721 = vsel %vm359, %v5574, 0
        %v5724 = vsel %vm359, %v5575, 0
        %v5727 = vsel %vm359, %v5576, 0
        %v5730 = vsel %vm359, %v5577, 0
        %v5733 = vsel %vm359, %v5578, 0
        %v5736 = vsel %vm359, %v5579, 0
        %v5739 = vsel %vm359, %v5580, 0
        %v5742 = vsel %vm359, %v5581, 0
        %v5745 = vsel %vm359, %v5582, 0
        %v5748 = vsel %vm359, %v5583, 0
        %v5751 = vsel %vm359, %v5584, 0
        %v5754 = vsel %vm359, %v5585, 0
        %v5757 = vsel %vm359, %v5586, 0
        %v5760 = vsel %vm359, %v5587, 0
        %v5763 = vsel %vm359, %v5588, 0
        %v5766 = vsel %vm359, %v5589, 0
        %v5769 = vsel %vm359, %v5590, 0
        %v5772 = vsel %vm359, %v5591, 0
        %v5775 = vsel %vm359, %v5592, 0
        %v5778 = vsel %vm359, %v5593, 0
        %v5781 = vsel %vm359, %v5594, 0
        %v5784 = vsel %vm359, %v5595, 0
        %v5787 = vsel %vm359, %v5596, 0
        %v5790 = vsel %vm359, %v5597, 0
        %v5793 = vand.u32 %v5599, %v555
        %5795 = vmatprep.subr.bf16.mxu0 0
        %5796 = vmatpush1.bf16.msra.mxu0 %v5793
        %5797 = vmatprep.subr.bf16.mxu0 0
        %5798 = vmatpush1.bf16.msra.mxu0 0
        %5799 = vmatprep.subr.bf16.mxu0 0
        %5800 = vmatpush1.bf16.msra.mxu0 0
        %5801 = vmatprep.subr.bf16.mxu0 0
        %5802 = vmatpush1.bf16.msra.mxu0 0
        %5803 = vmatprep.subr.bf16.mxu0 0
        %5804 = vmatpush1.bf16.msra.mxu0 0
        %5805 = vmatprep.subr.bf16.mxu0 0
        %5806 = vmatpush1.bf16.msra.mxu0 0
        %5807 = vmatprep.subr.bf16.mxu0 0
        %5808 = vmatpush1.bf16.msra.mxu0 0
        %5809 = vmatprep.subr.bf16.mxu0 0
        %5810 = vmatpush1.bf16.msra.mxu0 0
        %5811 = vmatprep.subr.bf16.mxu0 0
        %5812 = vmatpush1.bf16.msra.mxu0 0
        %5813 = vmatprep.subr.bf16.mxu0 0
        %5814 = vmatpush1.bf16.msra.mxu0 0
        %5815 = vmatprep.subr.bf16.mxu0 0
        %5816 = vmatpush1.bf16.msra.mxu0 0
        %5817 = vmatprep.subr.bf16.mxu0 0
        %5818 = vmatpush1.bf16.msra.mxu0 0
        %5819 = vmatprep.subr.bf16.mxu0 0
        %5820 = vmatpush1.bf16.msra.mxu0 0
        %5821 = vmatprep.subr.bf16.mxu0 0
        %5822 = vmatpush1.bf16.msra.mxu0 0
        %5823 = vmatprep.subr.bf16.mxu0 0
        %5824 = vmatpush1.bf16.msra.mxu0 0
        %5825 = vmatprep.subr.bf16.mxu0 0
        %5826 = vmatpush1.bf16.msra.mxu0 0
        %5827 = vmatprep.mubr.f32.mxu0 0.0
        %5828 = vmatmul.mubr.f32.gmra.mrb[0].mxu0 %v5601
        %v5829 = vpop.f32.mrb[0].mxu0
        %v5830 = vadd.f32 0.0, %v5829
        %v5831 = vpop.f32.mrb[0].mxu0
        %5832 = vmatprep.mubr.f32.mxu0 0.0
        %5833 = vmatmul.mubr.f32.gmra.mrb[0].mxu0 %v5604
        %v5834 = vpop.f32.mrb[0].mxu0
        %v5835 = vadd.f32 0.0, %v5834
        %v5836 = vpop.f32.mrb[0].mxu0
        %5837 = vmatprep.mubr.f32.mxu0 0.0
        %5838 = vmatmul.mubr.f32.gmra.mrb[0].mxu0 %v5607
        %v5839 = vpop.f32.mrb[0].mxu0
        %v5840 = vadd.f32 0.0, %v5839
        %v5841 = vpop.f32.mrb[0].mxu0
        %5842 = vmatprep.mubr.f32.mxu0 0.0
        %5843 = vmatmul.mubr.f32.gmra.mrb[0].mxu0 %v5610
        %v5844 = vpop.f32.mrb[0].mxu0
        %v5845 = vadd.f32 0.0, %v5844
        %v5846 = vpop.f32.mrb[0].mxu0
        %5847 = vmatprep.mubr.f32.mxu0 0.0
        %5848 = vmatmul.mubr.f32.gmra.mrb[0].mxu0 %v5613
        %v5849 = vpop.f32.mrb[0].mxu0
        %v5850 = vadd.f32 0.0, %v5849
        %v5851 = vpop.f32.mrb[0].mxu0
        %5852 = vmatprep.mubr.f32.mxu0 0.0
        %5853 = vmatmul.mubr.f32.gmra.mrb[0].mxu0 %v5616
        %v5854 = vpop.f32.mrb[0].mxu0
        %v5855 = vadd.f32 0.0, %v5854
        %v5856 = vpop.f32.mrb[0].mxu0
        %5857 = vmatprep.mubr.f32.mxu0 0.0
        %5858 = vmatmul.mubr.f32.gmra.mrb[0].mxu0 %v5619
        %v5859 = vpop.f32.mrb[0].mxu0
        %v5860 = vadd.f32 0.0, %v5859
        %v5861 = vpop.f32.mrb[0].mxu0
        %5862 = vmatprep.mubr.f32.mxu0 0.0
        %5863 = vmatmul.mubr.f32.gmra.mrb[0].mxu0 %v5622
        %v5864 = vpop.f32.mrb[0].mxu0
        %v5865 = vadd.f32 0.0, %v5864
        %v5866 = vpop.f32.mrb[0].mxu0
        %5867 = vmatprep.mubr.f32.mxu0 0.0
        %5868 = vmatmul.mubr.f32.gmra.mrb[0].mxu0 %v5625
        %v5869 = vpop.f32.mrb[0].mxu0
        %v5870 = vadd.f32 0.0, %v5869
        %v5871 = vpop.f32.mrb[0].mxu0
        %5872 = vmatprep.mubr.f32.mxu0 0.0
        %5873 = vmatmul.mubr.f32.gmra.mrb[0].mxu0 %v5628
        %v5874 = vpop.f32.mrb[0].mxu0
        %v5875 = vadd.f32 0.0, %v5874
        %v5876 = vpop.f32.mrb[0].mxu0
        %5877 = vmatprep.mubr.f32.mxu0 0.0
        %5878 = vmatmul.mubr.f32.gmra.mrb[0].mxu0 %v5631
        %v5879 = vpop.f32.mrb[0].mxu0
        %v5880 = vadd.f32 0.0, %v5879
        %v5881 = vpop.f32.mrb[0].mxu0
        %5882 = vmatprep.mubr.f32.mxu0 0.0
        %5883 = vmatmul.mubr.f32.gmra.mrb[0].mxu0 %v5634
        %v5884 = vpop.f32.mrb[0].mxu0
        %v5885 = vadd.f32 0.0, %v5884
        %v5886 = vpop.f32.mrb[0].mxu0
        %5887 = vmatprep.mubr.f32.mxu0 0.0
        %5888 = vmatmul.mubr.f32.gmra.mrb[0].mxu0 %v5637
        %v5889 = vpop.f32.mrb[0].mxu0
        %v5890 = vadd.f32 0.0, %v5889
        %v5891 = vpop.f32.mrb[0].mxu0
        %5892 = vmatprep.mubr.f32.mxu0 0.0
        %5893 = vmatmul.mubr.f32.gmra.mrb[0].mxu0 %v5640
        %v5894 = vpop.f32.mrb[0].mxu0
        %v5895 = vadd.f32 0.0, %v5894
        %v5896 = vpop.f32.mrb[0].mxu0
        %5897 = vmatprep.mubr.f32.mxu0 0.0
        %5898 = vmatmul.mubr.f32.gmra.mrb[0].mxu0 %v5643
        %v5899 = vpop.f32.mrb[0].mxu0
        %v5900 = vadd.f32 0.0, %v5899
        %v5901 = vpop.f32.mrb[0].mxu0
        %5902 = vmatprep.mubr.f32.mxu0 0.0
        %5903 = vmatmul.mubr.f32.gmra.mrb[0].mxu0 %v5646
        %v5904 = vpop.f32.mrb[0].mxu0
        %v5905 = vadd.f32 0.0, %v5904
        %v5906 = vpop.f32.mrb[0].mxu0
        %5907 = vmatprep.mubr.f32.mxu0 0.0
        %5908 = vmatmul.mubr.f32.gmra.mrb[0].mxu0 %v5649
        %v5909 = vpop.f32.mrb[0].mxu0
        %v5910 = vadd.f32 0.0, %v5909
        %v5911 = vpop.f32.mrb[0].mxu0
        %5912 = vmatprep.mubr.f32.mxu0 0.0
        %5913 = vmatmul.mubr.f32.gmra.mrb[0].mxu0 %v5652
        %v5914 = vpop.f32.mrb[0].mxu0
        %v5915 = vadd.f32 0.0, %v5914
        %v5916 = vpop.f32.mrb[0].mxu0
        %5917 = vmatprep.mubr.f32.mxu0 0.0
        %5918 = vmatmul.mubr.f32.gmra.mrb[0].mxu0 %v5655
        %v5919 = vpop.f32.mrb[0].mxu0
        %v5920 = vadd.f32 0.0, %v5919
        %v5921 = vpop.f32.mrb[0].mxu0
        %5922 = vmatprep.mubr.f32.mxu0 0.0
        %5923 = vmatmul.mubr.f32.gmra.mrb[0].mxu0 %v5658
        %v5924 = vpop.f32.mrb[0].mxu0
        %v5925 = vadd.f32 0.0, %v5924
        %v5926 = vpop.f32.mrb[0].mxu0
        %5927 = vmatprep.mubr.f32.mxu0 0.0
        %5928 = vmatmul.mubr.f32.gmra.mrb[0].mxu0 %v5661
        %v5929 = vpop.f32.mrb[0].mxu0
        %v5930 = vadd.f32 0.0, %v5929
        %v5931 = vpop.f32.mrb[0].mxu0
        %5932 = vmatprep.mubr.f32.mxu0 0.0
        %5933 = vmatmul.mubr.f32.gmra.mrb[0].mxu0 %v5664
        %v5934 = vpop.f32.mrb[0].mxu0
        %v5935 = vadd.f32 0.0, %v5934
        %v5936 = vpop.f32.mrb[0].mxu0
        %5937 = vmatprep.mubr.f32.mxu0 0.0
        %5938 = vmatmul.mubr.f32.gmra.mrb[0].mxu0 %v5667
        %v5939 = vpop.f32.mrb[0].mxu0
        %v5940 = vadd.f32 0.0, %v5939
        %v5941 = vpop.f32.mrb[0].mxu0
        %5942 = vmatprep.mubr.f32.mxu0 0.0
        %5943 = vmatmul.mubr.f32.gmra.mrb[0].mxu0 %v5670
        %v5944 = vpop.f32.mrb[0].mxu0
        %v5945 = vadd.f32 0.0, %v5944
        %v5946 = vpop.f32.mrb[0].mxu0
        %5947 = vmatprep.mubr.f32.mxu0 0.0
        %5948 = vmatmul.mubr.f32.gmra.mrb[0].mxu0 %v5673
        %v5949 = vpop.f32.mrb[0].mxu0
        %v5950 = vadd.f32 0.0, %v5949
        %v5951 = vpop.f32.mrb[0].mxu0
        %5952 = vmatprep.mubr.f32.mxu0 0.0
        %5953 = vmatmul.mubr.f32.gmra.mrb[0].mxu0 %v5676
        %v5954 = vpop.f32.mrb[0].mxu0
        %v5955 = vadd.f32 0.0, %v5954
        %v5956 = vpop.f32.mrb[0].mxu0
        %5957 = vmatprep.mubr.f32.mxu0 0.0
        %5958 = vmatmul.mubr.f32.gmra.mrb[0].mxu0 %v5679
        %v5959 = vpop.f32.mrb[0].mxu0
        %v5960 = vadd.f32 0.0, %v5959
        %v5961 = vpop.f32.mrb[0].mxu0
        %5962 = vmatprep.mubr.f32.mxu0 0.0
        %5963 = vmatmul.mubr.f32.gmra.mrb[0].mxu0 %v5682
        %v5964 = vpop.f32.mrb[0].mxu0
        %v5965 = vadd.f32 0.0, %v5964
        %v5966 = vpop.f32.mrb[0].mxu0
        %5967 = vmatprep.mubr.f32.mxu0 0.0
        %5968 = vmatmul.mubr.f32.gmra.mrb[0].mxu0 %v5685
        %v5969 = vpop.f32.mrb[0].mxu0
        %v5970 = vadd.f32 0.0, %v5969
        %v5971 = vpop.f32.mrb[0].mxu0
        %5972 = vmatprep.mubr.f32.mxu0 0.0
        %5973 = vmatmul.mubr.f32.gmra.mrb[0].mxu0 %v5688
        %v5974 = vpop.f32.mrb[0].mxu0
        %v5975 = vadd.f32 0.0, %v5974
        %v5976 = vpop.f32.mrb[0].mxu0
        %5977 = vmatprep.mubr.f32.mxu0 0.0
        %5978 = vmatmul.mubr.f32.gmra.mrb[0].mxu0 %v5691
        %v5979 = vpop.f32.mrb[0].mxu0
        %v5980 = vadd.f32 0.0, %v5979
        %v5981 = vpop.f32.mrb[0].mxu0
        %5982 = vmatprep.mubr.f32.mxu0 0.0
        %5983 = vmatmul.mubr.f32.gmra.mrb[0].mxu0 %v5694
        %v5984 = vpop.f32.mrb[0].mxu0
        %v5985 = vadd.f32 0.0, %v5984
        %v5986 = vpop.f32.mrb[0].mxu0
        %5987 = vmatprep.mubr.f32.mxu0 0.0
        %5988 = vmatmul.mubr.f32.gmra.mrb[0].mxu0 %v5697
        %v5989 = vpop.f32.mrb[0].mxu0
        %v5990 = vadd.f32 0.0, %v5989
        %v5991 = vpop.f32.mrb[0].mxu0
        %5992 = vmatprep.mubr.f32.mxu0 0.0
        %5993 = vmatmul.mubr.f32.gmra.mrb[0].mxu0 %v5700
        %v5994 = vpop.f32.mrb[0].mxu0
        %v5995 = vadd.f32 0.0, %v5994
        %v5996 = vpop.f32.mrb[0].mxu0
        %5997 = vmatprep.mubr.f32.mxu0 0.0
        %5998 = vmatmul.mubr.f32.gmra.mrb[0].mxu0 %v5703
        %v5999 = vpop.f32.mrb[0].mxu0
        %v6000 = vadd.f32 0.0, %v5999
        %v6001 = vpop.f32.mrb[0].mxu0
        %6002 = vmatprep.mubr.f32.mxu0 0.0
        %6003 = vmatmul.mubr.f32.gmra.mrb[0].mxu0 %v5706
        %v6004 = vpop.f32.mrb[0].mxu0
        %v6005 = vadd.f32 0.0, %v6004
        %v6006 = vpop.f32.mrb[0].mxu0
        %6007 = vmatprep.mubr.f32.mxu0 0.0
        %6008 = vmatmul.mubr.f32.gmra.mrb[0].mxu0 %v5709
        %v6009 = vpop.f32.mrb[0].mxu0
        %v6010 = vadd.f32 0.0, %v6009
        %v6011 = vpop.f32.mrb[0].mxu0
        %6012 = vmatprep.mubr.f32.mxu0 0.0
        %6013 = vmatmul.mubr.f32.gmra.mrb[0].mxu0 %v5712
        %v6014 = vpop.f32.mrb[0].mxu0
        %v6015 = vadd.f32 0.0, %v6014
        %v6016 = vpop.f32.mrb[0].mxu0
        %6017 = vmatprep.mubr.f32.mxu0 0.0
        %6018 = vmatmul.mubr.f32.gmra.mrb[0].mxu0 %v5715
        %v6019 = vpop.f32.mrb[0].mxu0
        %v6020 = vadd.f32 0.0, %v6019
        %v6021 = vpop.f32.mrb[0].mxu0
        %6022 = vmatprep.mubr.f32.mxu0 0.0
        %6023 = vmatmul.mubr.f32.gmra.mrb[0].mxu0 %v5718
        %v6024 = vpop.f32.mrb[0].mxu0
        %v6025 = vadd.f32 0.0, %v6024
        %v6026 = vpop.f32.mrb[0].mxu0
        %6027 = vmatprep.mubr.f32.mxu0 0.0
        %6028 = vmatmul.mubr.f32.gmra.mrb[0].mxu0 %v5721
        %v6029 = vpop.f32.mrb[0].mxu0
        %v6030 = vadd.f32 0.0, %v6029
        %v6031 = vpop.f32.mrb[0].mxu0
        %6032 = vmatprep.mubr.f32.mxu0 0.0
        %6033 = vmatmul.mubr.f32.gmra.mrb[0].mxu0 %v5724
        %v6034 = vpop.f32.mrb[0].mxu0
        %v6035 = vadd.f32 0.0, %v6034
        %v6036 = vpop.f32.mrb[0].mxu0
        %6037 = vmatprep.mubr.f32.mxu0 0.0
        %6038 = vmatmul.mubr.f32.gmra.mrb[0].mxu0 %v5727
        %v6039 = vpop.f32.mrb[0].mxu0
        %v6040 = vadd.f32 0.0, %v6039
        %v6041 = vpop.f32.mrb[0].mxu0
        %6042 = vmatprep.mubr.f32.mxu0 0.0
        %6043 = vmatmul.mubr.f32.gmra.mrb[0].mxu0 %v5730
        %v6044 = vpop.f32.mrb[0].mxu0
        %v6045 = vadd.f32 0.0, %v6044
        %v6046 = vpop.f32.mrb[0].mxu0
        %6047 = vmatprep.mubr.f32.mxu0 0.0
        %6048 = vmatmul.mubr.f32.gmra.mrb[0].mxu0 %v5733
        %v6049 = vpop.f32.mrb[0].mxu0
        %v6050 = vadd.f32 0.0, %v6049
        %v6051 = vpop.f32.mrb[0].mxu0
        %6052 = vmatprep.mubr.f32.mxu0 0.0
        %6053 = vmatmul.mubr.f32.gmra.mrb[0].mxu0 %v5736
        %v6054 = vpop.f32.mrb[0].mxu0
        %v6055 = vadd.f32 0.0, %v6054
        %v6056 = vpop.f32.mrb[0].mxu0
        %6057 = vmatprep.mubr.f32.mxu0 0.0
        %6058 = vmatmul.mubr.f32.gmra.mrb[0].mxu0 %v5739
        %v6059 = vpop.f32.mrb[0].mxu0
        %v6060 = vadd.f32 0.0, %v6059
        %v6061 = vpop.f32.mrb[0].mxu0
        %6062 = vmatprep.mubr.f32.mxu0 0.0
        %6063 = vmatmul.mubr.f32.gmra.mrb[0].mxu0 %v5742
        %v6064 = vpop.f32.mrb[0].mxu0
        %v6065 = vadd.f32 0.0, %v6064
        %v6066 = vpop.f32.mrb[0].mxu0
        %6067 = vmatprep.mubr.f32.mxu0 0.0
        %6068 = vmatmul.mubr.f32.gmra.mrb[0].mxu0 %v5745
        %v6069 = vpop.f32.mrb[0].mxu0
        %v6070 = vadd.f32 0.0, %v6069
        %v6071 = vpop.f32.mrb[0].mxu0
        %6072 = vmatprep.mubr.f32.mxu0 0.0
        %6073 = vmatmul.mubr.f32.gmra.mrb[0].mxu0 %v5748
        %v6074 = vpop.f32.mrb[0].mxu0
        %v6075 = vadd.f32 0.0, %v6074
        %v6076 = vpop.f32.mrb[0].mxu0
        %6077 = vmatprep.mubr.f32.mxu0 0.0
        %6078 = vmatmul.mubr.f32.gmra.mrb[0].mxu0 %v5751
        %v6079 = vpop.f32.mrb[0].mxu0
        %v6080 = vadd.f32 0.0, %v6079
        %v6081 = vpop.f32.mrb[0].mxu0
        %6082 = vmatprep.mubr.f32.mxu0 0.0
        %6083 = vmatmul.mubr.f32.gmra.mrb[0].mxu0 %v5754
        %v6084 = vpop.f32.mrb[0].mxu0
        %v6085 = vadd.f32 0.0, %v6084
        %v6086 = vpop.f32.mrb[0].mxu0
        %6087 = vmatprep.mubr.f32.mxu0 0.0
        %6088 = vmatmul.mubr.f32.gmra.mrb[0].mxu0 %v5757
        %v6089 = vpop.f32.mrb[0].mxu0
        %v6090 = vadd.f32 0.0, %v6089
        %v6091 = vpop.f32.mrb[0].mxu0
        %6092 = vmatprep.mubr.f32.mxu0 0.0
        %6093 = vmatmul.mubr.f32.gmra.mrb[0].mxu0 %v5760
        %v6094 = vpop.f32.mrb[0].mxu0
        %v6095 = vadd.f32 0.0, %v6094
        %v6096 = vpop.f32.mrb[0].mxu0
        %6097 = vmatprep.mubr.f32.mxu0 0.0
        %6098 = vmatmul.mubr.f32.gmra.mrb[0].mxu0 %v5763
        %v6099 = vpop.f32.mrb[0].mxu0
        %v6100 = vadd.f32 0.0, %v6099
        %v6101 = vpop.f32.mrb[0].mxu0
        %6102 = vmatprep.mubr.f32.mxu0 0.0
        %6103 = vmatmul.mubr.f32.gmra.mrb[0].mxu0 %v5766
        %v6104 = vpop.f32.mrb[0].mxu0
        %v6105 = vadd.f32 0.0, %v6104
        %v6106 = vpop.f32.mrb[0].mxu0
        %6107 = vmatprep.mubr.f32.mxu0 0.0
        %6108 = vmatmul.mubr.f32.gmra.mrb[0].mxu0 %v5769
        %v6109 = vpop.f32.mrb[0].mxu0
        %v6110 = vadd.f32 0.0, %v6109
        %v6111 = vpop.f32.mrb[0].mxu0
        %6112 = vmatprep.mubr.f32.mxu0 0.0
        %6113 = vmatmul.mubr.f32.gmra.mrb[0].mxu0 %v5772
        %v6114 = vpop.f32.mrb[0].mxu0
        %v6115 = vadd.f32 0.0, %v6114
        %v6116 = vpop.f32.mrb[0].mxu0
        %6117 = vmatprep.mubr.f32.mxu0 0.0
        %6118 = vmatmul.mubr.f32.gmra.mrb[0].mxu0 %v5775
        %v6119 = vpop.f32.mrb[0].mxu0
        %v6120 = vadd.f32 0.0, %v6119
        %v6121 = vpop.f32.mrb[0].mxu0
        %6122 = vmatprep.mubr.f32.mxu0 0.0
        %6123 = vmatmul.mubr.f32.gmra.mrb[0].mxu0 %v5778
        %v6124 = vpop.f32.mrb[0].mxu0
        %v6125 = vadd.f32 0.0, %v6124
        %v6126 = vpop.f32.mrb[0].mxu0
        %6127 = vmatprep.mubr.f32.mxu0 0.0
        %6128 = vmatmul.mubr.f32.gmra.mrb[0].mxu0 %v5781
        %v6129 = vpop.f32.mrb[0].mxu0
        %v6130 = vadd.f32 0.0, %v6129
        %v6131 = vpop.f32.mrb[0].mxu0
        %6132 = vmatprep.mubr.f32.mxu0 0.0
        %6133 = vmatmul.mubr.f32.gmra.mrb[0].mxu0 %v5784
        %v6134 = vpop.f32.mrb[0].mxu0
        %v6135 = vadd.f32 0.0, %v6134
        %v6136 = vpop.f32.mrb[0].mxu0
        %6137 = vmatprep.mubr.f32.mxu0 0.0
        %6138 = vmatmul.mubr.f32.gmra.mrb[0].mxu0 %v5787
        %v6139 = vpop.f32.mrb[0].mxu0
        %v6140 = vadd.f32 0.0, %v6139
        %v6141 = vpop.f32.mrb[0].mxu0
        %6142 = vmatprep.mubr.f32.mxu0 0.0
        %6143 = vmatmul.mubr.f32.gmra.mrb[0].mxu0 %v5790
        %v6144 = vpop.f32.mrb[0].mxu0
        %v6145 = vadd.f32 0.0, %v6144
        %v6146 = vpop.f32.mrb[0].mxu0
        %6147 = vdwg.mxu0
        %v6148 = vadd.f32 %v5470, %v5830
        %v6149 = vadd.f32 %v5471, %v5835
        %v6150 = vadd.f32 %v5472, %v5840
        %v6151 = vadd.f32 %v5473, %v5845
        %v6152 = vadd.f32 %v5474, %v5850
        %v6153 = vadd.f32 %v5475, %v5855
        %v6154 = vadd.f32 %v5476, %v5860
        %v6155 = vadd.f32 %v5477, %v5865
        %v6156 = vadd.f32 %v5478, %v5870
        %v6157 = vadd.f32 %v5479, %v5875
        %v6158 = vadd.f32 %v5480, %v5880
        %v6159 = vadd.f32 %v5481, %v5885
        %v6160 = vadd.f32 %v5482, %v5890
        %v6161 = vadd.f32 %v5483, %v5895
        %v6162 = vadd.f32 %v5484, %v5900
        %v6163 = vadd.f32 %v5485, %v5905
        %v6164 = vadd.f32 %v5486, %v5910
        %v6165 = vadd.f32 %v5487, %v5915
        %v6166 = vadd.f32 %v5488, %v5920
        %v6167 = vadd.f32 %v5489, %v5925
        %v6168 = vadd.f32 %v5490, %v5930
        %v6169 = vadd.f32 %v5491, %v5935
        %v6170 = vadd.f32 %v5492, %v5940
        %v6171 = vadd.f32 %v5493, %v5945
        %v6172 = vadd.f32 %v5494, %v5950
        %v6173 = vadd.f32 %v5495, %v5955
        %v6174 = vadd.f32 %v5496, %v5960
        %v6175 = vadd.f32 %v5497, %v5965
        %v6176 = vadd.f32 %v5498, %v5970
        %v6177 = vadd.f32 %v5499, %v5975
        %v6178 = vadd.f32 %v5500, %v5980
        %v6179 = vadd.f32 %v5501, %v5985
        %v6180 = vadd.f32 %v5502, %v5990
        %v6181 = vadd.f32 %v5503, %v5995
        %v6182 = vadd.f32 %v5504, %v6000
        %v6183 = vadd.f32 %v5505, %v6005
        %v6184 = vadd.f32 %v5506, %v6010
        %v6185 = vadd.f32 %v5507, %v6015
        %v6186 = vadd.f32 %v5508, %v6020
        %v6187 = vadd.f32 %v5509, %v6025
        %v6188 = vadd.f32 %v5510, %v6030
        %v6189 = vadd.f32 %v5511, %v6035
        %v6190 = vadd.f32 %v5512, %v6040
        %v6191 = vadd.f32 %v5513, %v6045
        %v6192 = vadd.f32 %v5514, %v6050
        %v6193 = vadd.f32 %v5515, %v6055
        %v6194 = vadd.f32 %v5516, %v6060
        %v6195 = vadd.f32 %v5517, %v6065
        %v6196 = vadd.f32 %v5518, %v6070
        %v6197 = vadd.f32 %v5519, %v6075
        %v6198 = vadd.f32 %v5520, %v6080
        %v6199 = vadd.f32 %v5521, %v6085
        %v6200 = vadd.f32 %v5522, %v6090
        %v6201 = vadd.f32 %v5523, %v6095
        %v6202 = vadd.f32 %v5524, %v6100
        %v6203 = vadd.f32 %v5525, %v6105
        %v6204 = vadd.f32 %v5526, %v6110
        %v6205 = vadd.f32 %v5527, %v6115
        %v6206 = vadd.f32 %v5528, %v6120
        %v6207 = vadd.f32 %v5529, %v6125
        %v6208 = vadd.f32 %v5530, %v6130
        %v6209 = vadd.f32 %v5531, %v6135
        %v6210 = vadd.f32 %v5532, %v6140
        %v6211 = vadd.f32 %v5533, %v6145
        %v6212 = vld [vmem:[%s222] sm:$0x1]
        %v6214 = vlaneseq
        %v6215 = vshrl.u32 %v6214, 7
        %v6216 = vsub.s32 0, %v6215
        %v6217 = vrot.slane %v6212, %v6216
        %v6219 = vadd.f32 %v6148, %v6217
        %v6220 = vadd.f32 %v6149, %v6217
        %v6221 = vadd.f32 %v6150, %v6217
        %v6222 = vadd.f32 %v6151, %v6217
        %v6223 = vadd.f32 %v6152, %v6217
        %v6224 = vadd.f32 %v6153, %v6217
        %v6225 = vadd.f32 %v6154, %v6217
        %v6226 = vadd.f32 %v6155, %v6217
        %v6227 = vadd.f32 %v6156, %v6217
        %v6228 = vadd.f32 %v6157, %v6217
        %v6229 = vadd.f32 %v6158, %v6217
        %v6230 = vadd.f32 %v6159, %v6217
        %v6231 = vadd.f32 %v6160, %v6217
        %v6232 = vadd.f32 %v6161, %v6217
        %v6233 = vadd.f32 %v6162, %v6217
        %v6234 = vadd.f32 %v6163, %v6217
        %v6235 = vadd.f32 %v6164, %v6217
        %v6236 = vadd.f32 %v6165, %v6217
        %v6237 = vadd.f32 %v6166, %v6217
        %v6238 = vadd.f32 %v6167, %v6217
        %v6239 = vadd.f32 %v6168, %v6217
        %v6240 = vadd.f32 %v6169, %v6217
        %v6241 = vadd.f32 %v6170, %v6217
        %v6242 = vadd.f32 %v6171, %v6217
        %v6243 = vadd.f32 %v6172, %v6217
        %v6244 = vadd.f32 %v6173, %v6217
        %v6245 = vadd.f32 %v6174, %v6217
        %v6246 = vadd.f32 %v6175, %v6217
        %v6247 = vadd.f32 %v6176, %v6217
        %v6248 = vadd.f32 %v6177, %v6217
        %v6249 = vadd.f32 %v6178, %v6217
        %v6250 = vadd.f32 %v6179, %v6217
        %v6251 = vadd.f32 %v6180, %v6217
        %v6252 = vadd.f32 %v6181, %v6217
        %v6253 = vadd.f32 %v6182, %v6217
        %v6254 = vadd.f32 %v6183, %v6217
        %v6255 = vadd.f32 %v6184, %v6217
        %v6256 = vadd.f32 %v6185, %v6217
        %v6257 = vadd.f32 %v6186, %v6217
        %v6258 = vadd.f32 %v6187, %v6217
        %v6259 = vadd.f32 %v6188, %v6217
        %v6260 = vadd.f32 %v6189, %v6217
        %v6261 = vadd.f32 %v6190, %v6217
        %v6262 = vadd.f32 %v6191, %v6217
        %v6263 = vadd.f32 %v6192, %v6217
        %v6264 = vadd.f32 %v6193, %v6217
        %v6265 = vadd.f32 %v6194, %v6217
        %v6266 = vadd.f32 %v6195, %v6217
        %v6267 = vadd.f32 %v6196, %v6217
        %v6268 = vadd.f32 %v6197, %v6217
        %v6269 = vadd.f32 %v6198, %v6217
        %v6270 = vadd.f32 %v6199, %v6217
        %v6271 = vadd.f32 %v6200, %v6217
        %v6272 = vadd.f32 %v6201, %v6217
        %v6273 = vadd.f32 %v6202, %v6217
        %v6274 = vadd.f32 %v6203, %v6217
        %v6275 = vadd.f32 %v6204, %v6217
        %v6276 = vadd.f32 %v6205, %v6217
        %v6277 = vadd.f32 %v6206, %v6217
        %v6278 = vadd.f32 %v6207, %v6217
        %v6279 = vadd.f32 %v6208, %v6217
        %v6280 = vadd.f32 %v6209, %v6217
        %v6281 = vadd.f32 %v6210, %v6217
        %v6282 = vadd.f32 %v6211, %v6217
        %v6283 = vmax.f32 %v6219, 0.0
        %v6284 = vmax.f32 %v6220, 0.0
        %v6285 = vmax.f32 %v6221, 0.0
        %v6286 = vmax.f32 %v6222, 0.0
        %v6287 = vmax.f32 %v6223, 0.0
        %v6288 = vmax.f32 %v6224, 0.0
        %v6289 = vmax.f32 %v6225, 0.0
        %v6290 = vmax.f32 %v6226, 0.0
        %v6291 = vmax.f32 %v6227, 0.0
        %v6292 = vmax.f32 %v6228, 0.0
        %v6293 = vmax.f32 %v6229, 0.0
        %v6294 = vmax.f32 %v6230, 0.0
        %v6295 = vmax.f32 %v6231, 0.0
        %v6296 = vmax.f32 %v6232, 0.0
        %v6297 = vmax.f32 %v6233, 0.0
        %v6298 = vmax.f32 %v6234, 0.0
        %v6299 = vmax.f32 %v6235, 0.0
        %v6300 = vmax.f32 %v6236, 0.0
        %v6301 = vmax.f32 %v6237, 0.0
        %v6302 = vmax.f32 %v6238, 0.0
        %v6303 = vmax.f32 %v6239, 0.0
        %v6304 = vmax.f32 %v6240, 0.0
        %v6305 = vmax.f32 %v6241, 0.0
        %v6306 = vmax.f32 %v6242, 0.0
        %v6307 = vmax.f32 %v6243, 0.0
        %v6308 = vmax.f32 %v6244, 0.0
        %v6309 = vmax.f32 %v6245, 0.0
        %v6310 = vmax.f32 %v6246, 0.0
        %v6311 = vmax.f32 %v6247, 0.0
        %v6312 = vmax.f32 %v6248, 0.0
        %v6313 = vmax.f32 %v6249, 0.0
        %v6314 = vmax.f32 %v6250, 0.0
        %v6315 = vmax.f32 %v6251, 0.0
        %v6316 = vmax.f32 %v6252, 0.0
        %v6317 = vmax.f32 %v6253, 0.0
        %v6318 = vmax.f32 %v6254, 0.0
        %v6319 = vmax.f32 %v6255, 0.0
        %v6320 = vmax.f32 %v6256, 0.0
        %v6321 = vmax.f32 %v6257, 0.0
        %v6322 = vmax.f32 %v6258, 0.0
        %v6323 = vmax.f32 %v6259, 0.0
        %v6324 = vmax.f32 %v6260, 0.0
        %v6325 = vmax.f32 %v6261, 0.0
        %v6326 = vmax.f32 %v6262, 0.0
        %v6327 = vmax.f32 %v6263, 0.0
        %v6328 = vmax.f32 %v6264, 0.0
        %v6329 = vmax.f32 %v6265, 0.0
        %v6330 = vmax.f32 %v6266, 0.0
        %v6331 = vmax.f32 %v6267, 0.0
        %v6332 = vmax.f32 %v6268, 0.0
        %v6333 = vmax.f32 %v6269, 0.0
        %v6334 = vmax.f32 %v6270, 0.0
        %v6335 = vmax.f32 %v6271, 0.0
        %v6336 = vmax.f32 %v6272, 0.0
        %v6337 = vmax.f32 %v6273, 0.0
        %v6338 = vmax.f32 %v6274, 0.0
        %v6339 = vmax.f32 %v6275, 0.0
        %v6340 = vmax.f32 %v6276, 0.0
        %v6341 = vmax.f32 %v6277, 0.0
        %v6342 = vmax.f32 %v6278, 0.0
        %v6343 = vmax.f32 %v6279, 0.0
        %v6344 = vmax.f32 %v6280, 0.0
        %v6345 = vmax.f32 %v6281, 0.0
        %v6346 = vmax.f32 %v6282, 0.0
        %vm6347 = vcmask 523264
        %6348 = vst.msk [vmem:[%s210] sm:$0xff] %vm6347, %v6283
        %6349 = vst.msk [vmem:[%s210 + $0x8] sm:$0xff] %vm6347, %v6284
        %6350 = vst.msk [vmem:[%s210 + $0x10] sm:$0xff] %vm6347, %v6285
        %6351 = vst.msk [vmem:[%s210 + $0x18] sm:$0xff] %vm6347, %v6286
        %6352 = vst.msk [vmem:[%s210 + $0x20] sm:$0xff] %vm6347, %v6287
        %6353 = vst.msk [vmem:[%s210 + $0x28] sm:$0xff] %vm6347, %v6288
        %6354 = vst.msk [vmem:[%s210 + $0x30] sm:$0xff] %vm6347, %v6289
        %6355 = vst.msk [vmem:[%s210 + $0x38] sm:$0xff] %vm6347, %v6290
        %6356 = vst.msk [vmem:[%s210 + $0x40] sm:$0xff] %vm6347, %v6291
        %6357 = vst.msk [vmem:[%s210 + $0x48] sm:$0xff] %vm6347, %v6292
        %6358 = vst.msk [vmem:[%s210 + $0x50] sm:$0xff] %vm6347, %v6293
        %6359 = vst.msk [vmem:[%s210 + $0x58] sm:$0xff] %vm6347, %v6294
        %6360 = vst.msk [vmem:[%s210 + $0x60] sm:$0xff] %vm6347, %v6295
        %6361 = vst.msk [vmem:[%s210 + $0x68] sm:$0xff] %vm6347, %v6296
        %6362 = vst.msk [vmem:[%s210 + $0x70] sm:$0xff] %vm6347, %v6297
        %6363 = vst.msk [vmem:[%s210 + $0x78] sm:$0xff] %vm6347, %v6298
        %6364 = vst.msk [vmem:[%s210 + $0x80] sm:$0xff] %vm6347, %v6299
        %6365 = vst.msk [vmem:[%s210 + $0x88] sm:$0xff] %vm6347, %v6300
        %6366 = vst.msk [vmem:[%s210 + $0x90] sm:$0xff] %vm6347, %v6301
        %6367 = vst.msk [vmem:[%s210 + $0x98] sm:$0xff] %vm6347, %v6302
        %6368 = vst.msk [vmem:[%s210 + $0xa0] sm:$0xff] %vm6347, %v6303
        %6369 = vst.msk [vmem:[%s210 + $0xa8] sm:$0xff] %vm6347, %v6304
        %6370 = vst.msk [vmem:[%s210 + $0xb0] sm:$0xff] %vm6347, %v6305
        %6371 = vst.msk [vmem:[%s210 + $0xb8] sm:$0xff] %vm6347, %v6306
        %6372 = vst.msk [vmem:[%s210 + $0xc0] sm:$0xff] %vm6347, %v6307
        %6373 = vst.msk [vmem:[%s210 + $0xc8] sm:$0xff] %vm6347, %v6308
        %6374 = vst.msk [vmem:[%s210 + $0xd0] sm:$0xff] %vm6347, %v6309
        %6375 = vst.msk [vmem:[%s210 + $0xd8] sm:$0xff] %vm6347, %v6310
        %6376 = vst.msk [vmem:[%s210 + $0xe0] sm:$0xff] %vm6347, %v6311
        %6377 = vst.msk [vmem:[%s210 + $0xe8] sm:$0xff] %vm6347, %v6312
        %6378 = vst.msk [vmem:[%s210 + $0xf0] sm:$0xff] %vm6347, %v6313
        %6379 = vst.msk [vmem:[%s210 + $0xf8] sm:$0xff] %vm6347, %v6314
        %6380 = vst.msk [vmem:[%s210 + $0x100] sm:$0xff] %vm6347, %v6315
        %6381 = vst.msk [vmem:[%s210 + $0x108] sm:$0xff] %vm6347, %v6316
        %6382 = vst.msk [vmem:[%s210 + $0x110] sm:$0xff] %vm6347, %v6317
        %6383 = vst.msk [vmem:[%s210 + $0x118] sm:$0xff] %vm6347, %v6318
        %6384 = vst.msk [vmem:[%s210 + $0x120] sm:$0xff] %vm6347, %v6319
        %6385 = vst.msk [vmem:[%s210 + $0x128] sm:$0xff] %vm6347, %v6320
        %6386 = vst.msk [vmem:[%s210 + $0x130] sm:$0xff] %vm6347, %v6321
        %6387 = vst.msk [vmem:[%s210 + $0x138] sm:$0xff] %vm6347, %v6322
        %6388 = vst.msk [vmem:[%s210 + $0x140] sm:$0xff] %vm6347, %v6323
        %6389 = vst.msk [vmem:[%s210 + $0x148] sm:$0xff] %vm6347, %v6324
        %6390 = vst.msk [vmem:[%s210 + $0x150] sm:$0xff] %vm6347, %v6325
        %6391 = vst.msk [vmem:[%s210 + $0x158] sm:$0xff] %vm6347, %v6326
        %6392 = vst.msk [vmem:[%s210 + $0x160] sm:$0xff] %vm6347, %v6327
        %6393 = vst.msk [vmem:[%s210 + $0x168] sm:$0xff] %vm6347, %v6328
        %6394 = vst.msk [vmem:[%s210 + $0x170] sm:$0xff] %vm6347, %v6329
        %6395 = vst.msk [vmem:[%s210 + $0x178] sm:$0xff] %vm6347, %v6330
        %6396 = vst.msk [vmem:[%s210 + $0x180] sm:$0xff] %vm6347, %v6331
        %6397 = vst.msk [vmem:[%s210 + $0x188] sm:$0xff] %vm6347, %v6332
        %6398 = vst.msk [vmem:[%s210 + $0x190] sm:$0xff] %vm6347, %v6333
        %6399 = vst.msk [vmem:[%s210 + $0x198] sm:$0xff] %vm6347, %v6334
        %6400 = vst.msk [vmem:[%s210 + $0x1a0] sm:$0xff] %vm6347, %v6335
        %6401 = vst.msk [vmem:[%s210 + $0x1a8] sm:$0xff] %vm6347, %v6336
        %6402 = vst.msk [vmem:[%s210 + $0x1b0] sm:$0xff] %vm6347, %v6337
        %6403 = vst.msk [vmem:[%s210 + $0x1b8] sm:$0xff] %vm6347, %v6338
        %6404 = vst.msk [vmem:[%s210 + $0x1c0] sm:$0xff] %vm6347, %v6339
        %6405 = vst.msk [vmem:[%s210 + $0x1c8] sm:$0xff] %vm6347, %v6340
        %6406 = vst.msk [vmem:[%s210 + $0x1d0] sm:$0xff] %vm6347, %v6341
        %6407 = vst.msk [vmem:[%s210 + $0x1d8] sm:$0xff] %vm6347, %v6342
        %6408 = vst.msk [vmem:[%s210 + $0x1e0] sm:$0xff] %vm6347, %v6343
        %6409 = vst.msk [vmem:[%s210 + $0x1e8] sm:$0xff] %vm6347, %v6344
        %6410 = vst.msk [vmem:[%s210 + $0x1f0] sm:$0xff] %vm6347, %v6345
        %6411 = vst.msk [vmem:[%s210 + $0x1f8] sm:$0xff] %vm6347, %v6346
        %s6412 = sand.u32 %s126, 1
        %s6413 = scalar_lea.sflag [#allocation3], %s6412
        %s6414 = sand.u32 %s126, 1
        %s6415 = smul.addr %s6414, 512
        %s6416 = scalar_lea.vmem [#allocation2], %s6415
        // Predicated region
        $region33: #{_conv2d_jit.1} parent=31 // pred_check
          %p6417 = pneg %p136
        $region34: #{_conv2d_jit.1} parent=31 // pred_check_branch
          %6419 = sbr.rel (%p6417) target = $region36
        $region35: #{_conv2d_jit.1} parent=31 // pred_region
          %s6420 = smul.u32 8, %s24
          %s6422 = ssub.s32 8192, 8192
          %6423 = vsyncadd %s6413, %s6422
          %s6424 = smul.addr %s6420, 8
          %s6425 = sadd.s32 %s23, %s6424
          %s6426 = smul.addr %s22, 512
          %s6427 = sadd.s32 %s6425, %s6426
          %s6428 = smul.addr %s6427, 128
          %s6429 = scalar_lea.hbm %s3, %s6428
          %s6430 = sshll.u32 %s6416, 4
          %s6431 = int_to_ptr.vmem [resolvable:$true] %s6430
          %6436 = dma.vmem_to_hbm [thread:$0]  %s6431, 8192, %s6429, %s6413, 128, 128, 8
        $region36: #{_conv2d_jit.1} parent=31 // pred_fallthru
          _
      $region32: #{_conv2d_jit.1} parent=5 // pred_fallthru
        _
      %p6437 = scmp.le.s32.totalorder 2, %s12
      // Predicated region
      $region37: #{_conv2d_jit.1} parent=5 // pred_check
        %p6438 = pneg %p6437
      $region38: #{_conv2d_jit.1} parent=5 // pred_check_branch
        %6440 = sbr.rel (%p6438) target = $region40
      $region39: #{_conv2d_jit.1} parent=5 // pred_region
        %s6441 = ssub.s32 %s12, 2
        // Predicated region
        $region41: #{_conv2d_jit.1} parent=39 // pred_check
          %p6442 = pneg %p142
        $region42: #{_conv2d_jit.1} parent=39 // pred_check_branch
          %6444 = sbr.rel (%p6442) target = $region44
        $region43: #{_conv2d_jit.1} parent=39 // pred_region
          %s6445 = sand.u32 %s127, 1
          %s6446 = scalar_lea.sflag [#allocation3], %s6445
          %s6447 = sand.u32 %s127, 1
          %s6448 = smul.addr %s6447, 512
          %s6449 = scalar_lea.vmem [#allocation2], %s6448
          %6450 = dma.done %s6446, 8192
        $region44: #{_conv2d_jit.1} parent=39 // pred_fallthru
          _
      $region40: #{_conv2d_jit.1} parent=5 // pred_fallthru
        _
    $region6: #{_conv2d_jit.1} parent=1 // loop_footer
      %s16 = sadd.s32 1, %s12
    $region7: #{_conv2d_jit.1} parent=1 // loop_footer_branch
      %11 = sbr.rel target = $region3
    $region8: #{_conv2d_jit.1} parent=1 // loop_exit
      _
    %6451 = vsyncpa [#allocation3], 1
    %s6452 = scalar_lea.sflag [#allocation3], 1
    %6453 = vsyncpa %s6452, 1

</llo_original>
